<compile_context>
chip_gen: v7x
topology: tpu7x:2x2x1
jax: 0.10.0
libtpu: 0.0.40
codegen_flags: <defaults>
</compile_context>

<pallas_src>
import numpy as np
import jax
import jax.numpy as jnp
from jax.experimental import pallas as pl
from jax.experimental.pallas import tpu as pltpu


# ----------------------------------------------------------------------------
# sin-cos positional embedding (same math as the PyTorch module, in numpy)
# ----------------------------------------------------------------------------
def get_1d_sincos_pos_embed_from_grid(embed_dim, pos):
    assert embed_dim % 2 == 0
    omega = np.arange(embed_dim // 2, dtype=float)
    omega /= embed_dim / 2.0
    omega = 1.0 / 10000 ** omega
    pos = pos.reshape(-1)
    out = np.einsum('m,d->md', pos, omega)
    return np.concatenate([np.sin(out), np.cos(out)], axis=1)


def get_2d_sincos_pos_embed_from_grid(embed_dim, grid):
    assert embed_dim % 2 == 0
    emb_h = get_1d_sincos_pos_embed_from_grid(embed_dim // 2, grid[0])
    emb_w = get_1d_sincos_pos_embed_from_grid(embed_dim // 2, grid[1])
    return np.concatenate([emb_h, emb_w], axis=1)


def get_2d_sincos_pos_embed(embed_dim, grid_size):
    grid_h = np.arange(grid_size, dtype=np.float32)
    grid_w = np.arange(grid_size, dtype=np.float32)
    grid = np.meshgrid(grid_w, grid_h)
    grid = np.stack(grid, axis=0).reshape([2, 1, grid_size, grid_size])
    return get_2d_sincos_pos_embed_from_grid(embed_dim, grid)


# ----------------------------------------------------------------------------
# in-kernel helpers (kept in f32)
# ----------------------------------------------------------------------------
def _layernorm(x, w, b, eps=1e-5):
    mu = jnp.mean(x, axis=-1, keepdims=True)
    xc = x - mu
    var = jnp.mean(xc * xc, axis=-1, keepdims=True)
    return xc * jax.lax.rsqrt(var + eps) * w + b


def _gelu_exact(x):
    # PyTorch nn.GELU() default = erf formulation
    return 0.5 * x * (1.0 + jax.lax.erf(x * 0.7071067811865476))


# ----------------------------------------------------------------------------
# fused encoder kernel: grid axis = layer index
# ----------------------------------------------------------------------------
def make_encoder_kernel(depth, B, N, D, n_heads, mm_dtype, eps=1e-5):
    hd = D // n_heads
    scale = hd ** (-0.5)
    BN = B * N

    def kernel(patches_ref, convw_ref, convb_ref, pos_ref,
               ln1w_ref, ln1b_ref, qkvw_ref, qkvb_ref, projw_ref, projb_ref,
               ln2w_ref, ln2b_ref, fc1w_ref, fc1b_ref, fc2w_ref, fc2b_ref,
               lnfw_ref, lnfb_ref,
               o_ref, x_acc):
        l = pl.program_id(0)

        # ---- layer-0 prologue: patch embedding + bias + positional embedding
        @pl.when(l == 0)
        def _():
            x_acc[...] = (jnp.dot(patches_ref[...].astype(mm_dtype),
                                  convw_ref[...],
                                  preferred_element_type=jnp.float32)
                          + convb_ref[...] + pos_ref[...])

        x = x_acc[...]                                            # (B*N, D) f32

        # ---- attention branch ----
        xn = _layernorm(x, ln1w_ref[0], ln1b_ref[0], eps)
        qkv = (jnp.dot(xn.astype(mm_dtype), qkvw_ref[0],
                       preferred_element_type=jnp.float32) + qkvb_ref[0])
        q = (qkv[:, 0:D] * scale).reshape(B, N, D)                # pre-scale q
        k = qkv[:, D:2 * D].reshape(B, N, D)
        v = qkv[:, 2 * D:3 * D].reshape(B, N, D)
        projw = projw_ref[0]

        attn = jnp.zeros((BN, D), jnp.float32)
        for h in range(n_heads):                                  # small unroll
            sl = slice(h * hd, (h + 1) * hd)
            s = jnp.einsum('bnd,bmd->bnm',
                           q[:, :, sl].astype(mm_dtype),
                           k[:, :, sl].astype(mm_dtype),
                           preferred_element_type=jnp.float32)
            s = s - jnp.max(s, axis=-1, keepdims=True)
            e = jnp.exp(s)
            p = e * pl.reciprocal(jnp.sum(e, axis=-1, keepdims=True),
                                  approx=True)
            oh = jnp.einsum('bnm,bmd->bnd',
                            p.astype(mm_dtype),
                            v[:, :, sl].astype(mm_dtype),
                            preferred_element_type=jnp.float32)
            # accumulate head output directly into the projection -> no concat
            attn = attn + jnp.dot(oh.reshape(BN, hd).astype(mm_dtype),
                                  projw[sl, :],
                                  preferred_element_type=jnp.float32)
        x1 = x + attn + projb_ref[0]

        # ---- MLP branch ----
        xn2 = _layernorm(x1, ln2w_ref[0], ln2b_ref[0], eps)
        hmid = (jnp.dot(xn2.astype(mm_dtype), fc1w_ref[0],
                        preferred_element_type=jnp.float32) + fc1b_ref[0])
        hmid = _gelu_exact(hmid)
        x2 = x1 + (jnp.dot(hmid.astype(mm_dtype), fc2w_ref[0],
                           preferred_element_type=jnp.float32) + fc2b_ref[0])
        x_acc[...] = x2

        # ---- last-layer epilogue: final LayerNorm, single HBM writeback ----
        @pl.when(l == depth - 1)
        def _():
            o_ref[...] = _layernorm(x2, lnfw_ref[...], lnfb_ref[...], eps)

    return kernel


# ----------------------------------------------------------------------------
# wrapper
# ----------------------------------------------------------------------------
def extract_patches(x_nchw, patch):
    # (B, C, H, W) -> (B, N, C*P*P), patch-major (h, w) order, flatten (c, kh, kw)
    B, C, H, W = x_nchw.shape
    Hp, Wp = H // patch, W // patch
    x = x_nchw.reshape(B, C, Hp, patch, Wp, patch)
    x = x.transpose(0, 2, 4, 1, 3, 5)
    return x.reshape(B, Hp * Wp, C * patch * patch)


def encoder_forward(x_img, cfg, params, matmul_dtype=jnp.float32):
    P, D, depth = cfg['patch_size'], cfg['embed_dim'], cfg['depth']
    n_heads = cfg['n_heads']
    Hd = int(D * cfg['mlp_ratio'])

    patches = extract_patches(x_img, P)                 # (B, N, C*P*P)
    B, N, PPC = patches.shape
    BN = B * N
    patches = patches.reshape(BN, PPC)
    pos_bn = jnp.tile(params['pos_embed'], (B, 1))      # (B*N, D)

    md = matmul_dtype
    conv_w = params['conv_w'].astype(md)
    qkv_w = params['qkv_w'].astype(md)
    proj_w = params['proj_w'].astype(md)
    fc1_w = params['fc1_w'].astype(md)
    fc2_w = params['fc2_w'].astype(md)

    kernel = make_encoder_kernel(depth, B, N, D, n_heads, md)

    def rep(shape):           # resident block, fetched once (constant index)
        return pl.BlockSpec(shape, lambda l, _n=len(shape): (0,) * _n)

    def per_layer(shape):     # one layer slice per grid step, pipelined
        return pl.BlockSpec((1,) + shape,
                            lambda l, _n=len(shape): (l,) + (0,) * _n)

    in_specs = [
        rep((BN, PPC)),            # patches
        rep((PPC, D)),             # conv_w
        rep((1, D)),               # conv_b
        rep((BN, D)),              # pos embed (tiled over batch)
        per_layer((1, D)),         # ln1_w
        per_layer((1, D)),         # ln1_b
        per_layer((D, 3 * D)),     # qkv_w
        per_layer((1, 3 * D)),     # qkv_b
        per_layer((D, D)),         # proj_w
        per_layer((1, D)),         # proj_b
        per_layer((1, D)),         # ln2_w
        per_layer((1, D)),         # ln2_b
        per_layer((D, Hd)),        # fc1_w
        per_layer((1, Hd)),        # fc1_b
        per_layer((Hd, D)),        # fc2_w
        per_layer((1, D)),         # fc2_b
        rep((1, D)),               # lnf_w
        rep((1, D)),               # lnf_b
    ]

    out = pl.pallas_call(
        kernel,
        out_shape=jax.ShapeDtypeStruct((BN, D), jnp.float32),
        grid=(depth,),
        in_specs=in_specs,
        out_specs=pl.BlockSpec((BN, D), lambda l: (0, 0)),
        scratch_shapes=[pltpu.VMEM((BN, D), jnp.float32)],   # activation carry
        compiler_params=pltpu.CompilerParams(
            dimension_semantics=("arbitrary",)),              # state carried over depth
    )(patches, conv_w, params['conv_b'], pos_bn,
      params['ln1_w'], params['ln1_b'], qkv_w, params['qkv_b'],
      proj_w, params['proj_b'], params['ln2_w'], params['ln2_b'],
      fc1_w, params['fc1_b'], fc2_w, params['fc2_b'],
      params['lnf_w'], params['lnf_b'])

    return out.reshape(B, N, D)


# ----------------------------------------------------------------------------
# pure-JAX reference (f32)
# ----------------------------------------------------------------------------
def ref_forward(x_img, cfg, params):
    patches = extract_patches(x_img, cfg['patch_size'])
    x = patches @ params['conv_w'] + params['conv_b'] + params['pos_embed'][None]

    def ln(y, w, b):
        mu = jnp.mean(y, axis=-1, keepdims=True)
        var = jnp.mean((y - mu) ** 2, axis=-1, keepdims=True)
        return (y - mu) / jnp.sqrt(var + 1e-5) * w + b

    n_heads = cfg['n_heads']
    B, N, D = x.shape
    hd = D // n_heads
    for l in range(cfg['depth']):
        xn = ln(x, params['ln1_w'][l], params['ln1_b'][l])
        qkv = xn @ params['qkv_w'][l] + params['qkv_b'][l]
        qkv = qkv.reshape(B, N, 3, n_heads, hd).transpose(2, 0, 3, 1, 4)
        q, k, v = qkv[0], qkv[1], qkv[2]
        attn = jnp.einsum('bhnd,bhmd->bhnm', q, k) * hd ** (-0.5)
        attn = jax.nn.softmax(attn, axis=-1)
        o = jnp.einsum('bhnm,bhmd->bhnd', attn, v).transpose(0, 2, 1, 3).reshape(B, N, D)
        x = x + (o @ params['proj_w'][l] + params['proj_b'][l])
        xn2 = ln(x, params['ln2_w'][l], params['ln2_b'][l])
        h = jax.nn.gelu(xn2 @ params['fc1_w'][l] + params['fc1_b'][l], approximate=False)
        x = x + (h @ params['fc2_w'][l] + params['fc2_b'][l])
    return ln(x, params['lnf_w'], params['lnf_b'])


# ----------------------------------------------------------------------------
# deterministic parameter construction (per-layer weights stacked on depth axis)
# ----------------------------------------------------------------------------
def xavier_uniform(key, fan_in, fan_out, shape):
    bound = float(np.sqrt(6.0 / (fan_in + fan_out)))
    return jax.random.uniform(key, shape, jnp.float32, -bound, bound)


def build_params(key, cfg):
    C, P, D = cfg['in_channels'], cfg['patch_size'], cfg['embed_dim']
    Hd = int(D * cfg['mlp_ratio'])
    depth = cfg['depth']
    n_patches = (cfg['img_size'] // P) ** 2
    keys = iter(jax.random.split(key, 2 + 4 * depth))

    fan = C * P * P
    bound = 1.0 / np.sqrt(fan)
    conv_w = jax.random.uniform(next(keys), (fan, D), jnp.float32, -bound, bound)
    conv_b = jax.random.uniform(next(keys), (1, D), jnp.float32, -bound, bound)
    pos = jnp.asarray(get_2d_sincos_pos_embed(D, int(n_patches ** 0.5)), jnp.float32)

    qkv_w, proj_w, fc1_w, fc2_w = [], [], [], []
    for _ in range(depth):
        qkv_w.append(xavier_uniform(next(keys), D, 3 * D, (D, 3 * D)))
        proj_w.append(xavier_uniform(next(keys), D, D, (D, D)))
        fc1_w.append(xavier_uniform(next(keys), D, Hd, (D, Hd)))
        fc2_w.append(xavier_uniform(next(keys), Hd, D, (Hd, D)))

    ones = lambda n: jnp.ones((depth, 1, n), jnp.float32)
    zeros = lambda n: jnp.zeros((depth, 1, n), jnp.float32)

    return dict(
        conv_w=conv_w, conv_b=conv_b, pos_embed=pos,
        ln1_w=ones(D), ln1_b=zeros(D),
        qkv_w=jnp.stack(qkv_w), qkv_b=zeros(3 * D),
        proj_w=jnp.stack(proj_w), proj_b=zeros(D),
        ln2_w=ones(D), ln2_b=zeros(D),
        fc1_w=jnp.stack(fc1_w), fc1_b=zeros(Hd),
        fc2_w=jnp.stack(fc2_w), fc2_b=zeros(D),
        lnf_w=jnp.ones((1, D), jnp.float32),
        lnf_b=jnp.zeros((1, D), jnp.float32))


# ----------------------------------------------------------------------------
if __name__ == "__main__":
    cfg = dict(img_size=32, patch_size=8, in_channels=3, embed_dim=128,
               depth=2, n_heads=4, mlp_ratio=4.0)
    B = 2

    key = jax.random.PRNGKey(0)
    k_x, k_p = jax.random.split(key)
    x_img = jax.random.normal(
        k_x, (B, cfg['in_channels'], cfg['img_size'], cfg['img_size']), jnp.float32)
    params = build_params(k_p, cfg)

    ref = jax.block_until_ready(ref_forward(x_img, cfg, params))
    N = (cfg['img_size'] // cfg['patch_size']) ** 2

    # f32 matmul operands: tight check against the pure-JAX reference.
    out = jax.block_until_ready(encoder_forward(x_img, cfg, params, jnp.float32))
    assert out.shape == ref.shape == (B, N, cfg['embed_dim'])
    assert bool(jnp.all(jnp.isfinite(out)))
    assert bool(jnp.allclose(out, ref, rtol=5e-2, atol=5e-2)), "f32 mismatch vs reference"

    # bf16 MXU operands (production setting for v6e/v7x), f32 accumulation.
    out_bf16 = jax.block_until_ready(encoder_forward(x_img, cfg, params, jnp.bfloat16))
    assert bool(jnp.all(jnp.isfinite(out_bf16)))
    assert bool(jnp.allclose(out_bf16, ref, rtol=1e-1, atol=1e-1)), "bf16 mismatch vs reference"

    print("KERNEL_OK")
</pallas_src>

<mosaic_0001>
module attributes {stable_mosaic.version = 11 : i64} {
  func.func @kernel(%arg0: i32, %arg1: memref<32x192xf32, #tpu.memory_space<vmem>>, %arg2: memref<192x128xf32, #tpu.memory_space<vmem>>, %arg3: memref<1x128xf32, #tpu.memory_space<vmem>>, %arg4: memref<32x128xf32, #tpu.memory_space<vmem>>, %arg5: memref<1x1x128xf32, #tpu.memory_space<vmem>>, %arg6: memref<1x1x128xf32, #tpu.memory_space<vmem>>, %arg7: memref<1x128x384xf32, #tpu.memory_space<vmem>>, %arg8: memref<1x1x384xf32, #tpu.memory_space<vmem>>, %arg9: memref<1x128x128xf32, #tpu.memory_space<vmem>>, %arg10: memref<1x1x128xf32, #tpu.memory_space<vmem>>, %arg11: memref<1x1x128xf32, #tpu.memory_space<vmem>>, %arg12: memref<1x1x128xf32, #tpu.memory_space<vmem>>, %arg13: memref<1x128x512xf32, #tpu.memory_space<vmem>>, %arg14: memref<1x1x512xf32, #tpu.memory_space<vmem>>, %arg15: memref<1x512x128xf32, #tpu.memory_space<vmem>>, %arg16: memref<1x1x128xf32, #tpu.memory_space<vmem>>, %arg17: memref<1x128xf32, #tpu.memory_space<vmem>>, %arg18: memref<1x128xf32, #tpu.memory_space<vmem>>, %arg19: memref<32x128xf32, #tpu.memory_space<vmem>>, %arg20: memref<32x128xf32, #tpu.memory_space<vmem>>) attributes {dimension_semantics = [#tpu.dimension_semantics<arbitrary>], iteration_bounds = array<i64: 2>, scalar_prefetch = 0 : i64, scratch_operands = 1 : i64, tpu.core_type = #tpu.core_type<tc>, window_params = [{pipeline_mode = #tpu.pipeline_mode<synchronous>, transform_indices = @transform_0, window_bounds = array<i64: 32, 192>}, {pipeline_mode = #tpu.pipeline_mode<synchronous>, transform_indices = @transform_1, window_bounds = array<i64: 192, 128>}, {pipeline_mode = #tpu.pipeline_mode<synchronous>, transform_indices = @transform_2, window_bounds = array<i64: 1, 128>}, {pipeline_mode = #tpu.pipeline_mode<synchronous>, transform_indices = @transform_3, window_bounds = array<i64: 32, 128>}, {transform_indices = @transform_4, window_bounds = array<i64: 1, 1, 128>}, {transform_indices = @transform_5, window_bounds = array<i64: 1, 1, 128>}, {transform_indices = @transform_6, window_bounds = array<i64: 1, 128, 384>}, {transform_indices = @transform_7, window_bounds = array<i64: 1, 1, 384>}, {transform_indices = @transform_8, window_bounds = array<i64: 1, 128, 128>}, {transform_indices = @transform_9, window_bounds = array<i64: 1, 1, 128>}, {transform_indices = @transform_10, window_bounds = array<i64: 1, 1, 128>}, {transform_indices = @transform_11, window_bounds = array<i64: 1, 1, 128>}, {transform_indices = @transform_12, window_bounds = array<i64: 1, 128, 512>}, {transform_indices = @transform_13, window_bounds = array<i64: 1, 1, 512>}, {transform_indices = @transform_14, window_bounds = array<i64: 1, 512, 128>}, {transform_indices = @transform_15, window_bounds = array<i64: 1, 1, 128>}, {pipeline_mode = #tpu.pipeline_mode<synchronous>, transform_indices = @transform_16, window_bounds = array<i64: 1, 128>}, {pipeline_mode = #tpu.pipeline_mode<synchronous>, transform_indices = @transform_17, window_bounds = array<i64: 1, 128>}, {pipeline_mode = #tpu.pipeline_mode<synchronous>, transform_indices = @transform_18, window_bounds = array<i64: 32, 128>}]} {
    %c0_i32 = arith.constant 0 : i32
    %0 = arith.cmpi eq, %arg0, %c0_i32 : i32
    %1 = arith.extui %0 : i1 to i32
    %c0_i32_0 = arith.constant 0 : i32
    %2 = arith.cmpi ne, %1, %c0_i32_0 : i32
    scf.if %2 {
      %c0_78 = arith.constant 0 : index
      %c0_79 = arith.constant 0 : index
      %178 = vector.load %arg1[%c0_78, %c0_79] : memref<32x192xf32, #tpu.memory_space<vmem>>, vector<32x192xf32>
      %c0_80 = arith.constant 0 : index
      %c0_81 = arith.constant 0 : index
      %179 = vector.load %arg2[%c0_80, %c0_81] : memref<192x128xf32, #tpu.memory_space<vmem>>, vector<192x128xf32>
      %cst_82 = arith.constant dense<0.000000e+00> : vector<32x128xf32>
      %180 = tpu.matmul %178, %179, %cst_82 {dimension_numbers = #tpu.dot_dimension_numbers<[1], [0], [0], [1], [0, 0, 1, 1], [], []>} : vector<32x192xf32>, vector<192x128xf32>, vector<32x128xf32> -> vector<32x128xf32>
      %c0_83 = arith.constant 0 : index
      %c0_84 = arith.constant 0 : index
      %181 = vector.load %arg3[%c0_83, %c0_84] : memref<1x128xf32, #tpu.memory_space<vmem>>, vector<1x128xf32>
      %182 = vector.broadcast %181 : vector<1x128xf32> to vector<32x128xf32>
      %183 = arith.addf %180, %182 : vector<32x128xf32>
      %c0_85 = arith.constant 0 : index
      %c0_86 = arith.constant 0 : index
      %184 = vector.load %arg4[%c0_85, %c0_86] : memref<32x128xf32, #tpu.memory_space<vmem>>, vector<32x128xf32>
      %185 = arith.addf %183, %184 : vector<32x128xf32>
      %c0_87 = arith.constant 0 : index
      %c0_88 = arith.constant 0 : index
      %186 = vector.load %arg20[%c0_87, %c0_88] : memref<32x128xf32, #tpu.memory_space<vmem>>, vector<32x128xf32>
      tpu.vector_store %arg20[%c0_87, %c0_88], %185 {strides = array<i32>} : memref<32x128xf32, #tpu.memory_space<vmem>>, vector<32x128xf32>,
    } else {
    }
    %c0 = arith.constant 0 : index
    %c0_1 = arith.constant 0 : index
    %3 = vector.load %arg20[%c0, %c0_1] : memref<32x128xf32, #tpu.memory_space<vmem>>, vector<32x128xf32>
    %c0_2 = arith.constant 0 : index
    %c0_3 = arith.constant 0 : index
    %c0_4 = arith.constant 0 : index
    %4 = vector.load %arg5[%c0_2, %c0_3, %c0_4] : memref<1x1x128xf32, #tpu.memory_space<vmem>>, vector<1x1x128xf32>
    %5 = vector.shape_cast %4 : vector<1x1x128xf32> to vector<1x128xf32>
    %c0_5 = arith.constant 0 : index
    %c0_6 = arith.constant 0 : index
    %c0_7 = arith.constant 0 : index
    %6 = vector.load %arg6[%c0_5, %c0_6, %c0_7] : memref<1x1x128xf32, #tpu.memory_space<vmem>>, vector<1x1x128xf32>
    %7 = vector.shape_cast %6 : vector<1x1x128xf32> to vector<1x128xf32>
    %cst = arith.constant dense<0.000000e+00> : vector<32xf32>
    %8 = vector.multi_reduction <add>, %3, %cst [1] : vector<32x128xf32> to vector<32xf32>
    %9 = vector.shape_cast %8 : vector<32xf32> to vector<32x1xf32>
    %cst_8 = arith.constant 1.280000e+02 : f32
    %10 = vector.broadcast %cst_8 : f32 to vector<32x1xf32>
    %11 = arith.divf %9, %10 : vector<32x1xf32>
    %12 = vector.broadcast %11 : vector<32x1xf32> to vector<32x128xf32>
    %13 = arith.subf %3, %12 : vector<32x128xf32>
    %14 = arith.mulf %13, %13 : vector<32x128xf32>
    %cst_9 = arith.constant dense<0.000000e+00> : vector<32xf32>
    %15 = vector.multi_reduction <add>, %14, %cst_9 [1] : vector<32x128xf32> to vector<32xf32>
    %16 = vector.shape_cast %15 : vector<32xf32> to vector<32x1xf32>
    %cst_10 = arith.constant 1.280000e+02 : f32
    %17 = vector.broadcast %cst_10 : f32 to vector<32x1xf32>
    %18 = arith.divf %16, %17 : vector<32x1xf32>
    %cst_11 = arith.constant 9.99999974E-6 : f32
    %19 = vector.broadcast %cst_11 : f32 to vector<32x1xf32>
    %20 = arith.addf %18, %19 : vector<32x1xf32>
    %21 = math.rsqrt %20 : vector<32x1xf32>
    %22 = vector.broadcast %21 : vector<32x1xf32> to vector<32x128xf32>
    %23 = arith.mulf %13, %22 : vector<32x128xf32>
    %24 = vector.broadcast %5 : vector<1x128xf32> to vector<32x128xf32>
    %25 = arith.mulf %23, %24 : vector<32x128xf32>
    %26 = vector.broadcast %7 : vector<1x128xf32> to vector<32x128xf32>
    %27 = arith.addf %25, %26 : vector<32x128xf32>
    %c0_12 = arith.constant 0 : index
    %c0_13 = arith.constant 0 : index
    %c0_14 = arith.constant 0 : index
    %28 = vector.load %arg7[%c0_12, %c0_13, %c0_14] : memref<1x128x384xf32, #tpu.memory_space<vmem>>, vector<1x128x384xf32>
    %29 = vector.shape_cast %28 : vector<1x128x384xf32> to vector<128x384xf32>
    %cst_15 = arith.constant dense<0.000000e+00> : vector<32x384xf32>
    %30 = tpu.matmul %27, %29, %cst_15 {dimension_numbers = #tpu.dot_dimension_numbers<[1], [0], [0], [1], [0, 0, 1, 1], [], []>} : vector<32x128xf32>, vector<128x384xf32>, vector<32x384xf32> -> vector<32x384xf32>
    %c0_16 = arith.constant 0 : index
    %c0_17 = arith.constant 0 : index
    %c0_18 = arith.constant 0 : index
    %31 = vector.load %arg8[%c0_16, %c0_17, %c0_18] : memref<1x1x384xf32, #tpu.memory_space<vmem>>, vector<1x1x384xf32>
    %32 = vector.shape_cast %31 : vector<1x1x384xf32> to vector<1x384xf32>
    %33 = vector.broadcast %32 : vector<1x384xf32> to vector<32x384xf32>
    %34 = arith.addf %30, %33 : vector<32x384xf32>
    %35 = vector.extract_strided_slice %34 {offsets = [0, 0], sizes = [32, 128], strides = [1, 1]} : vector<32x384xf32> to vector<32x128xf32>
    %cst_19 = arith.constant 0.176776692 : f32
    %36 = vector.broadcast %cst_19 : f32 to vector<32x128xf32>
    %37 = arith.mulf %35, %36 : vector<32x128xf32>
    %38 = vector.shape_cast %37 : vector<32x128xf32> to vector<2x16x128xf32>
    %39 = vector.extract_strided_slice %34 {offsets = [0, 128], sizes = [32, 128], strides = [1, 1]} : vector<32x384xf32> to vector<32x128xf32>
    %40 = vector.shape_cast %39 : vector<32x128xf32> to vector<2x16x128xf32>
    %41 = vector.extract_strided_slice %34 {offsets = [0, 256], sizes = [32, 128], strides = [1, 1]} : vector<32x384xf32> to vector<32x128xf32>
    %42 = vector.shape_cast %41 : vector<32x128xf32> to vector<2x16x128xf32>
    %c0_20 = arith.constant 0 : index
    %c0_21 = arith.constant 0 : index
    %c0_22 = arith.constant 0 : index
    %43 = vector.load %arg9[%c0_20, %c0_21, %c0_22] : memref<1x128x128xf32, #tpu.memory_space<vmem>>, vector<1x128x128xf32>
    %44 = vector.shape_cast %43 : vector<1x128x128xf32> to vector<128x128xf32>
    %cst_23 = arith.constant 0.000000e+00 : f32
    %45 = vector.broadcast %cst_23 : f32 to vector<32x128xf32>
    %46 = vector.extract_strided_slice %38 {offsets = [0, 0, 0], sizes = [2, 16, 32], strides = [1, 1, 1]} : vector<2x16x128xf32> to vector<2x16x32xf32>
    %47 = vector.extract_strided_slice %40 {offsets = [0, 0, 0], sizes = [2, 16, 32], strides = [1, 1, 1]} : vector<2x16x128xf32> to vector<2x16x32xf32>
    "tpu.trace_start"() <{level = 10 : i32, message = "bnd,bmd->bnm"}> : () -> ()
    %cst_24 = arith.constant dense<0.000000e+00> : vector<2x16x16xf32>
    %48 = tpu.matmul %46, %47, %cst_24 {dimension_numbers = #tpu.dot_dimension_numbers<[2], [2], [1], [1], [0, 0, 0, 1, 1, 1], [0], [0]>} : vector<2x16x32xf32>, vector<2x16x32xf32>, vector<2x16x16xf32> -> vector<2x16x16xf32>
    "tpu.trace_stop"() : () -> ()
    %cst_25 = arith.constant dense<0xFF800000> : vector<2x16xf32>
    %49 = vector.multi_reduction <maximumf>, %48, %cst_25 [2] : vector<2x16x16xf32> to vector<2x16xf32>
    %50 = vector.shape_cast %49 : vector<2x16xf32> to vector<2x16x1xf32>
    %51 = vector.broadcast %50 : vector<2x16x1xf32> to vector<2x16x16xf32>
    %52 = arith.subf %48, %51 : vector<2x16x16xf32>
    %53 = math.exp %52 : vector<2x16x16xf32>
    %cst_26 = arith.constant dense<0.000000e+00> : vector<2x16xf32>
    %54 = vector.multi_reduction <add>, %53, %cst_26 [2] : vector<2x16x16xf32> to vector<2x16xf32>
    %55 = vector.shape_cast %54 : vector<2x16xf32> to vector<2x16x1xf32>
    %56 = tpu.reciprocal %55 {approx = true} : vector<2x16x1xf32> -> vector<2x16x1xf32>
    %57 = vector.broadcast %56 : vector<2x16x1xf32> to vector<2x16x16xf32>
    %58 = arith.mulf %53, %57 : vector<2x16x16xf32>
    %59 = vector.extract_strided_slice %42 {offsets = [0, 0, 0], sizes = [2, 16, 32], strides = [1, 1, 1]} : vector<2x16x128xf32> to vector<2x16x32xf32>
    "tpu.trace_start"() <{level = 10 : i32, message = "bnm,bmd->bnd"}> : () -> ()
    %cst_27 = arith.constant dense<0.000000e+00> : vector<2x16x32xf32>
    %60 = tpu.matmul %58, %59, %cst_27 {dimension_numbers = #tpu.dot_dimension_numbers<[2], [1], [1], [2], [0, 0, 0, 1, 1, 2], [0], [0]>} : vector<2x16x16xf32>, vector<2x16x32xf32>, vector<2x16x32xf32> -> vector<2x16x32xf32>
    "tpu.trace_stop"() : () -> ()
    %61 = vector.shape_cast %60 : vector<2x16x32xf32> to vector<32x32xf32>
    %62 = vector.extract_strided_slice %44 {offsets = [0, 0], sizes = [32, 128], strides = [1, 1]} : vector<128x128xf32> to vector<32x128xf32>
    %cst_28 = arith.constant dense<0.000000e+00> : vector<32x128xf32>
    %63 = tpu.matmul %61, %62, %cst_28 {dimension_numbers = #tpu.dot_dimension_numbers<[1], [0], [0], [1], [0, 0, 1, 1], [], []>} : vector<32x32xf32>, vector<32x128xf32>, vector<32x128xf32> -> vector<32x128xf32>
    %64 = arith.addf %45, %63 : vector<32x128xf32>
    %65 = vector.extract_strided_slice %38 {offsets = [0, 0, 32], sizes = [2, 16, 32], strides = [1, 1, 1]} : vector<2x16x128xf32> to vector<2x16x32xf32>
    %66 = vector.extract_strided_slice %40 {offsets = [0, 0, 32], sizes = [2, 16, 32], strides = [1, 1, 1]} : vector<2x16x128xf32> to vector<2x16x32xf32>
    "tpu.trace_start"() <{level = 10 : i32, message = "bnd,bmd->bnm"}> : () -> ()
    %cst_29 = arith.constant dense<0.000000e+00> : vector<2x16x16xf32>
    %67 = tpu.matmul %65, %66, %cst_29 {dimension_numbers = #tpu.dot_dimension_numbers<[2], [2], [1], [1], [0, 0, 0, 1, 1, 1], [0], [0]>} : vector<2x16x32xf32>, vector<2x16x32xf32>, vector<2x16x16xf32> -> vector<2x16x16xf32>
    "tpu.trace_stop"() : () -> ()
    %cst_30 = arith.constant dense<0xFF800000> : vector<2x16xf32>
    %68 = vector.multi_reduction <maximumf>, %67, %cst_30 [2] : vector<2x16x16xf32> to vector<2x16xf32>
    %69 = vector.shape_cast %68 : vector<2x16xf32> to vector<2x16x1xf32>
    %70 = vector.broadcast %69 : vector<2x16x1xf32> to vector<2x16x16xf32>
    %71 = arith.subf %67, %70 : vector<2x16x16xf32>
    %72 = math.exp %71 : vector<2x16x16xf32>
    %cst_31 = arith.constant dense<0.000000e+00> : vector<2x16xf32>
    %73 = vector.multi_reduction <add>, %72, %cst_31 [2] : vector<2x16x16xf32> to vector<2x16xf32>
    %74 = vector.shape_cast %73 : vector<2x16xf32> to vector<2x16x1xf32>
    %75 = tpu.reciprocal %74 {approx = true} : vector<2x16x1xf32> -> vector<2x16x1xf32>
    %76 = vector.broadcast %75 : vector<2x16x1xf32> to vector<2x16x16xf32>
    %77 = arith.mulf %72, %76 : vector<2x16x16xf32>
    %78 = vector.extract_strided_slice %42 {offsets = [0, 0, 32], sizes = [2, 16, 32], strides = [1, 1, 1]} : vector<2x16x128xf32> to vector<2x16x32xf32>
    "tpu.trace_start"() <{level = 10 : i32, message = "bnm,bmd->bnd"}> : () -> ()
    %cst_32 = arith.constant dense<0.000000e+00> : vector<2x16x32xf32>
    %79 = tpu.matmul %77, %78, %cst_32 {dimension_numbers = #tpu.dot_dimension_numbers<[2], [1], [1], [2], [0, 0, 0, 1, 1, 2], [0], [0]>} : vector<2x16x16xf32>, vector<2x16x32xf32>, vector<2x16x32xf32> -> vector<2x16x32xf32>
    "tpu.trace_stop"() : () -> ()
    %80 = vector.shape_cast %79 : vector<2x16x32xf32> to vector<32x32xf32>
    %81 = vector.extract_strided_slice %44 {offsets = [32, 0], sizes = [32, 128], strides = [1, 1]} : vector<128x128xf32> to vector<32x128xf32>
    %cst_33 = arith.constant dense<0.000000e+00> : vector<32x128xf32>
    %82 = tpu.matmul %80, %81, %cst_33 {dimension_numbers = #tpu.dot_dimension_numbers<[1], [0], [0], [1], [0, 0, 1, 1], [], []>} : vector<32x32xf32>, vector<32x128xf32>, vector<32x128xf32> -> vector<32x128xf32>
    %83 = arith.addf %64, %82 : vector<32x128xf32>
    %84 = vector.extract_strided_slice %38 {offsets = [0, 0, 64], sizes = [2, 16, 32], strides = [1, 1, 1]} : vector<2x16x128xf32> to vector<2x16x32xf32>
    %85 = vector.extract_strided_slice %40 {offsets = [0, 0, 64], sizes = [2, 16, 32], strides = [1, 1, 1]} : vector<2x16x128xf32> to vector<2x16x32xf32>
    "tpu.trace_start"() <{level = 10 : i32, message = "bnd,bmd->bnm"}> : () -> ()
    %cst_34 = arith.constant dense<0.000000e+00> : vector<2x16x16xf32>
    %86 = tpu.matmul %84, %85, %cst_34 {dimension_numbers = #tpu.dot_dimension_numbers<[2], [2], [1], [1], [0, 0, 0, 1, 1, 1], [0], [0]>} : vector<2x16x32xf32>, vector<2x16x32xf32>, vector<2x16x16xf32> -> vector<2x16x16xf32>
    "tpu.trace_stop"() : () -> ()
    %cst_35 = arith.constant dense<0xFF800000> : vector<2x16xf32>
    %87 = vector.multi_reduction <maximumf>, %86, %cst_35 [2] : vector<2x16x16xf32> to vector<2x16xf32>
    %88 = vector.shape_cast %87 : vector<2x16xf32> to vector<2x16x1xf32>
    %89 = vector.broadcast %88 : vector<2x16x1xf32> to vector<2x16x16xf32>
    %90 = arith.subf %86, %89 : vector<2x16x16xf32>
    %91 = math.exp %90 : vector<2x16x16xf32>
    %cst_36 = arith.constant dense<0.000000e+00> : vector<2x16xf32>
    %92 = vector.multi_reduction <add>, %91, %cst_36 [2] : vector<2x16x16xf32> to vector<2x16xf32>
    %93 = vector.shape_cast %92 : vector<2x16xf32> to vector<2x16x1xf32>
    %94 = tpu.reciprocal %93 {approx = true} : vector<2x16x1xf32> -> vector<2x16x1xf32>
    %95 = vector.broadcast %94 : vector<2x16x1xf32> to vector<2x16x16xf32>
    %96 = arith.mulf %91, %95 : vector<2x16x16xf32>
    %97 = vector.extract_strided_slice %42 {offsets = [0, 0, 64], sizes = [2, 16, 32], strides = [1, 1, 1]} : vector<2x16x128xf32> to vector<2x16x32xf32>
    "tpu.trace_start"() <{level = 10 : i32, message = "bnm,bmd->bnd"}> : () -> ()
    %cst_37 = arith.constant dense<0.000000e+00> : vector<2x16x32xf32>
    %98 = tpu.matmul %96, %97, %cst_37 {dimension_numbers = #tpu.dot_dimension_numbers<[2], [1], [1], [2], [0, 0, 0, 1, 1, 2], [0], [0]>} : vector<2x16x16xf32>, vector<2x16x32xf32>, vector<2x16x32xf32> -> vector<2x16x32xf32>
    "tpu.trace_stop"() : () -> ()
    %99 = vector.shape_cast %98 : vector<2x16x32xf32> to vector<32x32xf32>
    %100 = vector.extract_strided_slice %44 {offsets = [64, 0], sizes = [32, 128], strides = [1, 1]} : vector<128x128xf32> to vector<32x128xf32>
    %cst_38 = arith.constant dense<0.000000e+00> : vector<32x128xf32>
    %101 = tpu.matmul %99, %100, %cst_38 {dimension_numbers = #tpu.dot_dimension_numbers<[1], [0], [0], [1], [0, 0, 1, 1], [], []>} : vector<32x32xf32>, vector<32x128xf32>, vector<32x128xf32> -> vector<32x128xf32>
    %102 = arith.addf %83, %101 : vector<32x128xf32>
    %103 = vector.extract_strided_slice %38 {offsets = [0, 0, 96], sizes = [2, 16, 32], strides = [1, 1, 1]} : vector<2x16x128xf32> to vector<2x16x32xf32>
    %104 = vector.extract_strided_slice %40 {offsets = [0, 0, 96], sizes = [2, 16, 32], strides = [1, 1, 1]} : vector<2x16x128xf32> to vector<2x16x32xf32>
    "tpu.trace_start"() <{level = 10 : i32, message = "bnd,bmd->bnm"}> : () -> ()
    %cst_39 = arith.constant dense<0.000000e+00> : vector<2x16x16xf32>
    %105 = tpu.matmul %103, %104, %cst_39 {dimension_numbers = #tpu.dot_dimension_numbers<[2], [2], [1], [1], [0, 0, 0, 1, 1, 1], [0], [0]>} : vector<2x16x32xf32>, vector<2x16x32xf32>, vector<2x16x16xf32> -> vector<2x16x16xf32>
    "tpu.trace_stop"() : () -> ()
    %cst_40 = arith.constant dense<0xFF800000> : vector<2x16xf32>
    %106 = vector.multi_reduction <maximumf>, %105, %cst_40 [2] : vector<2x16x16xf32> to vector<2x16xf32>
    %107 = vector.shape_cast %106 : vector<2x16xf32> to vector<2x16x1xf32>
    %108 = vector.broadcast %107 : vector<2x16x1xf32> to vector<2x16x16xf32>
    %109 = arith.subf %105, %108 : vector<2x16x16xf32>
    %110 = math.exp %109 : vector<2x16x16xf32>
    %cst_41 = arith.constant dense<0.000000e+00> : vector<2x16xf32>
    %111 = vector.multi_reduction <add>, %110, %cst_41 [2] : vector<2x16x16xf32> to vector<2x16xf32>
    %112 = vector.shape_cast %111 : vector<2x16xf32> to vector<2x16x1xf32>
    %113 = tpu.reciprocal %112 {approx = true} : vector<2x16x1xf32> -> vector<2x16x1xf32>
    %114 = vector.broadcast %113 : vector<2x16x1xf32> to vector<2x16x16xf32>
    %115 = arith.mulf %110, %114 : vector<2x16x16xf32>
    %116 = vector.extract_strided_slice %42 {offsets = [0, 0, 96], sizes = [2, 16, 32], strides = [1, 1, 1]} : vector<2x16x128xf32> to vector<2x16x32xf32>
    "tpu.trace_start"() <{level = 10 : i32, message = "bnm,bmd->bnd"}> : () -> ()
    %cst_42 = arith.constant dense<0.000000e+00> : vector<2x16x32xf32>
    %117 = tpu.matmul %115, %116, %cst_42 {dimension_numbers = #tpu.dot_dimension_numbers<[2], [1], [1], [2], [0, 0, 0, 1, 1, 2], [0], [0]>} : vector<2x16x16xf32>, vector<2x16x32xf32>, vector<2x16x32xf32> -> vector<2x16x32xf32>
    "tpu.trace_stop"() : () -> ()
    %118 = vector.shape_cast %117 : vector<2x16x32xf32> to vector<32x32xf32>
    %119 = vector.extract_strided_slice %44 {offsets = [96, 0], sizes = [32, 128], strides = [1, 1]} : vector<128x128xf32> to vector<32x128xf32>
    %cst_43 = arith.constant dense<0.000000e+00> : vector<32x128xf32>
    %120 = tpu.matmul %118, %119, %cst_43 {dimension_numbers = #tpu.dot_dimension_numbers<[1], [0], [0], [1], [0, 0, 1, 1], [], []>} : vector<32x32xf32>, vector<32x128xf32>, vector<32x128xf32> -> vector<32x128xf32>
    %121 = arith.addf %102, %120 : vector<32x128xf32>
    %122 = arith.addf %3, %121 : vector<32x128xf32>
    %c0_44 = arith.constant 0 : index
    %c0_45 = arith.constant 0 : index
    %c0_46 = arith.constant 0 : index
    %123 = vector.load %arg10[%c0_44, %c0_45, %c0_46] : memref<1x1x128xf32, #tpu.memory_space<vmem>>, vector<1x1x128xf32>
    %124 = vector.shape_cast %123 : vector<1x1x128xf32> to vector<1x128xf32>
    %125 = vector.broadcast %124 : vector<1x128xf32> to vector<32x128xf32>
    %126 = arith.addf %122, %125 : vector<32x128xf32>
    %c0_47 = arith.constant 0 : index
    %c0_48 = arith.constant 0 : index
    %c0_49 = arith.constant 0 : index
    %127 = vector.load %arg11[%c0_47, %c0_48, %c0_49] : memref<1x1x128xf32, #tpu.memory_space<vmem>>, vector<1x1x128xf32>
    %128 = vector.shape_cast %127 : vector<1x1x128xf32> to vector<1x128xf32>
    %c0_50 = arith.constant 0 : index
    %c0_51 = arith.constant 0 : index
    %c0_52 = arith.constant 0 : index
    %129 = vector.load %arg12[%c0_50, %c0_51, %c0_52] : memref<1x1x128xf32, #tpu.memory_space<vmem>>, vector<1x1x128xf32>
    %130 = vector.shape_cast %129 : vector<1x1x128xf32> to vector<1x128xf32>
    %cst_53 = arith.constant dense<0.000000e+00> : vector<32xf32>
    %131 = vector.multi_reduction <add>, %126, %cst_53 [1] : vector<32x128xf32> to vector<32xf32>
    %132 = vector.shape_cast %131 : vector<32xf32> to vector<32x1xf32>
    %cst_54 = arith.constant 1.280000e+02 : f32
    %133 = vector.broadcast %cst_54 : f32 to vector<32x1xf32>
    %134 = arith.divf %132, %133 : vector<32x1xf32>
    %135 = vector.broadcast %134 : vector<32x1xf32> to vector<32x128xf32>
    %136 = arith.subf %126, %135 : vector<32x128xf32>
    %137 = arith.mulf %136, %136 : vector<32x128xf32>
    %cst_55 = arith.constant dense<0.000000e+00> : vector<32xf32>
    %138 = vector.multi_reduction <add>, %137, %cst_55 [1] : vector<32x128xf32> to vector<32xf32>
    %139 = vector.shape_cast %138 : vector<32xf32> to vector<32x1xf32>
    %cst_56 = arith.constant 1.280000e+02 : f32
    %140 = vector.broadcast %cst_56 : f32 to vector<32x1xf32>
    %141 = arith.divf %139, %140 : vector<32x1xf32>
    %cst_57 = arith.constant 9.99999974E-6 : f32
    %142 = vector.broadcast %cst_57 : f32 to vector<32x1xf32>
    %143 = arith.addf %141, %142 : vector<32x1xf32>
    %144 = math.rsqrt %143 : vector<32x1xf32>
    %145 = vector.broadcast %144 : vector<32x1xf32> to vector<32x128xf32>
    %146 = arith.mulf %136, %145 : vector<32x128xf32>
    %147 = vector.broadcast %128 : vector<1x128xf32> to vector<32x128xf32>
    %148 = arith.mulf %146, %147 : vector<32x128xf32>
    %149 = vector.broadcast %130 : vector<1x128xf32> to vector<32x128xf32>
    %150 = arith.addf %148, %149 : vector<32x128xf32>
    %c0_58 = arith.constant 0 : index
    %c0_59 = arith.constant 0 : index
    %c0_60 = arith.constant 0 : index
    %151 = vector.load %arg13[%c0_58, %c0_59, %c0_60] : memref<1x128x512xf32, #tpu.memory_space<vmem>>, vector<1x128x512xf32>
    %152 = vector.shape_cast %151 : vector<1x128x512xf32> to vector<128x512xf32>
    %cst_61 = arith.constant dense<0.000000e+00> : vector<32x512xf32>
    %153 = tpu.matmul %150, %152, %cst_61 {dimension_numbers = #tpu.dot_dimension_numbers<[1], [0], [0], [1], [0, 0, 1, 1], [], []>} : vector<32x128xf32>, vector<128x512xf32>, vector<32x512xf32> -> vector<32x512xf32>
    %c0_62 = arith.constant 0 : index
    %c0_63 = arith.constant 0 : index
    %c0_64 = arith.constant 0 : index
    %154 = vector.load %arg14[%c0_62, %c0_63, %c0_64] : memref<1x1x512xf32, #tpu.memory_space<vmem>>, vector<1x1x512xf32>
    %155 = vector.shape_cast %154 : vector<1x1x512xf32> to vector<1x512xf32>
    %156 = vector.broadcast %155 : vector<1x512xf32> to vector<32x512xf32>
    %157 = arith.addf %153, %156 : vector<32x512xf32>
    %cst_65 = arith.constant 5.000000e-01 : f32
    %158 = vector.broadcast %cst_65 : f32 to vector<32x512xf32>
    %159 = arith.mulf %158, %157 : vector<32x512xf32>
    %cst_66 = arith.constant 0.707106769 : f32
    %160 = vector.broadcast %cst_66 : f32 to vector<32x512xf32>
    %161 = arith.mulf %157, %160 : vector<32x512xf32>
    %162 = math.erf %161 : vector<32x512xf32>
    %cst_67 = arith.constant 1.000000e+00 : f32
    %163 = vector.broadcast %cst_67 : f32 to vector<32x512xf32>
    %164 = arith.addf %163, %162 : vector<32x512xf32>
    %165 = arith.mulf %159, %164 : vector<32x512xf32>
    %c0_68 = arith.constant 0 : index
    %c0_69 = arith.constant 0 : index
    %c0_70 = arith.constant 0 : index
    %166 = vector.load %arg15[%c0_68, %c0_69, %c0_70] : memref<1x512x128xf32, #tpu.memory_space<vmem>>, vector<1x512x128xf32>
    %167 = vector.shape_cast %166 : vector<1x512x128xf32> to vector<512x128xf32>
    %cst_71 = arith.constant dense<0.000000e+00> : vector<32x128xf32>
    %168 = tpu.matmul %165, %167, %cst_71 {dimension_numbers = #tpu.dot_dimension_numbers<[1], [0], [0], [1], [0, 0, 1, 1], [], []>} : vector<32x512xf32>, vector<512x128xf32>, vector<32x128xf32> -> vector<32x128xf32>
    %c0_72 = arith.constant 0 : index
    %c0_73 = arith.constant 0 : index
    %c0_74 = arith.constant 0 : index
    %169 = vector.load %arg16[%c0_72, %c0_73, %c0_74] : memref<1x1x128xf32, #tpu.memory_space<vmem>>, vector<1x1x128xf32>
    %170 = vector.shape_cast %169 : vector<1x1x128xf32> to vector<1x128xf32>
    %171 = vector.broadcast %170 : vector<1x128xf32> to vector<32x128xf32>
    %172 = arith.addf %168, %171 : vector<32x128xf32>
    %173 = arith.addf %126, %172 : vector<32x128xf32>
    %c0_75 = arith.constant 0 : index
    %c0_76 = arith.constant 0 : index
    %174 = vector.load %arg20[%c0_75, %c0_76] : memref<32x128xf32, #tpu.memory_space<vmem>>, vector<32x128xf32>
    tpu.vector_store %arg20[%c0_75, %c0_76], %173 {strides = array<i32>} : memref<32x128xf32, #tpu.memory_space<vmem>>, vector<32x128xf32>,
    %c1_i32 = arith.constant 1 : i32
    %175 = arith.cmpi eq, %arg0, %c1_i32 : i32
    %176 = arith.extui %175 : i1 to i32
    %c0_i32_77 = arith.constant 0 : i32
    %177 = arith.cmpi ne, %176, %c0_i32_77 : i32
    scf.if %177 {
      %c0_78 = arith.constant 0 : index
      %c0_79 = arith.constant 0 : index
      %178 = vector.load %arg17[%c0_78, %c0_79] : memref<1x128xf32, #tpu.memory_space<vmem>>, vector<1x128xf32>
      %c0_80 = arith.constant 0 : index
      %c0_81 = arith.constant 0 : index
      %179 = vector.load %arg18[%c0_80, %c0_81] : memref<1x128xf32, #tpu.memory_space<vmem>>, vector<1x128xf32>
      %cst_82 = arith.constant dense<0.000000e+00> : vector<32xf32>
      %180 = vector.multi_reduction <add>, %173, %cst_82 [1] : vector<32x128xf32> to vector<32xf32>
      %181 = vector.shape_cast %180 : vector<32xf32> to vector<32x1xf32>
      %cst_83 = arith.constant 1.280000e+02 : f32
      %182 = vector.broadcast %cst_83 : f32 to vector<32x1xf32>
      %183 = arith.divf %181, %182 : vector<32x1xf32>
      %184 = vector.broadcast %183 : vector<32x1xf32> to vector<32x128xf32>
      %185 = arith.subf %173, %184 : vector<32x128xf32>
      %186 = arith.mulf %185, %185 : vector<32x128xf32>
      %cst_84 = arith.constant dense<0.000000e+00> : vector<32xf32>
      %187 = vector.multi_reduction <add>, %186, %cst_84 [1] : vector<32x128xf32> to vector<32xf32>
      %188 = vector.shape_cast %187 : vector<32xf32> to vector<32x1xf32>
      %cst_85 = arith.constant 1.280000e+02 : f32
      %189 = vector.broadcast %cst_85 : f32 to vector<32x1xf32>
      %190 = arith.divf %188, %189 : vector<32x1xf32>
      %cst_86 = arith.constant 9.99999974E-6 : f32
      %191 = vector.broadcast %cst_86 : f32 to vector<32x1xf32>
      %192 = arith.addf %190, %191 : vector<32x1xf32>
      %193 = math.rsqrt %192 : vector<32x1xf32>
      %194 = vector.broadcast %193 : vector<32x1xf32> to vector<32x128xf32>
      %195 = arith.mulf %185, %194 : vector<32x128xf32>
      %196 = vector.broadcast %178 : vector<1x128xf32> to vector<32x128xf32>
      %197 = arith.mulf %195, %196 : vector<32x128xf32>
      %198 = vector.broadcast %179 : vector<1x128xf32> to vector<32x128xf32>
      %199 = arith.addf %197, %198 : vector<32x128xf32>
      %c0_87 = arith.constant 0 : index
      %c0_88 = arith.constant 0 : index
      %200 = vector.load %arg19[%c0_87, %c0_88] : memref<32x128xf32, #tpu.memory_space<vmem>>, vector<32x128xf32>
      tpu.vector_store %arg19[%c0_87, %c0_88], %199 {strides = array<i32>} : memref<32x128xf32, #tpu.memory_space<vmem>>, vector<32x128xf32>,
    } else {
    }
    return
  }
  func.func @transform_0(%arg0: i32) -> (i32, i32) {
    %c0_i32 = arith.constant 0 : i32
    %c0_i32_0 = arith.constant 0 : i32
    %c0_i32_1 = arith.constant 0 : i32
    return %c0_i32, %c0_i32_0 : i32, i32
  }
  func.func @transform_1(%arg0: i32) -> (i32, i32) {
    %c0_i32 = arith.constant 0 : i32
    %c0_i32_0 = arith.constant 0 : i32
    %c0_i32_1 = arith.constant 0 : i32
    return %c0_i32, %c0_i32_0 : i32, i32
  }
  func.func @transform_2(%arg0: i32) -> (i32, i32) {
    %c0_i32 = arith.constant 0 : i32
    %c0_i32_0 = arith.constant 0 : i32
    %c0_i32_1 = arith.constant 0 : i32
    return %c0_i32, %c0_i32_0 : i32, i32
  }
  func.func @transform_3(%arg0: i32) -> (i32, i32) {
    %c0_i32 = arith.constant 0 : i32
    %c0_i32_0 = arith.constant 0 : i32
    %c0_i32_1 = arith.constant 0 : i32
    return %c0_i32, %c0_i32_0 : i32, i32
  }
  func.func @transform_4(%arg0: i32) -> (i32, i32, i32) {
    %c0_i32 = arith.constant 0 : i32
    %c0_i32_0 = arith.constant 0 : i32
    %c0_i32_1 = arith.constant 0 : i32
    return %arg0, %c0_i32, %c0_i32_0 : i32, i32, i32
  }
  func.func @transform_5(%arg0: i32) -> (i32, i32, i32) {
    %c0_i32 = arith.constant 0 : i32
    %c0_i32_0 = arith.constant 0 : i32
    %c0_i32_1 = arith.constant 0 : i32
    return %arg0, %c0_i32, %c0_i32_0 : i32, i32, i32
  }
  func.func @transform_6(%arg0: i32) -> (i32, i32, i32) {
    %c0_i32 = arith.constant 0 : i32
    %c0_i32_0 = arith.constant 0 : i32
    %c0_i32_1 = arith.constant 0 : i32
    return %arg0, %c0_i32, %c0_i32_0 : i32, i32, i32
  }
  func.func @transform_7(%arg0: i32) -> (i32, i32, i32) {
    %c0_i32 = arith.constant 0 : i32
    %c0_i32_0 = arith.constant 0 : i32
    %c0_i32_1 = arith.constant 0 : i32
    return %arg0, %c0_i32, %c0_i32_0 : i32, i32, i32
  }
  func.func @transform_8(%arg0: i32) -> (i32, i32, i32) {
    %c0_i32 = arith.constant 0 : i32
    %c0_i32_0 = arith.constant 0 : i32
    %c0_i32_1 = arith.constant 0 : i32
    return %arg0, %c0_i32, %c0_i32_0 : i32, i32, i32
  }
  func.func @transform_9(%arg0: i32) -> (i32, i32, i32) {
    %c0_i32 = arith.constant 0 : i32
    %c0_i32_0 = arith.constant 0 : i32
    %c0_i32_1 = arith.constant 0 : i32
    return %arg0, %c0_i32, %c0_i32_0 : i32, i32, i32
  }
  func.func @transform_10(%arg0: i32) -> (i32, i32, i32) {
    %c0_i32 = arith.constant 0 : i32
    %c0_i32_0 = arith.constant 0 : i32
    %c0_i32_1 = arith.constant 0 : i32
    return %arg0, %c0_i32, %c0_i32_0 : i32, i32, i32
  }
  func.func @transform_11(%arg0: i32) -> (i32, i32, i32) {
    %c0_i32 = arith.constant 0 : i32
    %c0_i32_0 = arith.constant 0 : i32
    %c0_i32_1 = arith.constant 0 : i32
    return %arg0, %c0_i32, %c0_i32_0 : i32, i32, i32
  }
  func.func @transform_12(%arg0: i32) -> (i32, i32, i32) {
    %c0_i32 = arith.constant 0 : i32
    %c0_i32_0 = arith.constant 0 : i32
    %c0_i32_1 = arith.constant 0 : i32
    return %arg0, %c0_i32, %c0_i32_0 : i32, i32, i32
  }
  func.func @transform_13(%arg0: i32) -> (i32, i32, i32) {
    %c0_i32 = arith.constant 0 : i32
    %c0_i32_0 = arith.constant 0 : i32
    %c0_i32_1 = arith.constant 0 : i32
    return %arg0, %c0_i32, %c0_i32_0 : i32, i32, i32
  }
  func.func @transform_14(%arg0: i32) -> (i32, i32, i32) {
    %c0_i32 = arith.constant 0 : i32
    %c0_i32_0 = arith.constant 0 : i32
    %c0_i32_1 = arith.constant 0 : i32
    return %arg0, %c0_i32, %c0_i32_0 : i32, i32, i32
  }
  func.func @transform_15(%arg0: i32) -> (i32, i32, i32) {
    %c0_i32 = arith.constant 0 : i32
    %c0_i32_0 = arith.constant 0 : i32
    %c0_i32_1 = arith.constant 0 : i32
    return %arg0, %c0_i32, %c0_i32_0 : i32, i32, i32
  }
  func.func @transform_16(%arg0: i32) -> (i32, i32) {
    %c0_i32 = arith.constant 0 : i32
    %c0_i32_0 = arith.constant 0 : i32
    %c0_i32_1 = arith.constant 0 : i32
    return %c0_i32, %c0_i32_0 : i32, i32
  }
  func.func @transform_17(%arg0: i32) -> (i32, i32) {
    %c0_i32 = arith.constant 0 : i32
    %c0_i32_0 = arith.constant 0 : i32
    %c0_i32_1 = arith.constant 0 : i32
    return %c0_i32, %c0_i32_0 : i32, i32
  }
  func.func @transform_18(%arg0: i32) -> (i32, i32) {
    %c0_i32 = arith.constant 0 : i32
    %c0_i32_0 = arith.constant 0 : i32
    %c0_i32_1 = arith.constant 0 : i32
    return %c0_i32, %c0_i32_0 : i32, i32
  }
}

</mosaic_0001>

<llo_original>
// kernel: tpu_custom_call.1
$region0: #{tpu_custom_call.1}
  #allocation0 [shape = 'u32[]', space=smem, size = 0x4, offset = 0x4, fixed_abs, tag = 'smem constant byte address 0x4 - core index']
  #allocation1 [shape = 'u32[144,128]{1,0:T(1,128)}', space=vmem, size = 0x12000, scoped, tag = 'internal scratch']
  #allocation2 [shape = 'f32[32,128]{1,0:T(8,128)}', space=vmem, size = 0x4000, scoped, tag = 'scratch operand']
  %s0 = inlined_call_operand.hbm [shape: f32[32,192], index: 0, kind: input, shape index: {}]
  %s1 = inlined_call_operand.hbm [shape: f32[192,128], index: 1, kind: input, shape index: {}]
  %s2 = inlined_call_operand.hbm [shape: f32[1,128], index: 2, kind: input, shape index: {}]
  %s3 = inlined_call_operand.hbm [shape: f32[32,128], index: 3, kind: input, shape index: {}]
  %s4 = inlined_call_operand.hbm [shape: f32[2,1,128], index: 4, kind: input, shape index: {}]
  %s5 = inlined_call_operand.vmem [shape: f32[2,1,128], index: 5, kind: input, shape index: {}]
  %s6 = inlined_call_operand.hbm [shape: f32[2,128,384], index: 6, kind: input, shape index: {}]
  %s7 = inlined_call_operand.vmem [shape: f32[2,1,384], index: 7, kind: input, shape index: {}]
  %s8 = inlined_call_operand.hbm [shape: f32[2,128,128], index: 8, kind: input, shape index: {}]
  %s9 = inlined_call_operand.vmem [shape: f32[2,1,128], index: 9, kind: input, shape index: {}]
  %s10 = inlined_call_operand.vmem [shape: f32[2,1,128], index: 10, kind: input, shape index: {}]
  %s11 = inlined_call_operand.vmem [shape: f32[2,1,128], index: 11, kind: input, shape index: {}]
  %s12 = inlined_call_operand.hbm [shape: f32[2,128,512], index: 12, kind: input, shape index: {}]
  %s13 = inlined_call_operand.vmem [shape: f32[2,1,512], index: 13, kind: input, shape index: {}]
  %s14 = inlined_call_operand.hbm [shape: f32[2,512,128], index: 14, kind: input, shape index: {}]
  %s15 = inlined_call_operand.vmem [shape: f32[2,1,128], index: 15, kind: input, shape index: {}]
  %s16 = inlined_call_operand.vmem [shape: f32[1,128], index: 16, kind: input, shape index: {}]
  %s17 = inlined_call_operand.vmem [shape: f32[1,128], index: 17, kind: input, shape index: {}]
  %s18 = inlined_call_operand.hbm [shape: f32[32,128], index: 18, kind: output, shape index: {}]
  %s19 = sld [smem:[#allocation0]]
  $region149: #{tpu_custom_call.1} parent=0
    _
  %s21 = ssub.s32 1, %s19
  %s22 = scalar_select 0, %s21, %s19
  $region1: #{tpu_custom_call.1} parent=0
    #allocation3 [shape = 'u8[32768]{0}', space=vmem, size = 0x8000, scoped, tag = 'input window, operand 0, single buffered']
    #allocation4 [shape = 's32[2]{0}', space=sflag, size = 0x8, scoped, tag = 'scoped memory for tpu_custom_call.1']
    #allocation5 [shape = 's32[2]{0}', space=sflag, size = 0x8, scoped, tag = 'scoped memory for tpu_custom_call.1']
    #allocation6 [shape = 'u8[98304]{0}', space=vmem, size = 0x18000, scoped, tag = 'input window, operand 1, single buffered']
    #allocation7 [shape = 's32[1]{0}', space=sflag, size = 0x4, scoped, tag = 'scoped memory for tpu_custom_call.1']
    #allocation8 [shape = 'u8[512]{0}', space=vmem, size = 0x400, scoped, tag = 'input window, operand 2, single buffered']
    #allocation9 [shape = 'u8[16384]{0}', space=vmem, size = 0x4000, scoped, tag = 'input window, operand 3, single buffered']
    #allocation10 [shape = 's32[1]{0}', space=sflag, size = 0x4, scoped, tag = 'scoped memory for tpu_custom_call.1']
    #allocation11 [shape = 'u8[1024]{0}', space=vmem, size = 0x400, scoped, tag = 'input window, operand 4']
    #allocation12 [shape = 'u8[393216]{0}', space=vmem, size = 0x60000, scoped, tag = 'input window, operand 6']
    #allocation13 [shape = 'u8[131072]{0}', space=vmem, size = 0x20000, scoped, tag = 'input window, operand 8']
    #allocation14 [shape = 'u8[524288]{0}', space=vmem, size = 0x80000, scoped, tag = 'input window, operand 12']
    #allocation15 [shape = 'u8[524288]{0}', space=vmem, size = 0x80000, scoped, tag = 'input window, operand 14']
    #allocation16 [shape = 'u8[16384]{0}', space=vmem, size = 0x4000, scoped, tag = 'output window, operand 0, single buffered']
    %23 = vsyncpa [#allocation4], 0
    %24 = vsyncpa [#allocation7], 0
    %25 = vsyncpa [#allocation10], 0
    %26 = vsyncpa [#allocation5], 0
    loop: start=0, step=1, limit=4
    $region2: #{tpu_custom_call.1} parent=1 // loop_pre_header
      _
    $region3: #{tpu_custom_call.1} parent=1 // loop_header
      %s28 = sphi 0, %s32
      %p29 = scmp.ge.s32.totalorder %s28, 4
      %s36 = sphi 0, %s36
      %s38 = sphi 0, %s36
      %s39 = sphi 0, %s38
      %s53 = sphi 0, %s39
      %s57 = sphi 0, %s57
      %s59 = sphi 0, %s57
      %s60 = sphi 0, %s59
      %s74 = sphi 0, %s60
      %s78 = sphi 0, %s78
      %s80 = sphi 0, %s78
      %s81 = sphi 0, %s80
      %s95 = sphi 0, %s81
      %s99 = sphi 0, %s99
      %s101 = sphi 0, %s99
      %s102 = sphi 0, %s101
      %s116 = sphi 0, %s102
      %s122 = sphi 0, %s124
      %s125 = sphi 0, %s122
      %s126 = sphi 0, %s125
      %s142 = sphi 0, %s126
      %s148 = sphi 0, %s150
      %s151 = sphi 0, %s148
      %s152 = sphi 0, %s151
      %s168 = sphi 0, %s152
      %s174 = sphi 0, %s176
      %s177 = sphi 0, %s174
      %s178 = sphi 0, %s177
      %s194 = sphi 0, %s178
      %s200 = sphi 0, %s202
      %s203 = sphi 0, %s200
      %s204 = sphi 0, %s203
      %s220 = sphi 0, %s204
      %s226 = sphi 0, %s228
      %s229 = sphi 0, %s226
      %s230 = sphi 0, %s229
      %s246 = sphi 0, %s230
      %s252 = sphi 0, %s254
      %s255 = sphi 0, %s252
      %s256 = sphi 0, %s255
      %s272 = sphi 0, %s256
      %s278 = sphi 0, %s280
      %s281 = sphi 0, %s278
      %s282 = sphi 0, %s281
      %s298 = sphi 0, %s282
      %s304 = sphi 0, %s306
      %s307 = sphi 0, %s304
      %s308 = sphi 0, %s307
      %s324 = sphi 0, %s308
      %s330 = sphi 0, %s332
      %s333 = sphi 0, %s330
      %s334 = sphi 0, %s333
      %s350 = sphi 0, %s334
      %s356 = sphi 0, %s358
      %s359 = sphi 0, %s356
      %s360 = sphi 0, %s359
      %s376 = sphi 0, %s360
      %s382 = sphi 0, %s384
      %s385 = sphi 0, %s382
      %s386 = sphi 0, %s385
      %s402 = sphi 0, %s386
      %s408 = sphi 0, %s410
      %s411 = sphi 0, %s408
      %s412 = sphi 0, %s411
      %s428 = sphi 0, %s412
      %s432 = sphi 0, %s432
      %s434 = sphi 0, %s432
      %s435 = sphi 0, %s434
      %s449 = sphi 0, %s435
      %s453 = sphi 0, %s453
      %s455 = sphi 0, %s453
      %s456 = sphi 0, %s455
      %s470 = sphi 0, %s456
      %s474 = sphi 0, %s474
      %s476 = sphi 0, %s474
      %s477 = sphi 0, %s476
      %s491 = sphi 0, %s477
    $region4: #{tpu_custom_call.1} parent=1 // loop_header_branch
      %31 = sbr.rel (%p29) target = $region8
    $region5: #{tpu_custom_call.1} parent=1 // loop_body
      %s33 = ssub.s32 %s28, 1
      %s34 = ssub.s32 %s28, 2
      %s35 = sadd.s32 %s28, 1
      %s37 = sadd.s32 %s36, 1
      %p40 = scmp.eq.s32.totalorder %s28, 1
      %p41 = scmp.ne.s32.totalorder %s36, %s38
      %p42 = scmp.eq.s32.totalorder %s28, 0
      %p43 = por %p41, %p42
      %p44 = scmp.ne.s32.totalorder %s36, %s38
      %p45 = scmp.eq.s32.totalorder %s33, 1
      %p46 = por %p44, %p45
      %p47 = scmp.ne.s32.totalorder %s38, %s39
      %p48 = scmp.eq.s32.totalorder %s33, 0
      %p49 = por %p47, %p48
      %p50 = scmp.ne.s32.totalorder %s38, %s39
      %p51 = scmp.eq.s32.totalorder %s34, 1
      %p52 = por %p50, %p51
      %p54 = scmp.ne.s32.totalorder %s39, %s53
      %p55 = scmp.eq.s32.totalorder %s34, 0
      %p56 = por %p54, %p55
      %s58 = sadd.s32 %s57, 1
      %p61 = scmp.eq.s32.totalorder %s28, 1
      %p62 = scmp.ne.s32.totalorder %s57, %s59
      %p63 = scmp.eq.s32.totalorder %s28, 0
      %p64 = por %p62, %p63
      %p65 = scmp.ne.s32.totalorder %s57, %s59
      %p66 = scmp.eq.s32.totalorder %s33, 1
      %p67 = por %p65, %p66
      %p68 = scmp.ne.s32.totalorder %s59, %s60
      %p69 = scmp.eq.s32.totalorder %s33, 0
      %p70 = por %p68, %p69
      %p71 = scmp.ne.s32.totalorder %s59, %s60
      %p72 = scmp.eq.s32.totalorder %s34, 1
      %p73 = por %p71, %p72
      %p75 = scmp.ne.s32.totalorder %s60, %s74
      %p76 = scmp.eq.s32.totalorder %s34, 0
      %p77 = por %p75, %p76
      %s79 = sadd.s32 %s78, 1
      %p82 = scmp.eq.s32.totalorder %s28, 1
      %p83 = scmp.ne.s32.totalorder %s78, %s80
      %p84 = scmp.eq.s32.totalorder %s28, 0
      %p85 = por %p83, %p84
      %p86 = scmp.ne.s32.totalorder %s78, %s80
      %p87 = scmp.eq.s32.totalorder %s33, 1
      %p88 = por %p86, %p87
      %p89 = scmp.ne.s32.totalorder %s80, %s81
      %p90 = scmp.eq.s32.totalorder %s33, 0
      %p91 = por %p89, %p90
      %p92 = scmp.ne.s32.totalorder %s80, %s81
      %p93 = scmp.eq.s32.totalorder %s34, 1
      %p94 = por %p92, %p93
      %p96 = scmp.ne.s32.totalorder %s81, %s95
      %p97 = scmp.eq.s32.totalorder %s34, 0
      %p98 = por %p96, %p97
      %s100 = sadd.s32 %s99, 1
      %p103 = scmp.eq.s32.totalorder %s28, 1
      %p104 = scmp.ne.s32.totalorder %s99, %s101
      %p105 = scmp.eq.s32.totalorder %s28, 0
      %p106 = por %p104, %p105
      %p107 = scmp.ne.s32.totalorder %s99, %s101
      %p108 = scmp.eq.s32.totalorder %s33, 1
      %p109 = por %p107, %p108
      %p110 = scmp.ne.s32.totalorder %s101, %s102
      %p111 = scmp.eq.s32.totalorder %s33, 0
      %p112 = por %p110, %p111
      %p113 = scmp.ne.s32.totalorder %s101, %s102
      %p114 = scmp.eq.s32.totalorder %s34, 1
      %p115 = por %p113, %p114
      %p117 = scmp.ne.s32.totalorder %s102, %s116
      %p118 = scmp.eq.s32.totalorder %s34, 0
      %p119 = por %p117, %p118
      %s120 = ssub.s32 %s28, %s35
      %p121 = scmp.eq.s32.totalorder %s120, 0
      %s123 = sadd.s32 %s122, 1
      %s124 = scalar_select %p121, %s122, %s123
      %p127 = pneg %p121
      %p128 = scmp.eq.s32.totalorder %s28, 1
      %p129 = por %p127, %p128
      %p130 = scmp.ne.s32.totalorder %s122, %s125
      %p131 = scmp.eq.s32.totalorder %s28, 0
      %p132 = por %p130, %p131
      %p133 = scmp.ne.s32.totalorder %s122, %s125
      %p134 = scmp.eq.s32.totalorder %s33, 1
      %p135 = por %p133, %p134
      %p136 = scmp.ne.s32.totalorder %s125, %s126
      %p137 = scmp.eq.s32.totalorder %s33, 0
      %p138 = por %p136, %p137
      %p139 = scmp.ne.s32.totalorder %s125, %s126
      %p140 = scmp.eq.s32.totalorder %s34, 1
      %p141 = por %p139, %p140
      %p143 = scmp.ne.s32.totalorder %s126, %s142
      %p144 = scmp.eq.s32.totalorder %s34, 0
      %p145 = por %p143, %p144
      %s146 = ssub.s32 %s28, %s35
      %p147 = scmp.eq.s32.totalorder %s146, 0
      %s149 = sadd.s32 %s148, 1
      %s150 = scalar_select %p147, %s148, %s149
      %p153 = pneg %p147
      %p154 = scmp.eq.s32.totalorder %s28, 1
      %p155 = por %p153, %p154
      %p156 = scmp.ne.s32.totalorder %s148, %s151
      %p157 = scmp.eq.s32.totalorder %s28, 0
      %p158 = por %p156, %p157
      %p159 = scmp.ne.s32.totalorder %s148, %s151
      %p160 = scmp.eq.s32.totalorder %s33, 1
      %p161 = por %p159, %p160
      %p162 = scmp.ne.s32.totalorder %s151, %s152
      %p163 = scmp.eq.s32.totalorder %s33, 0
      %p164 = por %p162, %p163
      %p165 = scmp.ne.s32.totalorder %s151, %s152
      %p166 = scmp.eq.s32.totalorder %s34, 1
      %p167 = por %p165, %p166
      %p169 = scmp.ne.s32.totalorder %s152, %s168
      %p170 = scmp.eq.s32.totalorder %s34, 0
      %p171 = por %p169, %p170
      %s172 = ssub.s32 %s28, %s35
      %p173 = scmp.eq.s32.totalorder %s172, 0
      %s175 = sadd.s32 %s174, 1
      %s176 = scalar_select %p173, %s174, %s175
      %p179 = pneg %p173
      %p180 = scmp.eq.s32.totalorder %s28, 1
      %p181 = por %p179, %p180
      %p182 = scmp.ne.s32.totalorder %s174, %s177
      %p183 = scmp.eq.s32.totalorder %s28, 0
      %p184 = por %p182, %p183
      %p185 = scmp.ne.s32.totalorder %s174, %s177
      %p186 = scmp.eq.s32.totalorder %s33, 1
      %p187 = por %p185, %p186
      %p188 = scmp.ne.s32.totalorder %s177, %s178
      %p189 = scmp.eq.s32.totalorder %s33, 0
      %p190 = por %p188, %p189
      %p191 = scmp.ne.s32.totalorder %s177, %s178
      %p192 = scmp.eq.s32.totalorder %s34, 1
      %p193 = por %p191, %p192
      %p195 = scmp.ne.s32.totalorder %s178, %s194
      %p196 = scmp.eq.s32.totalorder %s34, 0
      %p197 = por %p195, %p196
      %s198 = ssub.s32 %s28, %s35
      %p199 = scmp.eq.s32.totalorder %s198, 0
      %s201 = sadd.s32 %s200, 1
      %s202 = scalar_select %p199, %s200, %s201
      %p205 = pneg %p199
      %p206 = scmp.eq.s32.totalorder %s28, 1
      %p207 = por %p205, %p206
      %p208 = scmp.ne.s32.totalorder %s200, %s203
      %p209 = scmp.eq.s32.totalorder %s28, 0
      %p210 = por %p208, %p209
      %p211 = scmp.ne.s32.totalorder %s200, %s203
      %p212 = scmp.eq.s32.totalorder %s33, 1
      %p213 = por %p211, %p212
      %p214 = scmp.ne.s32.totalorder %s203, %s204
      %p215 = scmp.eq.s32.totalorder %s33, 0
      %p216 = por %p214, %p215
      %p217 = scmp.ne.s32.totalorder %s203, %s204
      %p218 = scmp.eq.s32.totalorder %s34, 1
      %p219 = por %p217, %p218
      %p221 = scmp.ne.s32.totalorder %s204, %s220
      %p222 = scmp.eq.s32.totalorder %s34, 0
      %p223 = por %p221, %p222
      %s224 = ssub.s32 %s28, %s35
      %p225 = scmp.eq.s32.totalorder %s224, 0
      %s227 = sadd.s32 %s226, 1
      %s228 = scalar_select %p225, %s226, %s227
      %p231 = pneg %p225
      %p232 = scmp.eq.s32.totalorder %s28, 1
      %p233 = por %p231, %p232
      %p234 = scmp.ne.s32.totalorder %s226, %s229
      %p235 = scmp.eq.s32.totalorder %s28, 0
      %p236 = por %p234, %p235
      %p237 = scmp.ne.s32.totalorder %s226, %s229
      %p238 = scmp.eq.s32.totalorder %s33, 1
      %p239 = por %p237, %p238
      %p240 = scmp.ne.s32.totalorder %s229, %s230
      %p241 = scmp.eq.s32.totalorder %s33, 0
      %p242 = por %p240, %p241
      %p243 = scmp.ne.s32.totalorder %s229, %s230
      %p244 = scmp.eq.s32.totalorder %s34, 1
      %p245 = por %p243, %p244
      %p247 = scmp.ne.s32.totalorder %s230, %s246
      %p248 = scmp.eq.s32.totalorder %s34, 0
      %p249 = por %p247, %p248
      %s250 = ssub.s32 %s28, %s35
      %p251 = scmp.eq.s32.totalorder %s250, 0
      %s253 = sadd.s32 %s252, 1
      %s254 = scalar_select %p251, %s252, %s253
      %p257 = pneg %p251
      %p258 = scmp.eq.s32.totalorder %s28, 1
      %p259 = por %p257, %p258
      %p260 = scmp.ne.s32.totalorder %s252, %s255
      %p261 = scmp.eq.s32.totalorder %s28, 0
      %p262 = por %p260, %p261
      %p263 = scmp.ne.s32.totalorder %s252, %s255
      %p264 = scmp.eq.s32.totalorder %s33, 1
      %p265 = por %p263, %p264
      %p266 = scmp.ne.s32.totalorder %s255, %s256
      %p267 = scmp.eq.s32.totalorder %s33, 0
      %p268 = por %p266, %p267
      %p269 = scmp.ne.s32.totalorder %s255, %s256
      %p270 = scmp.eq.s32.totalorder %s34, 1
      %p271 = por %p269, %p270
      %p273 = scmp.ne.s32.totalorder %s256, %s272
      %p274 = scmp.eq.s32.totalorder %s34, 0
      %p275 = por %p273, %p274
      %s276 = ssub.s32 %s28, %s35
      %p277 = scmp.eq.s32.totalorder %s276, 0
      %s279 = sadd.s32 %s278, 1
      %s280 = scalar_select %p277, %s278, %s279
      %p283 = pneg %p277
      %p284 = scmp.eq.s32.totalorder %s28, 1
      %p285 = por %p283, %p284
      %p286 = scmp.ne.s32.totalorder %s278, %s281
      %p287 = scmp.eq.s32.totalorder %s28, 0
      %p288 = por %p286, %p287
      %p289 = scmp.ne.s32.totalorder %s278, %s281
      %p290 = scmp.eq.s32.totalorder %s33, 1
      %p291 = por %p289, %p290
      %p292 = scmp.ne.s32.totalorder %s281, %s282
      %p293 = scmp.eq.s32.totalorder %s33, 0
      %p294 = por %p292, %p293
      %p295 = scmp.ne.s32.totalorder %s281, %s282
      %p296 = scmp.eq.s32.totalorder %s34, 1
      %p297 = por %p295, %p296
      %p299 = scmp.ne.s32.totalorder %s282, %s298
      %p300 = scmp.eq.s32.totalorder %s34, 0
      %p301 = por %p299, %p300
      %s302 = ssub.s32 %s28, %s35
      %p303 = scmp.eq.s32.totalorder %s302, 0
      %s305 = sadd.s32 %s304, 1
      %s306 = scalar_select %p303, %s304, %s305
      %p309 = pneg %p303
      %p310 = scmp.eq.s32.totalorder %s28, 1
      %p311 = por %p309, %p310
      %p312 = scmp.ne.s32.totalorder %s304, %s307
      %p313 = scmp.eq.s32.totalorder %s28, 0
      %p314 = por %p312, %p313
      %p315 = scmp.ne.s32.totalorder %s304, %s307
      %p316 = scmp.eq.s32.totalorder %s33, 1
      %p317 = por %p315, %p316
      %p318 = scmp.ne.s32.totalorder %s307, %s308
      %p319 = scmp.eq.s32.totalorder %s33, 0
      %p320 = por %p318, %p319
      %p321 = scmp.ne.s32.totalorder %s307, %s308
      %p322 = scmp.eq.s32.totalorder %s34, 1
      %p323 = por %p321, %p322
      %p325 = scmp.ne.s32.totalorder %s308, %s324
      %p326 = scmp.eq.s32.totalorder %s34, 0
      %p327 = por %p325, %p326
      %s328 = ssub.s32 %s28, %s35
      %p329 = scmp.eq.s32.totalorder %s328, 0
      %s331 = sadd.s32 %s330, 1
      %s332 = scalar_select %p329, %s330, %s331
      %p335 = pneg %p329
      %p336 = scmp.eq.s32.totalorder %s28, 1
      %p337 = por %p335, %p336
      %p338 = scmp.ne.s32.totalorder %s330, %s333
      %p339 = scmp.eq.s32.totalorder %s28, 0
      %p340 = por %p338, %p339
      %p341 = scmp.ne.s32.totalorder %s330, %s333
      %p342 = scmp.eq.s32.totalorder %s33, 1
      %p343 = por %p341, %p342
      %p344 = scmp.ne.s32.totalorder %s333, %s334
      %p345 = scmp.eq.s32.totalorder %s33, 0
      %p346 = por %p344, %p345
      %p347 = scmp.ne.s32.totalorder %s333, %s334
      %p348 = scmp.eq.s32.totalorder %s34, 1
      %p349 = por %p347, %p348
      %p351 = scmp.ne.s32.totalorder %s334, %s350
      %p352 = scmp.eq.s32.totalorder %s34, 0
      %p353 = por %p351, %p352
      %s354 = ssub.s32 %s28, %s35
      %p355 = scmp.eq.s32.totalorder %s354, 0
      %s357 = sadd.s32 %s356, 1
      %s358 = scalar_select %p355, %s356, %s357
      %p361 = pneg %p355
      %p362 = scmp.eq.s32.totalorder %s28, 1
      %p363 = por %p361, %p362
      %p364 = scmp.ne.s32.totalorder %s356, %s359
      %p365 = scmp.eq.s32.totalorder %s28, 0
      %p366 = por %p364, %p365
      %p367 = scmp.ne.s32.totalorder %s356, %s359
      %p368 = scmp.eq.s32.totalorder %s33, 1
      %p369 = por %p367, %p368
      %p370 = scmp.ne.s32.totalorder %s359, %s360
      %p371 = scmp.eq.s32.totalorder %s33, 0
      %p372 = por %p370, %p371
      %p373 = scmp.ne.s32.totalorder %s359, %s360
      %p374 = scmp.eq.s32.totalorder %s34, 1
      %p375 = por %p373, %p374
      %p377 = scmp.ne.s32.totalorder %s360, %s376
      %p378 = scmp.eq.s32.totalorder %s34, 0
      %p379 = por %p377, %p378
      %s380 = ssub.s32 %s28, %s35
      %p381 = scmp.eq.s32.totalorder %s380, 0
      %s383 = sadd.s32 %s382, 1
      %s384 = scalar_select %p381, %s382, %s383
      %p387 = pneg %p381
      %p388 = scmp.eq.s32.totalorder %s28, 1
      %p389 = por %p387, %p388
      %p390 = scmp.ne.s32.totalorder %s382, %s385
      %p391 = scmp.eq.s32.totalorder %s28, 0
      %p392 = por %p390, %p391
      %p393 = scmp.ne.s32.totalorder %s382, %s385
      %p394 = scmp.eq.s32.totalorder %s33, 1
      %p395 = por %p393, %p394
      %p396 = scmp.ne.s32.totalorder %s385, %s386
      %p397 = scmp.eq.s32.totalorder %s33, 0
      %p398 = por %p396, %p397
      %p399 = scmp.ne.s32.totalorder %s385, %s386
      %p400 = scmp.eq.s32.totalorder %s34, 1
      %p401 = por %p399, %p400
      %p403 = scmp.ne.s32.totalorder %s386, %s402
      %p404 = scmp.eq.s32.totalorder %s34, 0
      %p405 = por %p403, %p404
      %s406 = ssub.s32 %s28, %s35
      %p407 = scmp.eq.s32.totalorder %s406, 0
      %s409 = sadd.s32 %s408, 1
      %s410 = scalar_select %p407, %s408, %s409
      %p413 = pneg %p407
      %p414 = scmp.eq.s32.totalorder %s28, 1
      %p415 = por %p413, %p414
      %p416 = scmp.ne.s32.totalorder %s408, %s411
      %p417 = scmp.eq.s32.totalorder %s28, 0
      %p418 = por %p416, %p417
      %p419 = scmp.ne.s32.totalorder %s408, %s411
      %p420 = scmp.eq.s32.totalorder %s33, 1
      %p421 = por %p419, %p420
      %p422 = scmp.ne.s32.totalorder %s411, %s412
      %p423 = scmp.eq.s32.totalorder %s33, 0
      %p424 = por %p422, %p423
      %p425 = scmp.ne.s32.totalorder %s411, %s412
      %p426 = scmp.eq.s32.totalorder %s34, 1
      %p427 = por %p425, %p426
      %p429 = scmp.ne.s32.totalorder %s412, %s428
      %p430 = scmp.eq.s32.totalorder %s34, 0
      %p431 = por %p429, %p430
      %s433 = sadd.s32 %s432, 1
      %p436 = scmp.eq.s32.totalorder %s28, 1
      %p437 = scmp.ne.s32.totalorder %s432, %s434
      %p438 = scmp.eq.s32.totalorder %s28, 0
      %p439 = por %p437, %p438
      %p440 = scmp.ne.s32.totalorder %s432, %s434
      %p441 = scmp.eq.s32.totalorder %s33, 1
      %p442 = por %p440, %p441
      %p443 = scmp.ne.s32.totalorder %s434, %s435
      %p444 = scmp.eq.s32.totalorder %s33, 0
      %p445 = por %p443, %p444
      %p446 = scmp.ne.s32.totalorder %s434, %s435
      %p447 = scmp.eq.s32.totalorder %s34, 1
      %p448 = por %p446, %p447
      %p450 = scmp.ne.s32.totalorder %s435, %s449
      %p451 = scmp.eq.s32.totalorder %s34, 0
      %p452 = por %p450, %p451
      %s454 = sadd.s32 %s453, 1
      %p457 = scmp.eq.s32.totalorder %s28, 1
      %p458 = scmp.ne.s32.totalorder %s453, %s455
      %p459 = scmp.eq.s32.totalorder %s28, 0
      %p460 = por %p458, %p459
      %p461 = scmp.ne.s32.totalorder %s453, %s455
      %p462 = scmp.eq.s32.totalorder %s33, 1
      %p463 = por %p461, %p462
      %p464 = scmp.ne.s32.totalorder %s455, %s456
      %p465 = scmp.eq.s32.totalorder %s33, 0
      %p466 = por %p464, %p465
      %p467 = scmp.ne.s32.totalorder %s455, %s456
      %p468 = scmp.eq.s32.totalorder %s34, 1
      %p469 = por %p467, %p468
      %p471 = scmp.ne.s32.totalorder %s456, %s470
      %p472 = scmp.eq.s32.totalorder %s34, 0
      %p473 = por %p471, %p472
      %s475 = sadd.s32 %s474, 1
      %p478 = scmp.eq.s32.totalorder %s28, 1
      %p479 = scmp.ne.s32.totalorder %s474, %s476
      %p480 = scmp.eq.s32.totalorder %s28, 0
      %p481 = por %p479, %p480
      %p482 = scmp.ne.s32.totalorder %s474, %s476
      %p483 = scmp.eq.s32.totalorder %s33, 1
      %p484 = por %p482, %p483
      %p485 = scmp.ne.s32.totalorder %s476, %s477
      %p486 = scmp.eq.s32.totalorder %s33, 0
      %p487 = por %p485, %p486
      %p488 = scmp.ne.s32.totalorder %s476, %s477
      %p489 = scmp.eq.s32.totalorder %s34, 1
      %p490 = por %p488, %p489
      %p492 = scmp.ne.s32.totalorder %s477, %s491
      %p493 = scmp.eq.s32.totalorder %s34, 0
      %p494 = por %p492, %p493
      %p495 = scmp.le.s32.totalorder 1, %s28
      %p496 = scmp.lt.s32.totalorder %s28, 3
      %p497 = pnand %p495, %p496
      %p498 = pneg %p497
      // Predicated region
      $region9: #{tpu_custom_call.1} parent=5 // pred_check
        _
      $region10: #{tpu_custom_call.1} parent=5 // pred_check_branch
        %500 = sbr.rel (%p497) target = $region12
      $region11: #{tpu_custom_call.1} parent=5 // pred_region
        %s501 = ssub.s32 %s28, 1
        // Predicated region
        $region13: #{tpu_custom_call.1} parent=11 // pred_check
          %p502 = pneg %p49
        $region14: #{tpu_custom_call.1} parent=11 // pred_check_branch
          %504 = sbr.rel (%p502) target = $region16
        $region15: #{tpu_custom_call.1} parent=11 // pred_region
          %s506 = ssub.s32 1024, 1024
          %507 = vsyncadd [#allocation4], %s506
          %s508 = sshll.u32 [#allocation3], 4
          %s509 = int_to_ptr.vmem [resolvable:$true] %s508
          %514 = dma.hbm_to_vmem [thread:$0]  %s0, 1024, %s509, [#allocation4], 256, 256, 16
        $region16: #{tpu_custom_call.1} parent=11 // pred_fallthru
          _
        // Predicated region
        $region17: #{tpu_custom_call.1} parent=11 // pred_check
          %p515 = pneg %p70
        $region18: #{tpu_custom_call.1} parent=11 // pred_check_branch
          %517 = sbr.rel (%p515) target = $region20
        $region19: #{tpu_custom_call.1} parent=11 // pred_region
          %s519 = ssub.s32 3072, 3072
          %520 = vsyncadd [#allocation7], %s519
          %s521 = sshll.u32 [#allocation6], 4
          %s522 = int_to_ptr.vmem [resolvable:$true] %s521
          %527 = dma.hbm_to_vmem [thread:$0]  %s1, 3072, %s522, [#allocation7], 128, 128, 8
        $region20: #{tpu_custom_call.1} parent=11 // pred_fallthru
          _
        // Predicated region
        $region21: #{tpu_custom_call.1} parent=11 // pred_check
          %p528 = pneg %p91
        $region22: #{tpu_custom_call.1} parent=11 // pred_check_branch
          %530 = sbr.rel (%p528) target = $region24
        $region23: #{tpu_custom_call.1} parent=11 // pred_region
          %s532 = ssub.s32 16, 16
          %533 = vsyncadd [#allocation7], %s532
          %s535 = sshll.u32 [#allocation8], 4
          %s536 = int_to_ptr.vmem [resolvable:$true] %s535
          %538 = dma.hbm_to_vmem [thread:$0]  %s2, 16, %s536, [#allocation7]
        $region24: #{tpu_custom_call.1} parent=11 // pred_fallthru
          _
        // Predicated region
        $region25: #{tpu_custom_call.1} parent=11 // pred_check
          %p539 = pneg %p112
        $region26: #{tpu_custom_call.1} parent=11 // pred_check_branch
          %541 = sbr.rel (%p539) target = $region28
        $region27: #{tpu_custom_call.1} parent=11 // pred_region
          %s543 = ssub.s32 512, 512
          %544 = vsyncadd [#allocation10], %s543
          %s545 = sshll.u32 [#allocation9], 4
          %s546 = int_to_ptr.vmem [resolvable:$true] %s545
          %551 = dma.hbm_to_vmem [thread:$0]  %s3, 512, %s546, [#allocation10], 128, 128, 8
        $region28: #{tpu_custom_call.1} parent=11 // pred_fallthru
          _
        // Predicated region
        $region29: #{tpu_custom_call.1} parent=11 // pred_check
          %p552 = pneg %p445
        $region30: #{tpu_custom_call.1} parent=11 // pred_check_branch
          %554 = sbr.rel (%p552) target = $region32
        $region31: #{tpu_custom_call.1} parent=11 // pred_region
          _
        $region32: #{tpu_custom_call.1} parent=11 // pred_fallthru
          _
        // Predicated region
        $region33: #{tpu_custom_call.1} parent=11 // pred_check
          %p555 = pneg %p466
        $region34: #{tpu_custom_call.1} parent=11 // pred_check_branch
          %557 = sbr.rel (%p555) target = $region36
        $region35: #{tpu_custom_call.1} parent=11 // pred_region
          _
        $region36: #{tpu_custom_call.1} parent=11 // pred_fallthru
          _
      $region12: #{tpu_custom_call.1} parent=5 // pred_fallthru
        _
      %p558 = scmp.lt.s32.totalorder %s28, 2
      // Predicated region
      $region37: #{tpu_custom_call.1} parent=5 // pred_check
        %p559 = pneg %p558
      $region38: #{tpu_custom_call.1} parent=5 // pred_check_branch
        %561 = sbr.rel (%p559) target = $region40
      $region39: #{tpu_custom_call.1} parent=5 // pred_region
        // Predicated region
        $region41: #{tpu_custom_call.1} parent=39 // pred_check
          %p562 = pneg %p132
        $region42: #{tpu_custom_call.1} parent=39 // pred_check_branch
          %564 = sbr.rel (%p562) target = $region44
        $region43: #{tpu_custom_call.1} parent=39 // pred_region
          %s565 = sand.u32 %s28, 1
          %s566 = scalar_lea.sflag [#allocation4], %s565
          %s567 = sand.u32 %s122, 1
          %s568 = scalar_lea.vmem [#allocation11], %s567
          %s570 = ssub.s32 16, 16
          %571 = vsyncadd %s566, %s570
          %s572 = smul.addr %s28, 16
          %s573 = scalar_lea.hbm %s4, %s572
          %s575 = sshll.u32 %s568, 4
          %s576 = int_to_ptr.vmem [resolvable:$true] %s575
          %578 = dma.hbm_to_vmem [thread:$0]  %s573, 16, %s576, %s566
        $region44: #{tpu_custom_call.1} parent=39 // pred_fallthru
          _
        // Predicated region
        $region45: #{tpu_custom_call.1} parent=39 // pred_check
          %p579 = pneg %p158
        $region46: #{tpu_custom_call.1} parent=39 // pred_check_branch
          %581 = sbr.rel (%p579) target = $region48
        $region47: #{tpu_custom_call.1} parent=39 // pred_region
          %p582 = scmp.lt.s32.totalorder %s28, 1
          %s583 = scalar_select %p582, %s28, 1
          %s584 = scalar_lea.vmem %s5, %s583
        $region48: #{tpu_custom_call.1} parent=39 // pred_fallthru
          _
        // Predicated region
        $region49: #{tpu_custom_call.1} parent=39 // pred_check
          %p585 = pneg %p184
        $region50: #{tpu_custom_call.1} parent=39 // pred_check_branch
          %587 = sbr.rel (%p585) target = $region52
        $region51: #{tpu_custom_call.1} parent=39 // pred_region
          %s588 = sand.u32 %s28, 1
          %s589 = scalar_lea.sflag [#allocation4], %s588
          %s590 = sand.u32 %s174, 1
          %s591 = smul.addr %s590, 384
          %s592 = scalar_lea.vmem [#allocation12], %s591
          %s594 = ssub.s32 6144, 6144
          %595 = vsyncadd %s589, %s594
          %s596 = smul.addr %s28, 48
          %s597 = smul.addr %s596, 128
          %s598 = scalar_lea.hbm %s6, %s597
          %s599 = sshll.u32 %s592, 4
          %s600 = int_to_ptr.vmem [resolvable:$true] %s599
          %605 = dma.hbm_to_vmem [thread:$0]  %s598, 6144, %s600, %s589, 384, 384, 24
        $region52: #{tpu_custom_call.1} parent=39 // pred_fallthru
          _
        // Predicated region
        $region53: #{tpu_custom_call.1} parent=39 // pred_check
          %p606 = pneg %p210
        $region54: #{tpu_custom_call.1} parent=39 // pred_check_branch
          %608 = sbr.rel (%p606) target = $region56
        $region55: #{tpu_custom_call.1} parent=39 // pred_region
          %p609 = scmp.lt.s32.totalorder %s28, 1
          %s610 = scalar_select %p609, %s28, 1
          %s611 = smul.addr %s610, 3
          %s612 = scalar_lea.vmem %s7, %s611
        $region56: #{tpu_custom_call.1} parent=39 // pred_fallthru
          _
        // Predicated region
        $region57: #{tpu_custom_call.1} parent=39 // pred_check
          %p613 = pneg %p236
        $region58: #{tpu_custom_call.1} parent=39 // pred_check_branch
          %615 = sbr.rel (%p613) target = $region60
        $region59: #{tpu_custom_call.1} parent=39 // pred_region
          %s616 = sand.u32 %s28, 1
          %s617 = scalar_lea.sflag [#allocation4], %s616
          %s618 = sand.u32 %s226, 1
          %s619 = smul.addr %s618, 128
          %s620 = scalar_lea.vmem [#allocation13], %s619
          %s622 = ssub.s32 2048, 2048
          %623 = vsyncadd %s617, %s622
          %s624 = smul.addr %s28, 16
          %s625 = smul.addr %s624, 128
          %s626 = scalar_lea.hbm %s8, %s625
          %s627 = sshll.u32 %s620, 4
          %s628 = int_to_ptr.vmem [resolvable:$true] %s627
          %633 = dma.hbm_to_vmem [thread:$0]  %s626, 2048, %s628, %s617, 128, 128, 8
        $region60: #{tpu_custom_call.1} parent=39 // pred_fallthru
          _
        // Predicated region
        $region61: #{tpu_custom_call.1} parent=39 // pred_check
          %p634 = pneg %p262
        $region62: #{tpu_custom_call.1} parent=39 // pred_check_branch
          %636 = sbr.rel (%p634) target = $region64
        $region63: #{tpu_custom_call.1} parent=39 // pred_region
          %p637 = scmp.lt.s32.totalorder %s28, 1
          %s638 = scalar_select %p637, %s28, 1
          %s639 = scalar_lea.vmem %s9, %s638
        $region64: #{tpu_custom_call.1} parent=39 // pred_fallthru
          _
        // Predicated region
        $region65: #{tpu_custom_call.1} parent=39 // pred_check
          %p640 = pneg %p288
        $region66: #{tpu_custom_call.1} parent=39 // pred_check_branch
          %642 = sbr.rel (%p640) target = $region68
        $region67: #{tpu_custom_call.1} parent=39 // pred_region
          %p643 = scmp.lt.s32.totalorder %s28, 1
          %s644 = scalar_select %p643, %s28, 1
          %s645 = scalar_lea.vmem %s10, %s644
        $region68: #{tpu_custom_call.1} parent=39 // pred_fallthru
          _
        // Predicated region
        $region69: #{tpu_custom_call.1} parent=39 // pred_check
          %p646 = pneg %p314
        $region70: #{tpu_custom_call.1} parent=39 // pred_check_branch
          %648 = sbr.rel (%p646) target = $region72
        $region71: #{tpu_custom_call.1} parent=39 // pred_region
          %p649 = scmp.lt.s32.totalorder %s28, 1
          %s650 = scalar_select %p649, %s28, 1
          %s651 = scalar_lea.vmem %s11, %s650
        $region72: #{tpu_custom_call.1} parent=39 // pred_fallthru
          _
        // Predicated region
        $region73: #{tpu_custom_call.1} parent=39 // pred_check
          %p652 = pneg %p340
        $region74: #{tpu_custom_call.1} parent=39 // pred_check_branch
          %654 = sbr.rel (%p652) target = $region76
        $region75: #{tpu_custom_call.1} parent=39 // pred_region
          %s655 = sand.u32 %s28, 1
          %s656 = scalar_lea.sflag [#allocation4], %s655
          %s657 = sand.u32 %s330, 1
          %s658 = smul.addr %s657, 512
          %s659 = scalar_lea.vmem [#allocation14], %s658
          %s661 = ssub.s32 8192, 8192
          %662 = vsyncadd %s656, %s661
          %s663 = smul.addr %s28, 64
          %s664 = smul.addr %s663, 128
          %s665 = scalar_lea.hbm %s12, %s664
          %s666 = sshll.u32 %s659, 4
          %s667 = int_to_ptr.vmem [resolvable:$true] %s666
          %672 = dma.hbm_to_vmem [thread:$0]  %s665, 8192, %s667, %s656, 512, 512, 32
        $region76: #{tpu_custom_call.1} parent=39 // pred_fallthru
          _
        // Predicated region
        $region77: #{tpu_custom_call.1} parent=39 // pred_check
          %p673 = pneg %p366
        $region78: #{tpu_custom_call.1} parent=39 // pred_check_branch
          %675 = sbr.rel (%p673) target = $region80
        $region79: #{tpu_custom_call.1} parent=39 // pred_region
          %p676 = scmp.lt.s32.totalorder %s28, 1
          %s677 = scalar_select %p676, %s28, 1
          %s678 = smul.addr %s677, 4
          %s679 = scalar_lea.vmem %s13, %s678
        $region80: #{tpu_custom_call.1} parent=39 // pred_fallthru
          _
        // Predicated region
        $region81: #{tpu_custom_call.1} parent=39 // pred_check
          %p680 = pneg %p392
        $region82: #{tpu_custom_call.1} parent=39 // pred_check_branch
          %682 = sbr.rel (%p680) target = $region84
        $region83: #{tpu_custom_call.1} parent=39 // pred_region
          %s683 = sand.u32 %s28, 1
          %s684 = scalar_lea.sflag [#allocation4], %s683
          %s685 = sand.u32 %s382, 1
          %s686 = smul.addr %s685, 512
          %s687 = scalar_lea.vmem [#allocation15], %s686
          %s689 = ssub.s32 8192, 8192
          %690 = vsyncadd %s684, %s689
          %s691 = smul.addr %s28, 64
          %s692 = smul.addr %s691, 128
          %s693 = scalar_lea.hbm %s14, %s692
          %s694 = sshll.u32 %s687, 4
          %s695 = int_to_ptr.vmem [resolvable:$true] %s694
          %700 = dma.hbm_to_vmem [thread:$0]  %s693, 8192, %s695, %s684, 128, 128, 8
        $region84: #{tpu_custom_call.1} parent=39 // pred_fallthru
          _
        // Predicated region
        $region85: #{tpu_custom_call.1} parent=39 // pred_check
          %p701 = pneg %p418
        $region86: #{tpu_custom_call.1} parent=39 // pred_check_branch
          %703 = sbr.rel (%p701) target = $region88
        $region87: #{tpu_custom_call.1} parent=39 // pred_region
          %p704 = scmp.lt.s32.totalorder %s28, 1
          %s705 = scalar_select %p704, %s28, 1
          %s706 = scalar_lea.vmem %s15, %s705
        $region88: #{tpu_custom_call.1} parent=39 // pred_fallthru
          _
      $region40: #{tpu_custom_call.1} parent=5 // pred_fallthru
        _
      %p707 = scmp.le.s32.totalorder 1, %s28
      %p708 = scmp.lt.s32.totalorder %s28, 3
      %p709 = pnand %p707, %p708
      %p710 = pneg %p709
      // Predicated region
      $region89: #{tpu_custom_call.1} parent=5 // pred_check
        _
      $region90: #{tpu_custom_call.1} parent=5 // pred_check_branch
        %712 = sbr.rel (%p709) target = $region92
      $region91: #{tpu_custom_call.1} parent=5 // pred_region
        %s713 = ssub.s32 %s28, 1
        // Predicated region
        $region93: #{tpu_custom_call.1} parent=91 // pred_check
          %p714 = pneg %p49
        $region94: #{tpu_custom_call.1} parent=91 // pred_check_branch
          %716 = sbr.rel (%p714) target = $region96
        $region95: #{tpu_custom_call.1} parent=91 // pred_region
          %717 = dma.done [#allocation4], 1024
        $region96: #{tpu_custom_call.1} parent=91 // pred_fallthru
          _
        // Predicated region
        $region97: #{tpu_custom_call.1} parent=91 // pred_check
          %p718 = pneg %p70
        $region98: #{tpu_custom_call.1} parent=91 // pred_check_branch
          %720 = sbr.rel (%p718) target = $region100
        $region99: #{tpu_custom_call.1} parent=91 // pred_region
          %721 = dma.done [#allocation7], 3072
        $region100: #{tpu_custom_call.1} parent=91 // pred_fallthru
          _
        // Predicated region
        $region101: #{tpu_custom_call.1} parent=91 // pred_check
          %p722 = pneg %p91
        $region102: #{tpu_custom_call.1} parent=91 // pred_check_branch
          %724 = sbr.rel (%p722) target = $region104
        $region103: #{tpu_custom_call.1} parent=91 // pred_region
          %725 = dma.done [#allocation7], 16
        $region104: #{tpu_custom_call.1} parent=91 // pred_fallthru
          _
        // Predicated region
        $region105: #{tpu_custom_call.1} parent=91 // pred_check
          %p726 = pneg %p112
        $region106: #{tpu_custom_call.1} parent=91 // pred_check_branch
          %728 = sbr.rel (%p726) target = $region108
        $region107: #{tpu_custom_call.1} parent=91 // pred_region
          %729 = dma.done [#allocation10], 512
        $region108: #{tpu_custom_call.1} parent=91 // pred_fallthru
          _
        %s730 = sand.u32 %s33, 1
        %s731 = scalar_lea.sflag [#allocation4], %s730
        %s732 = sand.u32 %s125, 1
        %s733 = scalar_lea.vmem [#allocation11], %s732
        // Predicated region
        $region109: #{tpu_custom_call.1} parent=91 // pred_check
          %p734 = pneg %p138
        $region110: #{tpu_custom_call.1} parent=91 // pred_check_branch
          %736 = sbr.rel (%p734) target = $region112
        $region111: #{tpu_custom_call.1} parent=91 // pred_region
          %737 = dma.done %s731, 16
        $region112: #{tpu_custom_call.1} parent=91 // pred_fallthru
          _
        %s738 = sand.u32 %s33, 1
        %s739 = scalar_lea.sflag [#allocation4], %s738
        %s740 = sand.u32 %s177, 1
        %s741 = smul.addr %s740, 384
        %s742 = scalar_lea.vmem [#allocation12], %s741
        // Predicated region
        $region113: #{tpu_custom_call.1} parent=91 // pred_check
          %p743 = pneg %p190
        $region114: #{tpu_custom_call.1} parent=91 // pred_check_branch
          %745 = sbr.rel (%p743) target = $region116
        $region115: #{tpu_custom_call.1} parent=91 // pred_region
          %746 = dma.done %s739, 6144
        $region116: #{tpu_custom_call.1} parent=91 // pred_fallthru
          _
        %s747 = sand.u32 %s33, 1
        %s748 = scalar_lea.sflag [#allocation4], %s747
        %s749 = sand.u32 %s229, 1
        %s750 = smul.addr %s749, 128
        %s751 = scalar_lea.vmem [#allocation13], %s750
        // Predicated region
        $region117: #{tpu_custom_call.1} parent=91 // pred_check
          %p752 = pneg %p242
        $region118: #{tpu_custom_call.1} parent=91 // pred_check_branch
          %754 = sbr.rel (%p752) target = $region120
        $region119: #{tpu_custom_call.1} parent=91 // pred_region
          %755 = dma.done %s748, 2048
        $region120: #{tpu_custom_call.1} parent=91 // pred_fallthru
          _
        %s756 = sand.u32 %s33, 1
        %s757 = scalar_lea.sflag [#allocation4], %s756
        %s758 = sand.u32 %s333, 1
        %s759 = smul.addr %s758, 512
        %s760 = scalar_lea.vmem [#allocation14], %s759
        // Predicated region
        $region121: #{tpu_custom_call.1} parent=91 // pred_check
          %p761 = pneg %p346
        $region122: #{tpu_custom_call.1} parent=91 // pred_check_branch
          %763 = sbr.rel (%p761) target = $region124
        $region123: #{tpu_custom_call.1} parent=91 // pred_region
          %764 = dma.done %s757, 8192
        $region124: #{tpu_custom_call.1} parent=91 // pred_fallthru
          _
        %s765 = sand.u32 %s33, 1
        %s766 = scalar_lea.sflag [#allocation4], %s765
        %s767 = sand.u32 %s385, 1
        %s768 = smul.addr %s767, 512
        %s769 = scalar_lea.vmem [#allocation15], %s768
        // Predicated region
        $region125: #{tpu_custom_call.1} parent=91 // pred_check
          %p770 = pneg %p398
        $region126: #{tpu_custom_call.1} parent=91 // pred_check_branch
          %772 = sbr.rel (%p770) target = $region128
        $region127: #{tpu_custom_call.1} parent=91 // pred_region
          %773 = dma.done %s766, 8192
        $region128: #{tpu_custom_call.1} parent=91 // pred_fallthru
          _
        %p774 = pneg %p49
        %p775 = pneg %p46
        %p776 = pneg %p70
        %p777 = pneg %p67
        %p778 = pneg %p91
        %p779 = pneg %p88
        %p780 = pneg %p112
        %p781 = pneg %p109
        %s782 = sand.u32 %s33, 1
        %s783 = scalar_lea.sflag [#allocation4], %s782
        %s784 = sand.u32 %s125, 1
        %s785 = scalar_lea.vmem [#allocation11], %s784
        %p786 = pneg %p138
        %p787 = pneg %p135
        %p788 = scmp.lt.s32.totalorder %s33, 1
        %s789 = scalar_select %p788, %s33, 1
        %s790 = scalar_lea.vmem %s5, %s789
        %p791 = pneg %p164
        %p792 = pneg %p161
        %s793 = sand.u32 %s33, 1
        %s794 = scalar_lea.sflag [#allocation4], %s793
        %s795 = sand.u32 %s177, 1
        %s796 = smul.addr %s795, 384
        %s797 = scalar_lea.vmem [#allocation12], %s796
        %p798 = pneg %p190
        %p799 = pneg %p187
        %p800 = scmp.lt.s32.totalorder %s33, 1
        %s801 = scalar_select %p800, %s33, 1
        %s802 = smul.addr %s801, 3
        %s803 = scalar_lea.vmem %s7, %s802
        %p804 = pneg %p216
        %p805 = pneg %p213
        %s806 = sand.u32 %s33, 1
        %s807 = scalar_lea.sflag [#allocation4], %s806
        %s808 = sand.u32 %s229, 1
        %s809 = smul.addr %s808, 128
        %s810 = scalar_lea.vmem [#allocation13], %s809
        %p811 = pneg %p242
        %p812 = pneg %p239
        %p813 = scmp.lt.s32.totalorder %s33, 1
        %s814 = scalar_select %p813, %s33, 1
        %s815 = scalar_lea.vmem %s9, %s814
        %p816 = pneg %p268
        %p817 = pneg %p265
        %p818 = scmp.lt.s32.totalorder %s33, 1
        %s819 = scalar_select %p818, %s33, 1
        %s820 = scalar_lea.vmem %s10, %s819
        %p821 = pneg %p294
        %p822 = pneg %p291
        %p823 = scmp.lt.s32.totalorder %s33, 1
        %s824 = scalar_select %p823, %s33, 1
        %s825 = scalar_lea.vmem %s11, %s824
        %p826 = pneg %p320
        %p827 = pneg %p317
        %s828 = sand.u32 %s33, 1
        %s829 = scalar_lea.sflag [#allocation4], %s828
        %s830 = sand.u32 %s333, 1
        %s831 = smul.addr %s830, 512
        %s832 = scalar_lea.vmem [#allocation14], %s831
        %p833 = pneg %p346
        %p834 = pneg %p343
        %p835 = scmp.lt.s32.totalorder %s33, 1
        %s836 = scalar_select %p835, %s33, 1
        %s837 = smul.addr %s836, 4
        %s838 = scalar_lea.vmem %s13, %s837
        %p839 = pneg %p372
        %p840 = pneg %p369
        %s841 = sand.u32 %s33, 1
        %s842 = scalar_lea.sflag [#allocation4], %s841
        %s843 = sand.u32 %s385, 1
        %s844 = smul.addr %s843, 512
        %s845 = scalar_lea.vmem [#allocation15], %s844
        %p846 = pneg %p398
        %p847 = pneg %p395
        %p848 = scmp.lt.s32.totalorder %s33, 1
        %s849 = scalar_select %p848, %s33, 1
        %s850 = scalar_lea.vmem %s15, %s849
        %p851 = pneg %p424
        %p852 = pneg %p421
        %p853 = pneg %p445
        %p854 = pneg %p442
        %p855 = pneg %p466
        %p856 = pneg %p463
        %p857 = pneg %p487
        %p858 = pneg %p484
        %p859 = scmp.lt.s32.totalorder %s33, 1
        %s860 = scalar_select %p859, %s33, 1
        %s861 = scalar_lea.vmem %s5, %s860
        %p862 = scmp.lt.s32.totalorder %s33, 1
        %s863 = scalar_select %p862, %s33, 1
        %s864 = smul.addr %s863, 3
        %s865 = scalar_lea.vmem %s7, %s864
        %p866 = scmp.lt.s32.totalorder %s33, 1
        %s867 = scalar_select %p866, %s33, 1
        %s868 = scalar_lea.vmem %s9, %s867
        %p869 = scmp.lt.s32.totalorder %s33, 1
        %s870 = scalar_select %p869, %s33, 1
        %s871 = scalar_lea.vmem %s10, %s870
        %p872 = scmp.lt.s32.totalorder %s33, 1
        %s873 = scalar_select %p872, %s33, 1
        %s874 = scalar_lea.vmem %s11, %s873
        %p875 = scmp.lt.s32.totalorder %s33, 1
        %s876 = scalar_select %p875, %s33, 1
        %s877 = smul.addr %s876, 4
        %s878 = scalar_lea.vmem %s13, %s877
        %p879 = scmp.lt.s32.totalorder %s33, 1
        %s880 = scalar_select %p879, %s33, 1
        %s881 = scalar_lea.vmem %s15, %s880
        %p882 = scmp.eq.s32.totalorder %s33, 0
        // Predicated region
        $region129: #{tpu_custom_call.1} parent=91 // pred_check
          %p883 = pneg %p882
        $region130: #{tpu_custom_call.1} parent=91 // pred_check_branch
          %885 = sbr.rel (%p883) target = $region132
        $region131: #{tpu_custom_call.1} parent=91 // pred_region
          %v886 = vld [vmem:[#allocation3] sm:$0xff]
          %v887 = vld [vmem:[#allocation3 + $0x8] sm:$0xff]
          %v888 = vld [vmem:[#allocation3 + $0x10] sm:$0xff]
          %v889 = vld [vmem:[#allocation3 + $0x18] sm:$0xff]
          %v890 = vld [vmem:[#allocation3 + $0x20] sm:$0xff]
          %v891 = vld [vmem:[#allocation3 + $0x28] sm:$0xff]
          %v892 = vld [vmem:[#allocation3 + $0x30] sm:$0xff]
          %v893 = vld [vmem:[#allocation3 + $0x38] sm:$0xff]
          %v894 = vld [vmem:[#allocation6] sm:$0xff]
          %v895 = vld [vmem:[#allocation6 + $0x8] sm:$0xff]
          %v896 = vld [vmem:[#allocation6 + $0x10] sm:$0xff]
          %v897 = vld [vmem:[#allocation6 + $0x18] sm:$0xff]
          %v898 = vld [vmem:[#allocation6 + $0x20] sm:$0xff]
          %v899 = vld [vmem:[#allocation6 + $0x28] sm:$0xff]
          %v900 = vld [vmem:[#allocation6 + $0x30] sm:$0xff]
          %v901 = vld [vmem:[#allocation6 + $0x38] sm:$0xff]
          %v902 = vld [vmem:[#allocation6 + $0x40] sm:$0xff]
          %v903 = vld [vmem:[#allocation6 + $0x48] sm:$0xff]
          %v904 = vld [vmem:[#allocation6 + $0x50] sm:$0xff]
          %v905 = vld [vmem:[#allocation6 + $0x58] sm:$0xff]
          %v906 = vld [vmem:[#allocation6 + $0x60] sm:$0xff]
          %v907 = vld [vmem:[#allocation6 + $0x68] sm:$0xff]
          %v908 = vld [vmem:[#allocation6 + $0x70] sm:$0xff]
          %v909 = vld [vmem:[#allocation6 + $0x78] sm:$0xff]
          %v910 = vld [vmem:[#allocation6 + $0x80] sm:$0xff]
          %v911 = vld [vmem:[#allocation6 + $0x88] sm:$0xff]
          %v912 = vld [vmem:[#allocation6 + $0x90] sm:$0xff]
          %v913 = vld [vmem:[#allocation6 + $0x98] sm:$0xff]
          %v914 = vld [vmem:[#allocation6 + $0xa0] sm:$0xff]
          %v915 = vld [vmem:[#allocation6 + $0xa8] sm:$0xff]
          %v916 = vld [vmem:[#allocation6 + $0xb0] sm:$0xff]
          %v917 = vld [vmem:[#allocation6 + $0xb8] sm:$0xff]
          %v918 = vld [vmem:[#allocation8] sm:$0x1]
          %v920 = vlaneseq
          %v921 = vshrl.u32 %v920, 7
          %v922 = vsub.s32 0, %v921
          %v923 = vrot.slane %v918, %v922
          %vm925 = vcmask 523264
          %v927 = vsel %vm925, %v887, 0
          %v930 = vsel %vm925, %v889, 0
          %v933 = vsel %vm925, %v891, 0
          %v936 = vsel %vm925, %v893, 0
          %938 = vmatprep.subr.mxu0 0.0
          %939 = vmatpush1.msra.mxu0 %v894
          %940 = vmatprep.subr.mxu0 0.0
          %941 = vmatpush1.msra.mxu0 %v895
          %942 = vmatprep.subr.mxu0 0.0
          %943 = vmatpush1.msra.mxu0 %v896
          %944 = vmatprep.subr.mxu0 0.0
          %945 = vmatpush1.msra.mxu0 %v897
          %946 = vmatprep.subr.mxu0 0.0
          %947 = vmatpush1.msra.mxu0 %v898
          %948 = vmatprep.subr.mxu0 0.0
          %949 = vmatpush1.msra.mxu0 %v899
          %950 = vmatprep.subr.mxu0 0.0
          %951 = vmatpush1.msra.mxu0 %v900
          %952 = vmatprep.subr.mxu0 0.0
          %953 = vmatpush1.msra.mxu0 %v901
          %954 = vmatprep.subr.mxu0 0.0
          %955 = vmatpush1.msra.mxu0 %v902
          %956 = vmatprep.subr.mxu0 0.0
          %957 = vmatpush1.msra.mxu0 %v903
          %958 = vmatprep.subr.mxu0 0.0
          %959 = vmatpush1.msra.mxu0 %v904
          %960 = vmatprep.subr.mxu0 0.0
          %961 = vmatpush1.msra.mxu0 %v905
          %962 = vmatprep.subr.mxu0 0.0
          %963 = vmatpush1.msra.mxu0 %v906
          %964 = vmatprep.subr.mxu0 0.0
          %965 = vmatpush1.msra.mxu0 %v907
          %966 = vmatprep.subr.mxu0 0.0
          %967 = vmatpush1.msra.mxu0 %v908
          %968 = vmatprep.subr.mxu0 0.0
          %969 = vmatpush1.msra.mxu0 %v909
          %970 = vmatprep.subr.mxu0 0.0
          %971 = vmatpush1.msra.mxu0 %v910
          %972 = vmatprep.subr.mxu0 0.0
          %973 = vmatpush1.msra.mxu0 %v911
          %974 = vmatprep.subr.mxu0 0.0
          %975 = vmatpush1.msra.mxu0 %v912
          %976 = vmatprep.subr.mxu0 0.0
          %977 = vmatpush1.msra.mxu0 %v913
          %978 = vmatprep.subr.mxu0 0.0
          %979 = vmatpush1.msra.mxu0 %v914
          %980 = vmatprep.subr.mxu0 0.0
          %981 = vmatpush1.msra.mxu0 %v915
          %982 = vmatprep.subr.mxu0 0.0
          %983 = vmatpush1.msra.mxu0 %v916
          %984 = vmatprep.subr.mxu0 0.0
          %985 = vmatpush1.msra.mxu0 %v917
          %986 = vmatprep.subr.mxu0 0.0
          %987 = vmatpush1.msra.mxu0 0.0
          %988 = vmatprep.subr.mxu0 0.0
          %989 = vmatpush1.msra.mxu0 0.0
          %990 = vmatprep.subr.mxu0 0.0
          %991 = vmatpush1.msra.mxu0 0.0
          %992 = vmatprep.subr.mxu0 0.0
          %993 = vmatpush1.msra.mxu0 0.0
          %994 = vmatprep.subr.mxu0 0.0
          %995 = vmatpush1.msra.mxu0 0.0
          %996 = vmatprep.subr.mxu0 0.0
          %997 = vmatpush1.msra.mxu0 0.0
          %998 = vmatprep.subr.mxu0 0.0
          %999 = vmatpush1.msra.mxu0 0.0
          %1000 = vmatprep.subr.mxu0 0.0
          %1001 = vmatpush1.msra.mxu0 0.0
          %1002 = vmatprep.mubr.f32.mxu0 %v927
          %1003 = vmatmul.mubr.f32.gmra.mrb[0].mxu0 %v886
          %v1004 = vpop.f32.mrb[0].mxu0
          %v1005 = vadd.f32 %v923, %v1004
          %v1006 = vpop.f32.mrb[0].mxu0
          %1007 = vmatprep.mubr.f32.mxu0 %v930
          %1008 = vmatmul.mubr.f32.gmra.mrb[0].mxu0 %v888
          %v1009 = vpop.f32.mrb[0].mxu0
          %v1010 = vadd.f32 %v923, %v1009
          %v1011 = vpop.f32.mrb[0].mxu0
          %1012 = vmatprep.mubr.f32.mxu0 %v933
          %1013 = vmatmul.mubr.f32.gmra.mrb[0].mxu0 %v890
          %v1014 = vpop.f32.mrb[0].mxu0
          %v1015 = vadd.f32 %v923, %v1014
          %v1016 = vpop.f32.mrb[0].mxu0
          %1017 = vmatprep.mubr.f32.mxu0 %v936
          %1018 = vmatmul.mubr.f32.gmra.mrb[0].mxu0 %v892
          %v1019 = vpop.f32.mrb[0].mxu0
          %v1020 = vadd.f32 %v923, %v1019
          %v1021 = vpop.f32.mrb[0].mxu0
          %1022 = vdwg.mxu0
          %v1023 = vld [vmem:[#allocation9] sm:$0xff]
          %v1024 = vld [vmem:[#allocation9 + $0x8] sm:$0xff]
          %v1025 = vld [vmem:[#allocation9 + $0x10] sm:$0xff]
          %v1026 = vld [vmem:[#allocation9 + $0x18] sm:$0xff]
          %v1027 = vadd.f32 %v1005, %v1023
          %v1028 = vadd.f32 %v1010, %v1024
          %v1029 = vadd.f32 %v1015, %v1025
          %v1030 = vadd.f32 %v1020, %v1026
          %1031 = vst [vmem:[#allocation2] sm:$0xff] %v1027
          %1032 = vst [vmem:[#allocation2 + $0x8] sm:$0xff] %v1028
          %1033 = vst [vmem:[#allocation2 + $0x10] sm:$0xff] %v1029
          %1034 = vst [vmem:[#allocation2 + $0x18] sm:$0xff] %v1030
        $region132: #{tpu_custom_call.1} parent=91 // pred_fallthru
          _
        %v1035 = vld [vmem:[#allocation2] sm:$0xff]
        %v1036 = vld [vmem:[#allocation2 + $0x8] sm:$0xff]
        %v1037 = vld [vmem:[#allocation2 + $0x10] sm:$0xff]
        %v1038 = vld [vmem:[#allocation2 + $0x18] sm:$0xff]
        %v1039 = vld [vmem:[%s733] sm:$0x1]
        %v1040 = vld [vmem:[%s861] sm:$0x1]
        %1041 = vadd.xlane.f32.xlu0 %v1035
        %v1042 = vpop.xlane.xlu0 %1041
        %1043 = vadd.xlane.f32.xlu0 %v1036
        %v1044 = vpop.xlane.xlu0 %1043
        %1045 = vadd.xlane.f32.xlu0 %v1037
        %v1046 = vpop.xlane.xlu0 %1045
        %1047 = vadd.xlane.f32.xlu0 %v1038
        %v1048 = vpop.xlane.xlu0 %1047
        %v1049 = vrcp.pop 128.0
        %v1050 = vmul.f32 %v1042, %v1049
        %v1051 = vmul.f32 %v1044, %v1049
        %v1052 = vmul.f32 %v1046, %v1049
        %v1053 = vmul.f32 %v1048, %v1049
        %v1054 = vsub.f32 %v1035, %v1050
        %v1055 = vsub.f32 %v1036, %v1051
        %v1056 = vsub.f32 %v1037, %v1052
        %v1057 = vsub.f32 %v1038, %v1053
        %v1058 = vmul.f32 %v1054, %v1054
        %v1059 = vmul.f32 %v1055, %v1055
        %v1060 = vmul.f32 %v1056, %v1056
        %v1061 = vmul.f32 %v1057, %v1057
        %1062 = vadd.xlane.f32.xlu0 %v1058
        %v1063 = vpop.xlane.xlu0 %1062
        %1064 = vadd.xlane.f32.xlu0 %v1059
        %v1065 = vpop.xlane.xlu0 %1064
        %1066 = vadd.xlane.f32.xlu0 %v1060
        %v1067 = vpop.xlane.xlu0 %1066
        %1068 = vadd.xlane.f32.xlu0 %v1061
        %v1069 = vpop.xlane.xlu0 %1068
        %v1070 = vmul.f32 %v1063, %v1049
        %v1071 = vmul.f32 %v1065, %v1049
        %v1072 = vmul.f32 %v1067, %v1049
        %v1073 = vmul.f32 %v1069, %v1049
        %v1074 = vadd.f32 %v1070, 1e-05
        %v1075 = vadd.f32 %v1071, 1e-05
        %v1076 = vadd.f32 %v1072, 1e-05
        %v1077 = vadd.f32 %v1073, 1e-05
        %v1078 = vrsqrt.pop %v1074
        %v1079 = vrsqrt.pop %v1075
        %v1080 = vrsqrt.pop %v1076
        %v1081 = vrsqrt.pop %v1077
        %v1082 = vmul.f32 %v1054, %v1078
        %v1083 = vmul.f32 %v1055, %v1079
        %v1084 = vmul.f32 %v1056, %v1080
        %v1085 = vmul.f32 %v1057, %v1081
        %v1087 = vlaneseq
        %v1088 = vshrl.u32 %v1087, 7
        %v1089 = vsub.s32 0, %v1088
        %v1090 = vrot.slane %v1039, %v1089
        %v1092 = vmul.f32 %v1082, %v1090
        %v1093 = vmul.f32 %v1083, %v1090
        %v1094 = vmul.f32 %v1084, %v1090
        %v1095 = vmul.f32 %v1085, %v1090
        %v1097 = vlaneseq
        %v1098 = vshrl.u32 %v1097, 7
        %v1099 = vsub.s32 0, %v1098
        %v1100 = vrot.slane %v1040, %v1099
        %v1102 = vadd.f32 %v1092, %v1100
        %v1103 = vadd.f32 %v1093, %v1100
        %v1104 = vadd.f32 %v1094, %v1100
        %v1105 = vadd.f32 %v1095, %v1100
        %v1106 = vld [vmem:[%s742] sm:$0xff]
        %v1107 = vld [vmem:[%s742 + $0x8] sm:$0xff]
        %v1108 = vld [vmem:[%s742 + $0x10] sm:$0xff]
        %v1109 = vld [vmem:[%s742 + $0x18] sm:$0xff]
        %v1110 = vld [vmem:[%s742 + $0x20] sm:$0xff]
        %v1111 = vld [vmem:[%s742 + $0x28] sm:$0xff]
        %v1112 = vld [vmem:[%s742 + $0x30] sm:$0xff]
        %v1113 = vld [vmem:[%s742 + $0x38] sm:$0xff]
        %v1114 = vld [vmem:[%s742 + $0x40] sm:$0xff]
        %v1115 = vld [vmem:[%s742 + $0x48] sm:$0xff]
        %v1116 = vld [vmem:[%s742 + $0x50] sm:$0xff]
        %v1117 = vld [vmem:[%s742 + $0x58] sm:$0xff]
        %v1118 = vld [vmem:[%s742 + $0x60] sm:$0xff]
        %v1119 = vld [vmem:[%s742 + $0x68] sm:$0xff]
        %v1120 = vld [vmem:[%s742 + $0x70] sm:$0xff]
        %v1121 = vld [vmem:[%s742 + $0x78] sm:$0xff]
        %v1122 = vld [vmem:[%s742 + $0x80] sm:$0xff]
        %v1123 = vld [vmem:[%s742 + $0x88] sm:$0xff]
        %v1124 = vld [vmem:[%s742 + $0x90] sm:$0xff]
        %v1125 = vld [vmem:[%s742 + $0x98] sm:$0xff]
        %v1126 = vld [vmem:[%s742 + $0xa0] sm:$0xff]
        %v1127 = vld [vmem:[%s742 + $0xa8] sm:$0xff]
        %v1128 = vld [vmem:[%s742 + $0xb0] sm:$0xff]
        %v1129 = vld [vmem:[%s742 + $0xb8] sm:$0xff]
        %v1130 = vld [vmem:[%s742 + $0xc0] sm:$0xff]
        %v1131 = vld [vmem:[%s742 + $0xc8] sm:$0xff]
        %v1132 = vld [vmem:[%s742 + $0xd0] sm:$0xff]
        %v1133 = vld [vmem:[%s742 + $0xd8] sm:$0xff]
        %v1134 = vld [vmem:[%s742 + $0xe0] sm:$0xff]
        %v1135 = vld [vmem:[%s742 + $0xe8] sm:$0xff]
        %v1136 = vld [vmem:[%s742 + $0xf0] sm:$0xff]
        %v1137 = vld [vmem:[%s742 + $0xf8] sm:$0xff]
        %v1138 = vld [vmem:[%s742 + $0x100] sm:$0xff]
        %v1139 = vld [vmem:[%s742 + $0x108] sm:$0xff]
        %v1140 = vld [vmem:[%s742 + $0x110] sm:$0xff]
        %v1141 = vld [vmem:[%s742 + $0x118] sm:$0xff]
        %v1142 = vld [vmem:[%s742 + $0x120] sm:$0xff]
        %v1143 = vld [vmem:[%s742 + $0x128] sm:$0xff]
        %v1144 = vld [vmem:[%s742 + $0x130] sm:$0xff]
        %v1145 = vld [vmem:[%s742 + $0x138] sm:$0xff]
        %v1146 = vld [vmem:[%s742 + $0x140] sm:$0xff]
        %v1147 = vld [vmem:[%s742 + $0x148] sm:$0xff]
        %v1148 = vld [vmem:[%s742 + $0x150] sm:$0xff]
        %v1149 = vld [vmem:[%s742 + $0x158] sm:$0xff]
        %v1150 = vld [vmem:[%s742 + $0x160] sm:$0xff]
        %v1151 = vld [vmem:[%s742 + $0x168] sm:$0xff]
        %v1152 = vld [vmem:[%s742 + $0x170] sm:$0xff]
        %v1153 = vld [vmem:[%s742 + $0x178] sm:$0xff]
        %v1154 = vld [vmem:[%s865] sm:$0x7]
        %v1156 = vlaneseq
        %v1157 = vshrl.u32 %v1156, 7
        %v1158 = vsub.s32 0, %v1157
        %v1159 = vrot.slane %v1154, %v1158
        %v1160 = vlaneseq
        %v1161 = vshrl.u32 %v1160, 7
        %v1162 = vsub.s32 1, %v1161
        %v1163 = vrot.slane %v1154, %v1162
        %v1164 = vlaneseq
        %v1165 = vshrl.u32 %v1164, 7
        %v1166 = vsub.s32 2, %v1165
        %v1167 = vrot.slane %v1154, %v1166
        %1171 = vmatprep.subr.mxu0 %v1107
        %1172 = vmatpush1.msra.mxu0 %v1106
        %1173 = vmatprep.subr.mxu0 %v1110
        %1174 = vmatpush1.msra.mxu0 %v1109
        %1175 = vmatprep.subr.mxu0 %v1113
        %1176 = vmatpush1.msra.mxu0 %v1112
        %1177 = vmatprep.subr.mxu0 %v1116
        %1178 = vmatpush1.msra.mxu0 %v1115
        %1179 = vmatprep.subr.mxu0 %v1119
        %1180 = vmatpush1.msra.mxu0 %v1118
        %1181 = vmatprep.subr.mxu0 %v1122
        %1182 = vmatpush1.msra.mxu0 %v1121
        %1183 = vmatprep.subr.mxu0 %v1125
        %1184 = vmatpush1.msra.mxu0 %v1124
        %1185 = vmatprep.subr.mxu0 %v1128
        %1186 = vmatpush1.msra.mxu0 %v1127
        %1187 = vmatprep.subr.mxu0 %v1131
        %1188 = vmatpush1.msra.mxu0 %v1130
        %1189 = vmatprep.subr.mxu0 %v1134
        %1190 = vmatpush1.msra.mxu0 %v1133
        %1191 = vmatprep.subr.mxu0 %v1137
        %1192 = vmatpush1.msra.mxu0 %v1136
        %1193 = vmatprep.subr.mxu0 %v1140
        %1194 = vmatpush1.msra.mxu0 %v1139
        %1195 = vmatprep.subr.mxu0 %v1143
        %1196 = vmatpush1.msra.mxu0 %v1142
        %1197 = vmatprep.subr.mxu0 %v1146
        %1198 = vmatpush1.msra.mxu0 %v1145
        %1199 = vmatprep.subr.mxu0 %v1149
        %1200 = vmatpush1.msra.mxu0 %v1148
        %1201 = vmatprep.subr.mxu0 %v1152
        %1202 = vmatpush1.msra.mxu0 %v1151
        %1203 = vmatprep.subr.mxu0 0.0
        %1204 = vmatpush1.msra.mxu0 0.0
        %1205 = vmatprep.subr.mxu0 0.0
        %1206 = vmatpush1.msra.mxu0 0.0
        %1207 = vmatprep.subr.mxu0 0.0
        %1208 = vmatpush1.msra.mxu0 0.0
        %1209 = vmatprep.subr.mxu0 0.0
        %1210 = vmatpush1.msra.mxu0 0.0
        %1211 = vmatprep.subr.mxu0 0.0
        %1212 = vmatpush1.msra.mxu0 0.0
        %1213 = vmatprep.subr.mxu0 0.0
        %1214 = vmatpush1.msra.mxu0 0.0
        %1215 = vmatprep.subr.mxu0 0.0
        %1216 = vmatpush1.msra.mxu0 0.0
        %1217 = vmatprep.subr.mxu0 0.0
        %1218 = vmatpush1.msra.mxu0 0.0
        %1219 = vmatprep.subr.mxu0 0.0
        %1220 = vmatpush1.msra.mxu0 0.0
        %1221 = vmatprep.subr.mxu0 0.0
        %1222 = vmatpush1.msra.mxu0 0.0
        %1223 = vmatprep.subr.mxu0 0.0
        %1224 = vmatpush1.msra.mxu0 0.0
        %1225 = vmatprep.subr.mxu0 0.0
        %1226 = vmatpush1.msra.mxu0 0.0
        %1227 = vmatprep.subr.mxu0 0.0
        %1228 = vmatpush1.msra.mxu0 0.0
        %1229 = vmatprep.subr.mxu0 0.0
        %1230 = vmatpush1.msra.mxu0 0.0
        %1231 = vmatprep.subr.mxu0 0.0
        %1232 = vmatpush1.msra.mxu0 0.0
        %1233 = vmatprep.subr.mxu0 0.0
        %1234 = vmatpush1.msra.mxu0 0.0
        %1235 = vmatprep.mubr.f32.mxu0 0.0
        %1236 = vmatmul.mubr.f32.gmra.mrb[0].mxu0 %v1102
        %v1237 = vpop.f32.mrb[0].mxu0
        %v1238 = vadd.f32 %v1159, %v1237
        %v1239 = vpop.f32.mrb[0].mxu0
        %v1240 = vadd.f32 %v1163, %v1239
        %1241 = vmatprep.mubr.f32.mxu0 0.0
        %1242 = vmatmul.mubr.f32.gmra.mrb[0].mxu0 %v1103
        %v1243 = vpop.f32.mrb[0].mxu0
        %v1244 = vadd.f32 %v1159, %v1243
        %v1245 = vpop.f32.mrb[0].mxu0
        %v1246 = vadd.f32 %v1163, %v1245
        %1247 = vmatprep.mubr.f32.mxu0 0.0
        %1248 = vmatmul.mubr.f32.gmra.mrb[0].mxu0 %v1104
        %v1249 = vpop.f32.mrb[0].mxu0
        %v1250 = vadd.f32 %v1159, %v1249
        %v1251 = vpop.f32.mrb[0].mxu0
        %v1252 = vadd.f32 %v1163, %v1251
        %1253 = vmatprep.mubr.f32.mxu0 0.0
        %1254 = vmatmul.mubr.f32.gmra.mrb[0].mxu0 %v1105
        %v1255 = vpop.f32.mrb[0].mxu0
        %v1256 = vadd.f32 %v1159, %v1255
        %v1257 = vpop.f32.mrb[0].mxu0
        %v1258 = vadd.f32 %v1163, %v1257
        %1259 = vdwg.mxu0
        %1260 = vmatprep.subr.mxu0 0.0
        %1261 = vmatpush1.msra.mxu0 %v1108
        %1262 = vmatprep.subr.mxu0 0.0
        %1263 = vmatpush1.msra.mxu0 %v1111
        %1264 = vmatprep.subr.mxu0 0.0
        %1265 = vmatpush1.msra.mxu0 %v1114
        %1266 = vmatprep.subr.mxu0 0.0
        %1267 = vmatpush1.msra.mxu0 %v1117
        %1268 = vmatprep.subr.mxu0 0.0
        %1269 = vmatpush1.msra.mxu0 %v1120
        %1270 = vmatprep.subr.mxu0 0.0
        %1271 = vmatpush1.msra.mxu0 %v1123
        %1272 = vmatprep.subr.mxu0 0.0
        %1273 = vmatpush1.msra.mxu0 %v1126
        %1274 = vmatprep.subr.mxu0 0.0
        %1275 = vmatpush1.msra.mxu0 %v1129
        %1276 = vmatprep.subr.mxu0 0.0
        %1277 = vmatpush1.msra.mxu0 %v1132
        %1278 = vmatprep.subr.mxu0 0.0
        %1279 = vmatpush1.msra.mxu0 %v1135
        %1280 = vmatprep.subr.mxu0 0.0
        %1281 = vmatpush1.msra.mxu0 %v1138
        %1282 = vmatprep.subr.mxu0 0.0
        %1283 = vmatpush1.msra.mxu0 %v1141
        %1284 = vmatprep.subr.mxu0 0.0
        %1285 = vmatpush1.msra.mxu0 %v1144
        %1286 = vmatprep.subr.mxu0 0.0
        %1287 = vmatpush1.msra.mxu0 %v1147
        %1288 = vmatprep.subr.mxu0 0.0
        %1289 = vmatpush1.msra.mxu0 %v1150
        %1290 = vmatprep.subr.mxu0 0.0
        %1291 = vmatpush1.msra.mxu0 %v1153
        %1292 = vmatprep.subr.mxu0 0.0
        %1293 = vmatpush1.msra.mxu0 0.0
        %1294 = vmatprep.subr.mxu0 0.0
        %1295 = vmatpush1.msra.mxu0 0.0
        %1296 = vmatprep.subr.mxu0 0.0
        %1297 = vmatpush1.msra.mxu0 0.0
        %1298 = vmatprep.subr.mxu0 0.0
        %1299 = vmatpush1.msra.mxu0 0.0
        %1300 = vmatprep.subr.mxu0 0.0
        %1301 = vmatpush1.msra.mxu0 0.0
        %1302 = vmatprep.subr.mxu0 0.0
        %1303 = vmatpush1.msra.mxu0 0.0
        %1304 = vmatprep.subr.mxu0 0.0
        %1305 = vmatpush1.msra.mxu0 0.0
        %1306 = vmatprep.subr.mxu0 0.0
        %1307 = vmatpush1.msra.mxu0 0.0
        %1308 = vmatprep.subr.mxu0 0.0
        %1309 = vmatpush1.msra.mxu0 0.0
        %1310 = vmatprep.subr.mxu0 0.0
        %1311 = vmatpush1.msra.mxu0 0.0
        %1312 = vmatprep.subr.mxu0 0.0
        %1313 = vmatpush1.msra.mxu0 0.0
        %1314 = vmatprep.subr.mxu0 0.0
        %1315 = vmatpush1.msra.mxu0 0.0
        %1316 = vmatprep.subr.mxu0 0.0
        %1317 = vmatpush1.msra.mxu0 0.0
        %1318 = vmatprep.subr.mxu0 0.0
        %1319 = vmatpush1.msra.mxu0 0.0
        %1320 = vmatprep.subr.mxu0 0.0
        %1321 = vmatpush1.msra.mxu0 0.0
        %1322 = vmatprep.subr.mxu0 0.0
        %1323 = vmatpush1.msra.mxu0 0.0
        %1324 = vmatprep.mubr.f32.mxu0 0.0
        %1325 = vmatmul.mubr.f32.gmra.mrb[0].mxu0 %v1102
        %v1326 = vpop.f32.mrb[0].mxu0
        %v1327 = vadd.f32 %v1167, %v1326
        %v1328 = vpop.f32.mrb[0].mxu0
        %1329 = vmatprep.mubr.f32.mxu0 0.0
        %1330 = vmatmul.mubr.f32.gmra.mrb[0].mxu0 %v1103
        %v1331 = vpop.f32.mrb[0].mxu0
        %v1332 = vadd.f32 %v1167, %v1331
        %v1333 = vpop.f32.mrb[0].mxu0
        %1334 = vmatprep.mubr.f32.mxu0 0.0
        %1335 = vmatmul.mubr.f32.gmra.mrb[0].mxu0 %v1104
        %v1336 = vpop.f32.mrb[0].mxu0
        %v1337 = vadd.f32 %v1167, %v1336
        %v1338 = vpop.f32.mrb[0].mxu0
        %1339 = vmatprep.mubr.f32.mxu0 0.0
        %1340 = vmatmul.mubr.f32.gmra.mrb[0].mxu0 %v1105
        %v1341 = vpop.f32.mrb[0].mxu0
        %v1342 = vadd.f32 %v1167, %v1341
        %v1343 = vpop.f32.mrb[0].mxu0
        %1344 = vdwg.mxu0
        %v1345 = vmul.f32 %v1238, 0.17677669
        %v1346 = vmul.f32 %v1244, 0.17677669
        %v1347 = vmul.f32 %v1250, 0.17677669
        %v1348 = vmul.f32 %v1256, 0.17677669
        %v1349 = vld [vmem:[%s751] sm:$0xff]
        %v1350 = vld [vmem:[%s751 + $0x8] sm:$0xff]
        %v1351 = vld [vmem:[%s751 + $0x10] sm:$0xff]
        %v1352 = vld [vmem:[%s751 + $0x18] sm:$0xff]
        %v1353 = vld [vmem:[%s751 + $0x20] sm:$0xff]
        %v1354 = vld [vmem:[%s751 + $0x28] sm:$0xff]
        %v1355 = vld [vmem:[%s751 + $0x30] sm:$0xff]
        %v1356 = vld [vmem:[%s751 + $0x38] sm:$0xff]
        %v1357 = vld [vmem:[%s751 + $0x40] sm:$0xff]
        %v1358 = vld [vmem:[%s751 + $0x48] sm:$0xff]
        %v1359 = vld [vmem:[%s751 + $0x50] sm:$0xff]
        %v1360 = vld [vmem:[%s751 + $0x58] sm:$0xff]
        %v1361 = vld [vmem:[%s751 + $0x60] sm:$0xff]
        %v1362 = vld [vmem:[%s751 + $0x68] sm:$0xff]
        %v1363 = vld [vmem:[%s751 + $0x70] sm:$0xff]
        %v1364 = vld [vmem:[%s751 + $0x78] sm:$0xff]
        %vm1365 = vcmask 261120
        %v1367 = vsel %vm1365, %v1345, 0
        %v1370 = vsel %vm1365, %v1346, 0
        %v1373 = vsel %vm1365, %v1240, 0
        %v1376 = vsel %vm1365, %v1246, 0
        %1378 = vmatprep.subr.mxu0 0.0
        %1379 = vmatpush1.xpose.msra.mxu0 %v1373
        %1380 = vmatprep.subr.mxu0 0.0
        %1381 = vmatpush1.xpose.msra.mxu0 %v1376
        %1382 = vmatprep.subr.mxu0 0.0
        %1383 = vmatpush1.xpose.msra.mxu0 0.0
        %1384 = vmatprep.subr.mxu0 0.0
        %1385 = vmatpush1.xpose.msra.mxu0 0.0
        %1386 = vmatprep.subr.mxu0 0.0
        %1387 = vmatpush1.xpose.msra.mxu0 0.0
        %1388 = vmatprep.subr.mxu0 0.0
        %1389 = vmatpush1.xpose.msra.mxu0 0.0
        %1390 = vmatprep.subr.mxu0 0.0
        %1391 = vmatpush1.xpose.msra.mxu0 0.0
        %1392 = vmatprep.subr.mxu0 0.0
        %1393 = vmatpush1.xpose.msra.mxu0 0.0
        %1394 = vmatprep.subr.mxu0 0.0
        %1395 = vmatpush1.xpose.msra.mxu0 0.0
        %1396 = vmatprep.subr.mxu0 0.0
        %1397 = vmatpush1.xpose.msra.mxu0 0.0
        %1398 = vmatprep.subr.mxu0 0.0
        %1399 = vmatpush1.xpose.msra.mxu0 0.0
        %1400 = vmatprep.subr.mxu0 0.0
        %1401 = vmatpush1.xpose.msra.mxu0 0.0
        %1402 = vmatprep.subr.mxu0 0.0
        %1403 = vmatpush1.xpose.msra.mxu0 0.0
        %1404 = vmatprep.subr.mxu0 0.0
        %1405 = vmatpush1.xpose.msra.mxu0 0.0
        %1406 = vmatprep.subr.mxu0 0.0
        %1407 = vmatpush1.xpose.msra.mxu0 0.0
        %1408 = vmatprep.subr.mxu0 0.0
        %1409 = vmatpush1.xpose.msra.mxu0 0.0
        %1410 = vmatprep.subr.mxu0 0.0
        %1411 = vmatpush1.xpose.msra.mxu0 0.0
        %1412 = vmatprep.subr.mxu0 0.0
        %1413 = vmatpush1.xpose.msra.mxu0 0.0
        %1414 = vmatprep.subr.mxu0 0.0
        %1415 = vmatpush1.xpose.msra.mxu0 0.0
        %1416 = vmatprep.subr.mxu0 0.0
        %1417 = vmatpush1.xpose.msra.mxu0 0.0
        %1418 = vmatprep.subr.mxu0 0.0
        %1419 = vmatpush1.xpose.msra.mxu0 0.0
        %1420 = vmatprep.subr.mxu0 0.0
        %1421 = vmatpush1.xpose.msra.mxu0 0.0
        %1422 = vmatprep.subr.mxu0 0.0
        %1423 = vmatpush1.xpose.msra.mxu0 0.0
        %1424 = vmatprep.subr.mxu0 0.0
        %1425 = vmatpush1.xpose.msra.mxu0 0.0
        %1426 = vmatprep.subr.mxu0 0.0
        %1427 = vmatpush1.xpose.msra.mxu0 0.0
        %1428 = vmatprep.subr.mxu0 0.0
        %1429 = vmatpush1.xpose.msra.mxu0 0.0
        %1430 = vmatprep.subr.mxu0 0.0
        %1431 = vmatpush1.xpose.msra.mxu0 0.0
        %1432 = vmatprep.subr.mxu0 0.0
        %1433 = vmatpush1.xpose.msra.mxu0 0.0
        %1434 = vmatprep.subr.mxu0 0.0
        %1435 = vmatpush1.xpose.msra.mxu0 0.0
        %1436 = vmatprep.subr.mxu0 0.0
        %1437 = vmatpush1.xpose.msra.mxu0 0.0
        %1438 = vmatprep.subr.mxu0 0.0
        %1439 = vmatpush1.xpose.msra.mxu0 0.0
        %1440 = vmatprep.subr.mxu0 0.0
        %1441 = vmatpush1.xpose.msra.mxu0 0.0
        %1442 = vmatprep.mubr.f32.mxu0 0.0
        %1443 = vmatmul.mubr.f32.gmra.mrb[0].mxu0 %v1367
        %v1444 = vpop.f32.mrb[0].mxu0
        %v1445 = vadd.f32 0.0, %v1444
        %v1446 = vpop.f32.mrb[0].mxu0
        %1447 = vmatprep.mubr.f32.mxu0 0.0
        %1448 = vmatmul.mubr.f32.gmra.mrb[0].mxu0 %v1370
        %v1449 = vpop.f32.mrb[0].mxu0
        %v1450 = vadd.f32 0.0, %v1449
        %v1451 = vpop.f32.mrb[0].mxu0
        %1452 = vdwg.mxu0
        %v1454 = vsel %vm1365, %v1347, 0
        %v1457 = vsel %vm1365, %v1348, 0
        %v1460 = vsel %vm1365, %v1252, 0
        %v1463 = vsel %vm1365, %v1258, 0
        %1465 = vmatprep.subr.mxu0 0.0
        %1466 = vmatpush1.xpose.msra.mxu0 %v1460
        %1467 = vmatprep.subr.mxu0 0.0
        %1468 = vmatpush1.xpose.msra.mxu0 %v1463
        %1469 = vmatprep.subr.mxu0 0.0
        %1470 = vmatpush1.xpose.msra.mxu0 0.0
        %1471 = vmatprep.subr.mxu0 0.0
        %1472 = vmatpush1.xpose.msra.mxu0 0.0
        %1473 = vmatprep.subr.mxu0 0.0
        %1474 = vmatpush1.xpose.msra.mxu0 0.0
        %1475 = vmatprep.subr.mxu0 0.0
        %1476 = vmatpush1.xpose.msra.mxu0 0.0
        %1477 = vmatprep.subr.mxu0 0.0
        %1478 = vmatpush1.xpose.msra.mxu0 0.0
        %1479 = vmatprep.subr.mxu0 0.0
        %1480 = vmatpush1.xpose.msra.mxu0 0.0
        %1481 = vmatprep.subr.mxu0 0.0
        %1482 = vmatpush1.xpose.msra.mxu0 0.0
        %1483 = vmatprep.subr.mxu0 0.0
        %1484 = vmatpush1.xpose.msra.mxu0 0.0
        %1485 = vmatprep.subr.mxu0 0.0
        %1486 = vmatpush1.xpose.msra.mxu0 0.0
        %1487 = vmatprep.subr.mxu0 0.0
        %1488 = vmatpush1.xpose.msra.mxu0 0.0
        %1489 = vmatprep.subr.mxu0 0.0
        %1490 = vmatpush1.xpose.msra.mxu0 0.0
        %1491 = vmatprep.subr.mxu0 0.0
        %1492 = vmatpush1.xpose.msra.mxu0 0.0
        %1493 = vmatprep.subr.mxu0 0.0
        %1494 = vmatpush1.xpose.msra.mxu0 0.0
        %1495 = vmatprep.subr.mxu0 0.0
        %1496 = vmatpush1.xpose.msra.mxu0 0.0
        %1497 = vmatprep.subr.mxu0 0.0
        %1498 = vmatpush1.xpose.msra.mxu0 0.0
        %1499 = vmatprep.subr.mxu0 0.0
        %1500 = vmatpush1.xpose.msra.mxu0 0.0
        %1501 = vmatprep.subr.mxu0 0.0
        %1502 = vmatpush1.xpose.msra.mxu0 0.0
        %1503 = vmatprep.subr.mxu0 0.0
        %1504 = vmatpush1.xpose.msra.mxu0 0.0
        %1505 = vmatprep.subr.mxu0 0.0
        %1506 = vmatpush1.xpose.msra.mxu0 0.0
        %1507 = vmatprep.subr.mxu0 0.0
        %1508 = vmatpush1.xpose.msra.mxu0 0.0
        %1509 = vmatprep.subr.mxu0 0.0
        %1510 = vmatpush1.xpose.msra.mxu0 0.0
        %1511 = vmatprep.subr.mxu0 0.0
        %1512 = vmatpush1.xpose.msra.mxu0 0.0
        %1513 = vmatprep.subr.mxu0 0.0
        %1514 = vmatpush1.xpose.msra.mxu0 0.0
        %1515 = vmatprep.subr.mxu0 0.0
        %1516 = vmatpush1.xpose.msra.mxu0 0.0
        %1517 = vmatprep.subr.mxu0 0.0
        %1518 = vmatpush1.xpose.msra.mxu0 0.0
        %1519 = vmatprep.subr.mxu0 0.0
        %1520 = vmatpush1.xpose.msra.mxu0 0.0
        %1521 = vmatprep.subr.mxu0 0.0
        %1522 = vmatpush1.xpose.msra.mxu0 0.0
        %1523 = vmatprep.subr.mxu0 0.0
        %1524 = vmatpush1.xpose.msra.mxu0 0.0
        %1525 = vmatprep.subr.mxu0 0.0
        %1526 = vmatpush1.xpose.msra.mxu0 0.0
        %1527 = vmatprep.subr.mxu0 0.0
        %1528 = vmatpush1.xpose.msra.mxu0 0.0
        %1529 = vmatprep.mubr.f32.mxu0 0.0
        %1530 = vmatmul.mubr.f32.gmra.mrb[0].mxu0 %v1454
        %v1531 = vpop.f32.mrb[0].mxu0
        %v1532 = vadd.f32 0.0, %v1531
        %v1533 = vpop.f32.mrb[0].mxu0
        %1534 = vmatprep.mubr.f32.mxu0 0.0
        %1535 = vmatmul.mubr.f32.gmra.mrb[0].mxu0 %v1457
        %v1536 = vpop.f32.mrb[0].mxu0
        %v1537 = vadd.f32 0.0, %v1536
        %v1538 = vpop.f32.mrb[0].mxu0
        %1539 = vdwg.mxu0
        %vm1540 = vcmask 130048
        %v1541 = vsel %vm1540, %v1445, -inf
        %1542 = vmax.xlane.f32.xlu0 %v1541
        %v1543 = vpop.xlane.xlu0 %1542
        %v1544 = vsel %vm1540, %v1450, -inf
        %1545 = vmax.xlane.f32.xlu0 %v1544
        %v1546 = vpop.xlane.xlu0 %1545
        %v1547 = vsel %vm1540, %v1532, -inf
        %1548 = vmax.xlane.f32.xlu0 %v1547
        %v1549 = vpop.xlane.xlu0 %1548
        %v1550 = vsel %vm1540, %v1537, -inf
        %1551 = vmax.xlane.f32.xlu0 %v1550
        %v1552 = vpop.xlane.xlu0 %1551
        %v1553 = vsub.f32 %v1445, %v1543
        %v1554 = vsub.f32 %v1450, %v1546
        %v1555 = vsub.f32 %v1532, %v1549
        %v1556 = vsub.f32 %v1537, %v1552
        %v1557 = vmul.f32 %v1553, 1.442695
        %v1558 = vpow.pop %v1557
        %v1559 = vmul.f32 %v1554, 1.442695
        %v1560 = vpow.pop %v1559
        %v1561 = vmul.f32 %v1555, 1.442695
        %v1562 = vpow.pop %v1561
        %v1563 = vmul.f32 %v1556, 1.442695
        %v1564 = vpow.pop %v1563
        %v1565 = vsel %vm1540, %v1558, 0.0
        %1566 = vadd.xlane.f32.xlu0 %v1565
        %v1567 = vpop.xlane.xlu0 %1566
        %v1568 = vsel %vm1540, %v1560, 0.0
        %1569 = vadd.xlane.f32.xlu0 %v1568
        %v1570 = vpop.xlane.xlu0 %1569
        %v1571 = vsel %vm1540, %v1562, 0.0
        %1572 = vadd.xlane.f32.xlu0 %v1571
        %v1573 = vpop.xlane.xlu0 %1572
        %v1574 = vsel %vm1540, %v1564, 0.0
        %1575 = vadd.xlane.f32.xlu0 %v1574
        %v1576 = vpop.xlane.xlu0 %1575
        %v1577 = vrcp.pop %v1567
        %v1578 = vrcp.pop %v1570
        %v1579 = vrcp.pop %v1573
        %v1580 = vrcp.pop %v1576
        %v1581 = vmul.f32 %v1558, %v1577
        %v1582 = vmul.f32 %v1560, %v1578
        %v1583 = vmul.f32 %v1562, %v1579
        %v1584 = vmul.f32 %v1564, %v1580
        %v1586 = vsel %vm1540, %v1581, 0
        %v1589 = vsel %vm1540, %v1582, 0
        %1591 = vmatprep.subr.mxu0 0.0
        %1592 = vmatpush1.msra.mxu0 %v1327
        %1593 = vmatprep.subr.mxu0 0.0
        %1594 = vmatpush1.msra.mxu0 %v1332
        %1595 = vmatprep.subr.mxu0 0.0
        %1596 = vmatpush1.msra.mxu0 0.0
        %1597 = vmatprep.subr.mxu0 0.0
        %1598 = vmatpush1.msra.mxu0 0.0
        %1599 = vmatprep.subr.mxu0 0.0
        %1600 = vmatpush1.msra.mxu0 0.0
        %1601 = vmatprep.subr.mxu0 0.0
        %1602 = vmatpush1.msra.mxu0 0.0
        %1603 = vmatprep.subr.mxu0 0.0
        %1604 = vmatpush1.msra.mxu0 0.0
        %1605 = vmatprep.subr.mxu0 0.0
        %1606 = vmatpush1.msra.mxu0 0.0
        %1607 = vmatprep.subr.mxu0 0.0
        %1608 = vmatpush1.msra.mxu0 0.0
        %1609 = vmatprep.subr.mxu0 0.0
        %1610 = vmatpush1.msra.mxu0 0.0
        %1611 = vmatprep.subr.mxu0 0.0
        %1612 = vmatpush1.msra.mxu0 0.0
        %1613 = vmatprep.subr.mxu0 0.0
        %1614 = vmatpush1.msra.mxu0 0.0
        %1615 = vmatprep.subr.mxu0 0.0
        %1616 = vmatpush1.msra.mxu0 0.0
        %1617 = vmatprep.subr.mxu0 0.0
        %1618 = vmatpush1.msra.mxu0 0.0
        %1619 = vmatprep.subr.mxu0 0.0
        %1620 = vmatpush1.msra.mxu0 0.0
        %1621 = vmatprep.subr.mxu0 0.0
        %1622 = vmatpush1.msra.mxu0 0.0
        %1623 = vmatprep.subr.mxu0 0.0
        %1624 = vmatpush1.msra.mxu0 0.0
        %1625 = vmatprep.subr.mxu0 0.0
        %1626 = vmatpush1.msra.mxu0 0.0
        %1627 = vmatprep.subr.mxu0 0.0
        %1628 = vmatpush1.msra.mxu0 0.0
        %1629 = vmatprep.subr.mxu0 0.0
        %1630 = vmatpush1.msra.mxu0 0.0
        %1631 = vmatprep.subr.mxu0 0.0
        %1632 = vmatpush1.msra.mxu0 0.0
        %1633 = vmatprep.subr.mxu0 0.0
        %1634 = vmatpush1.msra.mxu0 0.0
        %1635 = vmatprep.subr.mxu0 0.0
        %1636 = vmatpush1.msra.mxu0 0.0
        %1637 = vmatprep.subr.mxu0 0.0
        %1638 = vmatpush1.msra.mxu0 0.0
        %1639 = vmatprep.subr.mxu0 0.0
        %1640 = vmatpush1.msra.mxu0 0.0
        %1641 = vmatprep.subr.mxu0 0.0
        %1642 = vmatpush1.msra.mxu0 0.0
        %1643 = vmatprep.subr.mxu0 0.0
        %1644 = vmatpush1.msra.mxu0 0.0
        %1645 = vmatprep.subr.mxu0 0.0
        %1646 = vmatpush1.msra.mxu0 0.0
        %1647 = vmatprep.subr.mxu0 0.0
        %1648 = vmatpush1.msra.mxu0 0.0
        %1649 = vmatprep.subr.mxu0 0.0
        %1650 = vmatpush1.msra.mxu0 0.0
        %1651 = vmatprep.subr.mxu0 0.0
        %1652 = vmatpush1.msra.mxu0 0.0
        %1653 = vmatprep.subr.mxu0 0.0
        %1654 = vmatpush1.msra.mxu0 0.0
        %1655 = vmatprep.mubr.f32.mxu0 0.0
        %1656 = vmatmul.mubr.f32.gmra.mrb[0].mxu0 %v1586
        %v1657 = vpop.f32.mrb[0].mxu0
        %v1658 = vadd.f32 0.0, %v1657
        %v1659 = vpop.f32.mrb[0].mxu0
        %1660 = vmatprep.mubr.f32.mxu0 0.0
        %1661 = vmatmul.mubr.f32.gmra.mrb[0].mxu0 %v1589
        %v1662 = vpop.f32.mrb[0].mxu0
        %v1663 = vadd.f32 0.0, %v1662
        %v1664 = vpop.f32.mrb[0].mxu0
        %1665 = vdwg.mxu0
        %v1667 = vsel %vm1540, %v1583, 0
        %v1670 = vsel %vm1540, %v1584, 0
        %1672 = vmatprep.subr.mxu0 0.0
        %1673 = vmatpush1.msra.mxu0 %v1337
        %1674 = vmatprep.subr.mxu0 0.0
        %1675 = vmatpush1.msra.mxu0 %v1342
        %1676 = vmatprep.subr.mxu0 0.0
        %1677 = vmatpush1.msra.mxu0 0.0
        %1678 = vmatprep.subr.mxu0 0.0
        %1679 = vmatpush1.msra.mxu0 0.0
        %1680 = vmatprep.subr.mxu0 0.0
        %1681 = vmatpush1.msra.mxu0 0.0
        %1682 = vmatprep.subr.mxu0 0.0
        %1683 = vmatpush1.msra.mxu0 0.0
        %1684 = vmatprep.subr.mxu0 0.0
        %1685 = vmatpush1.msra.mxu0 0.0
        %1686 = vmatprep.subr.mxu0 0.0
        %1687 = vmatpush1.msra.mxu0 0.0
        %1688 = vmatprep.subr.mxu0 0.0
        %1689 = vmatpush1.msra.mxu0 0.0
        %1690 = vmatprep.subr.mxu0 0.0
        %1691 = vmatpush1.msra.mxu0 0.0
        %1692 = vmatprep.subr.mxu0 0.0
        %1693 = vmatpush1.msra.mxu0 0.0
        %1694 = vmatprep.subr.mxu0 0.0
        %1695 = vmatpush1.msra.mxu0 0.0
        %1696 = vmatprep.subr.mxu0 0.0
        %1697 = vmatpush1.msra.mxu0 0.0
        %1698 = vmatprep.subr.mxu0 0.0
        %1699 = vmatpush1.msra.mxu0 0.0
        %1700 = vmatprep.subr.mxu0 0.0
        %1701 = vmatpush1.msra.mxu0 0.0
        %1702 = vmatprep.subr.mxu0 0.0
        %1703 = vmatpush1.msra.mxu0 0.0
        %1704 = vmatprep.subr.mxu0 0.0
        %1705 = vmatpush1.msra.mxu0 0.0
        %1706 = vmatprep.subr.mxu0 0.0
        %1707 = vmatpush1.msra.mxu0 0.0
        %1708 = vmatprep.subr.mxu0 0.0
        %1709 = vmatpush1.msra.mxu0 0.0
        %1710 = vmatprep.subr.mxu0 0.0
        %1711 = vmatpush1.msra.mxu0 0.0
        %1712 = vmatprep.subr.mxu0 0.0
        %1713 = vmatpush1.msra.mxu0 0.0
        %1714 = vmatprep.subr.mxu0 0.0
        %1715 = vmatpush1.msra.mxu0 0.0
        %1716 = vmatprep.subr.mxu0 0.0
        %1717 = vmatpush1.msra.mxu0 0.0
        %1718 = vmatprep.subr.mxu0 0.0
        %1719 = vmatpush1.msra.mxu0 0.0
        %1720 = vmatprep.subr.mxu0 0.0
        %1721 = vmatpush1.msra.mxu0 0.0
        %1722 = vmatprep.subr.mxu0 0.0
        %1723 = vmatpush1.msra.mxu0 0.0
        %1724 = vmatprep.subr.mxu0 0.0
        %1725 = vmatpush1.msra.mxu0 0.0
        %1726 = vmatprep.subr.mxu0 0.0
        %1727 = vmatpush1.msra.mxu0 0.0
        %1728 = vmatprep.subr.mxu0 0.0
        %1729 = vmatpush1.msra.mxu0 0.0
        %1730 = vmatprep.subr.mxu0 0.0
        %1731 = vmatpush1.msra.mxu0 0.0
        %1732 = vmatprep.subr.mxu0 0.0
        %1733 = vmatpush1.msra.mxu0 0.0
        %1734 = vmatprep.subr.mxu0 0.0
        %1735 = vmatpush1.msra.mxu0 0.0
        %1736 = vmatprep.mubr.f32.mxu0 0.0
        %1737 = vmatmul.mubr.f32.gmra.mrb[0].mxu0 %v1667
        %v1738 = vpop.f32.mrb[0].mxu0
        %v1739 = vadd.f32 0.0, %v1738
        %v1740 = vpop.f32.mrb[0].mxu0
        %1741 = vmatprep.mubr.f32.mxu0 0.0
        %1742 = vmatmul.mubr.f32.gmra.mrb[0].mxu0 %v1670
        %v1743 = vpop.f32.mrb[0].mxu0
        %v1744 = vadd.f32 0.0, %v1743
        %v1745 = vpop.f32.mrb[0].mxu0
        %1746 = vdwg.mxu0
        %1747 = vrot.lane.b32.xlu0 %v1345, 96
        %v1748 = vpop.permute.xlu0 %1747
        %1749 = vrot.lane.b32.xlu0 %v1346, 96
        %v1750 = vpop.permute.xlu0 %1749
        %1751 = vrot.lane.b32.xlu0 %v1240, 96
        %v1752 = vpop.permute.xlu0 %1751
        %1753 = vrot.lane.b32.xlu0 %v1246, 96
        %v1754 = vpop.permute.xlu0 %1753
        %v1755 = vsel %vm1365, %v1748, 0
        %v1757 = vsel %vm1365, %v1750, 0
        %v1759 = vsel %vm1365, %v1752, 0
        %v1761 = vsel %vm1365, %v1754, 0
        %1763 = vmatprep.subr.mxu0 0.0
        %1764 = vmatpush1.xpose.msra.mxu0 %v1759
        %1765 = vmatprep.subr.mxu0 0.0
        %1766 = vmatpush1.xpose.msra.mxu0 %v1761
        %1767 = vmatprep.subr.mxu0 0.0
        %1768 = vmatpush1.xpose.msra.mxu0 0.0
        %1769 = vmatprep.subr.mxu0 0.0
        %1770 = vmatpush1.xpose.msra.mxu0 0.0
        %1771 = vmatprep.subr.mxu0 0.0
        %1772 = vmatpush1.xpose.msra.mxu0 0.0
        %1773 = vmatprep.subr.mxu0 0.0
        %1774 = vmatpush1.xpose.msra.mxu0 0.0
        %1775 = vmatprep.subr.mxu0 0.0
        %1776 = vmatpush1.xpose.msra.mxu0 0.0
        %1777 = vmatprep.subr.mxu0 0.0
        %1778 = vmatpush1.xpose.msra.mxu0 0.0
        %1779 = vmatprep.subr.mxu0 0.0
        %1780 = vmatpush1.xpose.msra.mxu0 0.0
        %1781 = vmatprep.subr.mxu0 0.0
        %1782 = vmatpush1.xpose.msra.mxu0 0.0
        %1783 = vmatprep.subr.mxu0 0.0
        %1784 = vmatpush1.xpose.msra.mxu0 0.0
        %1785 = vmatprep.subr.mxu0 0.0
        %1786 = vmatpush1.xpose.msra.mxu0 0.0
        %1787 = vmatprep.subr.mxu0 0.0
        %1788 = vmatpush1.xpose.msra.mxu0 0.0
        %1789 = vmatprep.subr.mxu0 0.0
        %1790 = vmatpush1.xpose.msra.mxu0 0.0
        %1791 = vmatprep.subr.mxu0 0.0
        %1792 = vmatpush1.xpose.msra.mxu0 0.0
        %1793 = vmatprep.subr.mxu0 0.0
        %1794 = vmatpush1.xpose.msra.mxu0 0.0
        %1795 = vmatprep.subr.mxu0 0.0
        %1796 = vmatpush1.xpose.msra.mxu0 0.0
        %1797 = vmatprep.subr.mxu0 0.0
        %1798 = vmatpush1.xpose.msra.mxu0 0.0
        %1799 = vmatprep.subr.mxu0 0.0
        %1800 = vmatpush1.xpose.msra.mxu0 0.0
        %1801 = vmatprep.subr.mxu0 0.0
        %1802 = vmatpush1.xpose.msra.mxu0 0.0
        %1803 = vmatprep.subr.mxu0 0.0
        %1804 = vmatpush1.xpose.msra.mxu0 0.0
        %1805 = vmatprep.subr.mxu0 0.0
        %1806 = vmatpush1.xpose.msra.mxu0 0.0
        %1807 = vmatprep.subr.mxu0 0.0
        %1808 = vmatpush1.xpose.msra.mxu0 0.0
        %1809 = vmatprep.subr.mxu0 0.0
        %1810 = vmatpush1.xpose.msra.mxu0 0.0
        %1811 = vmatprep.subr.mxu0 0.0
        %1812 = vmatpush1.xpose.msra.mxu0 0.0
        %1813 = vmatprep.subr.mxu0 0.0
        %1814 = vmatpush1.xpose.msra.mxu0 0.0
        %1815 = vmatprep.subr.mxu0 0.0
        %1816 = vmatpush1.xpose.msra.mxu0 0.0
        %1817 = vmatprep.subr.mxu0 0.0
        %1818 = vmatpush1.xpose.msra.mxu0 0.0
        %1819 = vmatprep.subr.mxu0 0.0
        %1820 = vmatpush1.xpose.msra.mxu0 0.0
        %1821 = vmatprep.subr.mxu0 0.0
        %1822 = vmatpush1.xpose.msra.mxu0 0.0
        %1823 = vmatprep.subr.mxu0 0.0
        %1824 = vmatpush1.xpose.msra.mxu0 0.0
        %1825 = vmatprep.subr.mxu0 0.0
        %1826 = vmatpush1.xpose.msra.mxu0 0.0
        %1827 = vmatprep.mubr.f32.mxu0 0.0
        %1828 = vmatmul.mubr.f32.gmra.mrb[0].mxu0 %v1755
        %v1829 = vpop.f32.mrb[0].mxu0
        %v1830 = vadd.f32 0.0, %v1829
        %v1831 = vpop.f32.mrb[0].mxu0
        %1832 = vmatprep.mubr.f32.mxu0 0.0
        %1833 = vmatmul.mubr.f32.gmra.mrb[0].mxu0 %v1757
        %v1834 = vpop.f32.mrb[0].mxu0
        %v1835 = vadd.f32 0.0, %v1834
        %v1836 = vpop.f32.mrb[0].mxu0
        %1837 = vdwg.mxu0
        %1838 = vrot.lane.b32.xlu0 %v1347, 96
        %v1839 = vpop.permute.xlu0 %1838
        %1840 = vrot.lane.b32.xlu0 %v1348, 96
        %v1841 = vpop.permute.xlu0 %1840
        %1842 = vrot.lane.b32.xlu0 %v1252, 96
        %v1843 = vpop.permute.xlu0 %1842
        %1844 = vrot.lane.b32.xlu0 %v1258, 96
        %v1845 = vpop.permute.xlu0 %1844
        %v1846 = vsel %vm1365, %v1839, 0
        %v1848 = vsel %vm1365, %v1841, 0
        %v1850 = vsel %vm1365, %v1843, 0
        %v1852 = vsel %vm1365, %v1845, 0
        %1854 = vmatprep.subr.mxu0 0.0
        %1855 = vmatpush1.xpose.msra.mxu0 %v1850
        %1856 = vmatprep.subr.mxu0 0.0
        %1857 = vmatpush1.xpose.msra.mxu0 %v1852
        %1858 = vmatprep.subr.mxu0 0.0
        %1859 = vmatpush1.xpose.msra.mxu0 0.0
        %1860 = vmatprep.subr.mxu0 0.0
        %1861 = vmatpush1.xpose.msra.mxu0 0.0
        %1862 = vmatprep.subr.mxu0 0.0
        %1863 = vmatpush1.xpose.msra.mxu0 0.0
        %1864 = vmatprep.subr.mxu0 0.0
        %1865 = vmatpush1.xpose.msra.mxu0 0.0
        %1866 = vmatprep.subr.mxu0 0.0
        %1867 = vmatpush1.xpose.msra.mxu0 0.0
        %1868 = vmatprep.subr.mxu0 0.0
        %1869 = vmatpush1.xpose.msra.mxu0 0.0
        %1870 = vmatprep.subr.mxu0 0.0
        %1871 = vmatpush1.xpose.msra.mxu0 0.0
        %1872 = vmatprep.subr.mxu0 0.0
        %1873 = vmatpush1.xpose.msra.mxu0 0.0
        %1874 = vmatprep.subr.mxu0 0.0
        %1875 = vmatpush1.xpose.msra.mxu0 0.0
        %1876 = vmatprep.subr.mxu0 0.0
        %1877 = vmatpush1.xpose.msra.mxu0 0.0
        %1878 = vmatprep.subr.mxu0 0.0
        %1879 = vmatpush1.xpose.msra.mxu0 0.0
        %1880 = vmatprep.subr.mxu0 0.0
        %1881 = vmatpush1.xpose.msra.mxu0 0.0
        %1882 = vmatprep.subr.mxu0 0.0
        %1883 = vmatpush1.xpose.msra.mxu0 0.0
        %1884 = vmatprep.subr.mxu0 0.0
        %1885 = vmatpush1.xpose.msra.mxu0 0.0
        %1886 = vmatprep.subr.mxu0 0.0
        %1887 = vmatpush1.xpose.msra.mxu0 0.0
        %1888 = vmatprep.subr.mxu0 0.0
        %1889 = vmatpush1.xpose.msra.mxu0 0.0
        %1890 = vmatprep.subr.mxu0 0.0
        %1891 = vmatpush1.xpose.msra.mxu0 0.0
        %1892 = vmatprep.subr.mxu0 0.0
        %1893 = vmatpush1.xpose.msra.mxu0 0.0
        %1894 = vmatprep.subr.mxu0 0.0
        %1895 = vmatpush1.xpose.msra.mxu0 0.0
        %1896 = vmatprep.subr.mxu0 0.0
        %1897 = vmatpush1.xpose.msra.mxu0 0.0
        %1898 = vmatprep.subr.mxu0 0.0
        %1899 = vmatpush1.xpose.msra.mxu0 0.0
        %1900 = vmatprep.subr.mxu0 0.0
        %1901 = vmatpush1.xpose.msra.mxu0 0.0
        %1902 = vmatprep.subr.mxu0 0.0
        %1903 = vmatpush1.xpose.msra.mxu0 0.0
        %1904 = vmatprep.subr.mxu0 0.0
        %1905 = vmatpush1.xpose.msra.mxu0 0.0
        %1906 = vmatprep.subr.mxu0 0.0
        %1907 = vmatpush1.xpose.msra.mxu0 0.0
        %1908 = vmatprep.subr.mxu0 0.0
        %1909 = vmatpush1.xpose.msra.mxu0 0.0
        %1910 = vmatprep.subr.mxu0 0.0
        %1911 = vmatpush1.xpose.msra.mxu0 0.0
        %1912 = vmatprep.subr.mxu0 0.0
        %1913 = vmatpush1.xpose.msra.mxu0 0.0
        %1914 = vmatprep.subr.mxu0 0.0
        %1915 = vmatpush1.xpose.msra.mxu0 0.0
        %1916 = vmatprep.subr.mxu0 0.0
        %1917 = vmatpush1.xpose.msra.mxu0 0.0
        %1918 = vmatprep.mubr.f32.mxu0 0.0
        %1919 = vmatmul.mubr.f32.gmra.mrb[0].mxu0 %v1846
        %v1920 = vpop.f32.mrb[0].mxu0
        %v1921 = vadd.f32 0.0, %v1920
        %v1922 = vpop.f32.mrb[0].mxu0
        %1923 = vmatprep.mubr.f32.mxu0 0.0
        %1924 = vmatmul.mubr.f32.gmra.mrb[0].mxu0 %v1848
        %v1925 = vpop.f32.mrb[0].mxu0
        %v1926 = vadd.f32 0.0, %v1925
        %v1927 = vpop.f32.mrb[0].mxu0
        %1928 = vdwg.mxu0
        %v1929 = vsel %vm1540, %v1830, -inf
        %1930 = vmax.xlane.f32.xlu0 %v1929
        %v1931 = vpop.xlane.xlu0 %1930
        %v1932 = vsel %vm1540, %v1835, -inf
        %1933 = vmax.xlane.f32.xlu0 %v1932
        %v1934 = vpop.xlane.xlu0 %1933
        %v1935 = vsel %vm1540, %v1921, -inf
        %1936 = vmax.xlane.f32.xlu0 %v1935
        %v1937 = vpop.xlane.xlu0 %1936
        %v1938 = vsel %vm1540, %v1926, -inf
        %1939 = vmax.xlane.f32.xlu0 %v1938
        %v1940 = vpop.xlane.xlu0 %1939
        %v1941 = vsub.f32 %v1830, %v1931
        %v1942 = vsub.f32 %v1835, %v1934
        %v1943 = vsub.f32 %v1921, %v1937
        %v1944 = vsub.f32 %v1926, %v1940
        %v1945 = vmul.f32 %v1941, 1.442695
        %v1946 = vpow.pop %v1945
        %v1947 = vmul.f32 %v1942, 1.442695
        %v1948 = vpow.pop %v1947
        %v1949 = vmul.f32 %v1943, 1.442695
        %v1950 = vpow.pop %v1949
        %v1951 = vmul.f32 %v1944, 1.442695
        %v1952 = vpow.pop %v1951
        %v1953 = vsel %vm1540, %v1946, 0.0
        %1954 = vadd.xlane.f32.xlu0 %v1953
        %v1955 = vpop.xlane.xlu0 %1954
        %v1956 = vsel %vm1540, %v1948, 0.0
        %1957 = vadd.xlane.f32.xlu0 %v1956
        %v1958 = vpop.xlane.xlu0 %1957
        %v1959 = vsel %vm1540, %v1950, 0.0
        %1960 = vadd.xlane.f32.xlu0 %v1959
        %v1961 = vpop.xlane.xlu0 %1960
        %v1962 = vsel %vm1540, %v1952, 0.0
        %1963 = vadd.xlane.f32.xlu0 %v1962
        %v1964 = vpop.xlane.xlu0 %1963
        %v1965 = vrcp.pop %v1955
        %v1966 = vrcp.pop %v1958
        %v1967 = vrcp.pop %v1961
        %v1968 = vrcp.pop %v1964
        %v1969 = vmul.f32 %v1946, %v1965
        %v1970 = vmul.f32 %v1948, %v1966
        %v1971 = vmul.f32 %v1950, %v1967
        %v1972 = vmul.f32 %v1952, %v1968
        %1975 = vrot.lane.b32.xlu0 %v1327, 96
        %v1976 = vpop.permute.xlu0 %1975
        %1977 = vrot.lane.b32.xlu0 %v1332, 96
        %v1978 = vpop.permute.xlu0 %1977
        %v1982 = vsel %vm1540, %v1969, 0
        %v1985 = vsel %vm1540, %v1970, 0
        %1987 = vmatprep.subr.mxu0 0.0
        %1988 = vmatpush1.msra.mxu0 %v1976
        %1989 = vmatprep.subr.mxu0 0.0
        %1990 = vmatpush1.msra.mxu0 %v1978
        %1991 = vmatprep.subr.mxu0 0.0
        %1992 = vmatpush1.msra.mxu0 0.0
        %1993 = vmatprep.subr.mxu0 0.0
        %1994 = vmatpush1.msra.mxu0 0.0
        %1995 = vmatprep.subr.mxu0 0.0
        %1996 = vmatpush1.msra.mxu0 0.0
        %1997 = vmatprep.subr.mxu0 0.0
        %1998 = vmatpush1.msra.mxu0 0.0
        %1999 = vmatprep.subr.mxu0 0.0
        %2000 = vmatpush1.msra.mxu0 0.0
        %2001 = vmatprep.subr.mxu0 0.0
        %2002 = vmatpush1.msra.mxu0 0.0
        %2003 = vmatprep.subr.mxu0 0.0
        %2004 = vmatpush1.msra.mxu0 0.0
        %2005 = vmatprep.subr.mxu0 0.0
        %2006 = vmatpush1.msra.mxu0 0.0
        %2007 = vmatprep.subr.mxu0 0.0
        %2008 = vmatpush1.msra.mxu0 0.0
        %2009 = vmatprep.subr.mxu0 0.0
        %2010 = vmatpush1.msra.mxu0 0.0
        %2011 = vmatprep.subr.mxu0 0.0
        %2012 = vmatpush1.msra.mxu0 0.0
        %2013 = vmatprep.subr.mxu0 0.0
        %2014 = vmatpush1.msra.mxu0 0.0
        %2015 = vmatprep.subr.mxu0 0.0
        %2016 = vmatpush1.msra.mxu0 0.0
        %2017 = vmatprep.subr.mxu0 0.0
        %2018 = vmatpush1.msra.mxu0 0.0
        %2019 = vmatprep.subr.mxu0 0.0
        %2020 = vmatpush1.msra.mxu0 0.0
        %2021 = vmatprep.subr.mxu0 0.0
        %2022 = vmatpush1.msra.mxu0 0.0
        %2023 = vmatprep.subr.mxu0 0.0
        %2024 = vmatpush1.msra.mxu0 0.0
        %2025 = vmatprep.subr.mxu0 0.0
        %2026 = vmatpush1.msra.mxu0 0.0
        %2027 = vmatprep.subr.mxu0 0.0
        %2028 = vmatpush1.msra.mxu0 0.0
        %2029 = vmatprep.subr.mxu0 0.0
        %2030 = vmatpush1.msra.mxu0 0.0
        %2031 = vmatprep.subr.mxu0 0.0
        %2032 = vmatpush1.msra.mxu0 0.0
        %2033 = vmatprep.subr.mxu0 0.0
        %2034 = vmatpush1.msra.mxu0 0.0
        %2035 = vmatprep.subr.mxu0 0.0
        %2036 = vmatpush1.msra.mxu0 0.0
        %2037 = vmatprep.subr.mxu0 0.0
        %2038 = vmatpush1.msra.mxu0 0.0
        %2039 = vmatprep.subr.mxu0 0.0
        %2040 = vmatpush1.msra.mxu0 0.0
        %2041 = vmatprep.subr.mxu0 0.0
        %2042 = vmatpush1.msra.mxu0 0.0
        %2043 = vmatprep.subr.mxu0 0.0
        %2044 = vmatpush1.msra.mxu0 0.0
        %2045 = vmatprep.subr.mxu0 0.0
        %2046 = vmatpush1.msra.mxu0 0.0
        %2047 = vmatprep.subr.mxu0 0.0
        %2048 = vmatpush1.msra.mxu0 0.0
        %2049 = vmatprep.subr.mxu0 0.0
        %2050 = vmatpush1.msra.mxu0 0.0
        %2051 = vmatprep.mubr.f32.mxu0 0.0
        %2052 = vmatmul.mubr.f32.gmra.mrb[0].mxu0 %v1982
        %v2053 = vpop.f32.mrb[0].mxu0
        %v2054 = vadd.f32 0.0, %v2053
        %v2055 = vpop.f32.mrb[0].mxu0
        %2056 = vmatprep.mubr.f32.mxu0 0.0
        %2057 = vmatmul.mubr.f32.gmra.mrb[0].mxu0 %v1985
        %v2058 = vpop.f32.mrb[0].mxu0
        %v2059 = vadd.f32 0.0, %v2058
        %v2060 = vpop.f32.mrb[0].mxu0
        %2061 = vdwg.mxu0
        %2064 = vrot.lane.b32.xlu0 %v1337, 96
        %v2065 = vpop.permute.xlu0 %2064
        %2066 = vrot.lane.b32.xlu0 %v1342, 96
        %v2067 = vpop.permute.xlu0 %2066
        %v2071 = vsel %vm1540, %v1971, 0
        %v2074 = vsel %vm1540, %v1972, 0
        %2076 = vmatprep.subr.mxu0 0.0
        %2077 = vmatpush1.msra.mxu0 %v2065
        %2078 = vmatprep.subr.mxu0 0.0
        %2079 = vmatpush1.msra.mxu0 %v2067
        %2080 = vmatprep.subr.mxu0 0.0
        %2081 = vmatpush1.msra.mxu0 0.0
        %2082 = vmatprep.subr.mxu0 0.0
        %2083 = vmatpush1.msra.mxu0 0.0
        %2084 = vmatprep.subr.mxu0 0.0
        %2085 = vmatpush1.msra.mxu0 0.0
        %2086 = vmatprep.subr.mxu0 0.0
        %2087 = vmatpush1.msra.mxu0 0.0
        %2088 = vmatprep.subr.mxu0 0.0
        %2089 = vmatpush1.msra.mxu0 0.0
        %2090 = vmatprep.subr.mxu0 0.0
        %2091 = vmatpush1.msra.mxu0 0.0
        %2092 = vmatprep.subr.mxu0 0.0
        %2093 = vmatpush1.msra.mxu0 0.0
        %2094 = vmatprep.subr.mxu0 0.0
        %2095 = vmatpush1.msra.mxu0 0.0
        %2096 = vmatprep.subr.mxu0 0.0
        %2097 = vmatpush1.msra.mxu0 0.0
        %2098 = vmatprep.subr.mxu0 0.0
        %2099 = vmatpush1.msra.mxu0 0.0
        %2100 = vmatprep.subr.mxu0 0.0
        %2101 = vmatpush1.msra.mxu0 0.0
        %2102 = vmatprep.subr.mxu0 0.0
        %2103 = vmatpush1.msra.mxu0 0.0
        %2104 = vmatprep.subr.mxu0 0.0
        %2105 = vmatpush1.msra.mxu0 0.0
        %2106 = vmatprep.subr.mxu0 0.0
        %2107 = vmatpush1.msra.mxu0 0.0
        %2108 = vmatprep.subr.mxu0 0.0
        %2109 = vmatpush1.msra.mxu0 0.0
        %2110 = vmatprep.subr.mxu0 0.0
        %2111 = vmatpush1.msra.mxu0 0.0
        %2112 = vmatprep.subr.mxu0 0.0
        %2113 = vmatpush1.msra.mxu0 0.0
        %2114 = vmatprep.subr.mxu0 0.0
        %2115 = vmatpush1.msra.mxu0 0.0
        %2116 = vmatprep.subr.mxu0 0.0
        %2117 = vmatpush1.msra.mxu0 0.0
        %2118 = vmatprep.subr.mxu0 0.0
        %2119 = vmatpush1.msra.mxu0 0.0
        %2120 = vmatprep.subr.mxu0 0.0
        %2121 = vmatpush1.msra.mxu0 0.0
        %2122 = vmatprep.subr.mxu0 0.0
        %2123 = vmatpush1.msra.mxu0 0.0
        %2124 = vmatprep.subr.mxu0 0.0
        %2125 = vmatpush1.msra.mxu0 0.0
        %2126 = vmatprep.subr.mxu0 0.0
        %2127 = vmatpush1.msra.mxu0 0.0
        %2128 = vmatprep.subr.mxu0 0.0
        %2129 = vmatpush1.msra.mxu0 0.0
        %2130 = vmatprep.subr.mxu0 0.0
        %2131 = vmatpush1.msra.mxu0 0.0
        %2132 = vmatprep.subr.mxu0 0.0
        %2133 = vmatpush1.msra.mxu0 0.0
        %2134 = vmatprep.subr.mxu0 0.0
        %2135 = vmatpush1.msra.mxu0 0.0
        %2136 = vmatprep.subr.mxu0 0.0
        %2137 = vmatpush1.msra.mxu0 0.0
        %2138 = vmatprep.subr.mxu0 0.0
        %2139 = vmatpush1.msra.mxu0 0.0
        %2140 = vmatprep.mubr.f32.mxu0 0.0
        %2141 = vmatmul.mubr.f32.gmra.mrb[0].mxu0 %v2071
        %v2142 = vpop.f32.mrb[0].mxu0
        %v2143 = vadd.f32 0.0, %v2142
        %v2144 = vpop.f32.mrb[0].mxu0
        %2145 = vmatprep.mubr.f32.mxu0 0.0
        %2146 = vmatmul.mubr.f32.gmra.mrb[0].mxu0 %v2074
        %v2147 = vpop.f32.mrb[0].mxu0
        %v2148 = vadd.f32 0.0, %v2147
        %v2149 = vpop.f32.mrb[0].mxu0
        %2150 = vdwg.mxu0
        %v2152 = vsel %vm1365, %v2054, 0
        %v2155 = vsel %vm1365, %v2059, 0
        %v2158 = vsel %vm1365, %v2143, 0
        %v2161 = vsel %vm1365, %v2148, 0
        %2163 = vmatprep.subr.mxu0 0.0
        %2164 = vmatpush1.msra.mxu0 %v1353
        %2165 = vmatprep.subr.mxu0 0.0
        %2166 = vmatpush1.msra.mxu0 %v1354
        %2167 = vmatprep.subr.mxu0 0.0
        %2168 = vmatpush1.msra.mxu0 %v1355
        %2169 = vmatprep.subr.mxu0 0.0
        %2170 = vmatpush1.msra.mxu0 %v1356
        %2171 = vmatprep.subr.mxu0 0.0
        %2172 = vmatpush1.msra.mxu0 0.0
        %2173 = vmatprep.subr.mxu0 0.0
        %2174 = vmatpush1.msra.mxu0 0.0
        %2175 = vmatprep.subr.mxu0 0.0
        %2176 = vmatpush1.msra.mxu0 0.0
        %2177 = vmatprep.subr.mxu0 0.0
        %2178 = vmatpush1.msra.mxu0 0.0
        %2179 = vmatprep.subr.mxu0 0.0
        %2180 = vmatpush1.msra.mxu0 0.0
        %2181 = vmatprep.subr.mxu0 0.0
        %2182 = vmatpush1.msra.mxu0 0.0
        %2183 = vmatprep.subr.mxu0 0.0
        %2184 = vmatpush1.msra.mxu0 0.0
        %2185 = vmatprep.subr.mxu0 0.0
        %2186 = vmatpush1.msra.mxu0 0.0
        %2187 = vmatprep.subr.mxu0 0.0
        %2188 = vmatpush1.msra.mxu0 0.0
        %2189 = vmatprep.subr.mxu0 0.0
        %2190 = vmatpush1.msra.mxu0 0.0
        %2191 = vmatprep.subr.mxu0 0.0
        %2192 = vmatpush1.msra.mxu0 0.0
        %2193 = vmatprep.subr.mxu0 0.0
        %2194 = vmatpush1.msra.mxu0 0.0
        %2195 = vmatprep.subr.mxu0 0.0
        %2196 = vmatpush1.msra.mxu0 0.0
        %2197 = vmatprep.subr.mxu0 0.0
        %2198 = vmatpush1.msra.mxu0 0.0
        %2199 = vmatprep.subr.mxu0 0.0
        %2200 = vmatpush1.msra.mxu0 0.0
        %2201 = vmatprep.subr.mxu0 0.0
        %2202 = vmatpush1.msra.mxu0 0.0
        %2203 = vmatprep.subr.mxu0 0.0
        %2204 = vmatpush1.msra.mxu0 0.0
        %2205 = vmatprep.subr.mxu0 0.0
        %2206 = vmatpush1.msra.mxu0 0.0
        %2207 = vmatprep.subr.mxu0 0.0
        %2208 = vmatpush1.msra.mxu0 0.0
        %2209 = vmatprep.subr.mxu0 0.0
        %2210 = vmatpush1.msra.mxu0 0.0
        %2211 = vmatprep.subr.mxu0 0.0
        %2212 = vmatpush1.msra.mxu0 0.0
        %2213 = vmatprep.subr.mxu0 0.0
        %2214 = vmatpush1.msra.mxu0 0.0
        %2215 = vmatprep.subr.mxu0 0.0
        %2216 = vmatpush1.msra.mxu0 0.0
        %2217 = vmatprep.subr.mxu0 0.0
        %2218 = vmatpush1.msra.mxu0 0.0
        %2219 = vmatprep.subr.mxu0 0.0
        %2220 = vmatpush1.msra.mxu0 0.0
        %2221 = vmatprep.subr.mxu0 0.0
        %2222 = vmatpush1.msra.mxu0 0.0
        %2223 = vmatprep.subr.mxu0 0.0
        %2224 = vmatpush1.msra.mxu0 0.0
        %2225 = vmatprep.subr.mxu0 0.0
        %2226 = vmatpush1.msra.mxu0 0.0
        %2227 = vmatprep.mubr.f32.mxu0 0.0
        %2228 = vmatmul.mubr.f32.gmra.mrb[0].mxu0 %v2152
        %v2229 = vpop.f32.mrb[0].mxu0
        %v2230 = vadd.f32 0.0, %v2229
        %v2231 = vpop.f32.mrb[0].mxu0
        %2232 = vmatprep.mubr.f32.mxu0 0.0
        %2233 = vmatmul.mubr.f32.gmra.mrb[0].mxu0 %v2155
        %v2234 = vpop.f32.mrb[0].mxu0
        %v2235 = vadd.f32 0.0, %v2234
        %v2236 = vpop.f32.mrb[0].mxu0
        %2237 = vmatprep.mubr.f32.mxu0 0.0
        %2238 = vmatmul.mubr.f32.gmra.mrb[0].mxu0 %v2158
        %v2239 = vpop.f32.mrb[0].mxu0
        %v2240 = vadd.f32 0.0, %v2239
        %v2241 = vpop.f32.mrb[0].mxu0
        %2242 = vmatprep.mubr.f32.mxu0 0.0
        %2243 = vmatmul.mubr.f32.gmra.mrb[0].mxu0 %v2161
        %v2244 = vpop.f32.mrb[0].mxu0
        %v2245 = vadd.f32 0.0, %v2244
        %v2246 = vpop.f32.mrb[0].mxu0
        %2247 = vdwg.mxu0
        %v2249 = vsel %vm1365, %v1658, 0
        %v2252 = vsel %vm1365, %v1663, 0
        %v2255 = vsel %vm1365, %v1739, 0
        %v2258 = vsel %vm1365, %v1744, 0
        %2260 = vmatprep.subr.mxu0 0.0
        %2261 = vmatpush1.msra.mxu0 %v1349
        %2262 = vmatprep.subr.mxu0 0.0
        %2263 = vmatpush1.msra.mxu0 %v1350
        %2264 = vmatprep.subr.mxu0 0.0
        %2265 = vmatpush1.msra.mxu0 %v1351
        %2266 = vmatprep.subr.mxu0 0.0
        %2267 = vmatpush1.msra.mxu0 %v1352
        %2268 = vmatprep.subr.mxu0 0.0
        %2269 = vmatpush1.msra.mxu0 0.0
        %2270 = vmatprep.subr.mxu0 0.0
        %2271 = vmatpush1.msra.mxu0 0.0
        %2272 = vmatprep.subr.mxu0 0.0
        %2273 = vmatpush1.msra.mxu0 0.0
        %2274 = vmatprep.subr.mxu0 0.0
        %2275 = vmatpush1.msra.mxu0 0.0
        %2276 = vmatprep.subr.mxu0 0.0
        %2277 = vmatpush1.msra.mxu0 0.0
        %2278 = vmatprep.subr.mxu0 0.0
        %2279 = vmatpush1.msra.mxu0 0.0
        %2280 = vmatprep.subr.mxu0 0.0
        %2281 = vmatpush1.msra.mxu0 0.0
        %2282 = vmatprep.subr.mxu0 0.0
        %2283 = vmatpush1.msra.mxu0 0.0
        %2284 = vmatprep.subr.mxu0 0.0
        %2285 = vmatpush1.msra.mxu0 0.0
        %2286 = vmatprep.subr.mxu0 0.0
        %2287 = vmatpush1.msra.mxu0 0.0
        %2288 = vmatprep.subr.mxu0 0.0
        %2289 = vmatpush1.msra.mxu0 0.0
        %2290 = vmatprep.subr.mxu0 0.0
        %2291 = vmatpush1.msra.mxu0 0.0
        %2292 = vmatprep.subr.mxu0 0.0
        %2293 = vmatpush1.msra.mxu0 0.0
        %2294 = vmatprep.subr.mxu0 0.0
        %2295 = vmatpush1.msra.mxu0 0.0
        %2296 = vmatprep.subr.mxu0 0.0
        %2297 = vmatpush1.msra.mxu0 0.0
        %2298 = vmatprep.subr.mxu0 0.0
        %2299 = vmatpush1.msra.mxu0 0.0
        %2300 = vmatprep.subr.mxu0 0.0
        %2301 = vmatpush1.msra.mxu0 0.0
        %2302 = vmatprep.subr.mxu0 0.0
        %2303 = vmatpush1.msra.mxu0 0.0
        %2304 = vmatprep.subr.mxu0 0.0
        %2305 = vmatpush1.msra.mxu0 0.0
        %2306 = vmatprep.subr.mxu0 0.0
        %2307 = vmatpush1.msra.mxu0 0.0
        %2308 = vmatprep.subr.mxu0 0.0
        %2309 = vmatpush1.msra.mxu0 0.0
        %2310 = vmatprep.subr.mxu0 0.0
        %2311 = vmatpush1.msra.mxu0 0.0
        %2312 = vmatprep.subr.mxu0 0.0
        %2313 = vmatpush1.msra.mxu0 0.0
        %2314 = vmatprep.subr.mxu0 0.0
        %2315 = vmatpush1.msra.mxu0 0.0
        %2316 = vmatprep.subr.mxu0 0.0
        %2317 = vmatpush1.msra.mxu0 0.0
        %2318 = vmatprep.subr.mxu0 0.0
        %2319 = vmatpush1.msra.mxu0 0.0
        %2320 = vmatprep.subr.mxu0 0.0
        %2321 = vmatpush1.msra.mxu0 0.0
        %2322 = vmatprep.subr.mxu0 0.0
        %2323 = vmatpush1.msra.mxu0 0.0
        %2324 = vmatprep.mubr.f32.mxu0 0.0
        %2325 = vmatmul.mubr.f32.gmra.mrb[0].mxu0 %v2249
        %v2326 = vpop.f32.mrb[0].mxu0
        %v2327 = vadd.f32 %v2230, %v2326
        %v2328 = vpop.f32.mrb[0].mxu0
        %2329 = vmatprep.mubr.f32.mxu0 0.0
        %2330 = vmatmul.mubr.f32.gmra.mrb[0].mxu0 %v2252
        %v2331 = vpop.f32.mrb[0].mxu0
        %v2332 = vadd.f32 %v2235, %v2331
        %v2333 = vpop.f32.mrb[0].mxu0
        %2334 = vmatprep.mubr.f32.mxu0 0.0
        %2335 = vmatmul.mubr.f32.gmra.mrb[0].mxu0 %v2255
        %v2336 = vpop.f32.mrb[0].mxu0
        %v2337 = vadd.f32 %v2240, %v2336
        %v2338 = vpop.f32.mrb[0].mxu0
        %2339 = vmatprep.mubr.f32.mxu0 0.0
        %2340 = vmatmul.mubr.f32.gmra.mrb[0].mxu0 %v2258
        %v2341 = vpop.f32.mrb[0].mxu0
        %v2342 = vadd.f32 %v2245, %v2341
        %v2343 = vpop.f32.mrb[0].mxu0
        %2344 = vdwg.mxu0
        %2345 = vrot.lane.b32.xlu0 %v1345, 64
        %v2346 = vpop.permute.xlu0 %2345
        %2347 = vrot.lane.b32.xlu0 %v1346, 64
        %v2348 = vpop.permute.xlu0 %2347
        %2349 = vrot.lane.b32.xlu0 %v1240, 64
        %v2350 = vpop.permute.xlu0 %2349
        %2351 = vrot.lane.b32.xlu0 %v1246, 64
        %v2352 = vpop.permute.xlu0 %2351
        %v2353 = vsel %vm1365, %v2346, 0
        %v2355 = vsel %vm1365, %v2348, 0
        %v2357 = vsel %vm1365, %v2350, 0
        %v2359 = vsel %vm1365, %v2352, 0
        %2361 = vmatprep.subr.mxu0 0.0
        %2362 = vmatpush1.xpose.msra.mxu0 %v2357
        %2363 = vmatprep.subr.mxu0 0.0
        %2364 = vmatpush1.xpose.msra.mxu0 %v2359
        %2365 = vmatprep.subr.mxu0 0.0
        %2366 = vmatpush1.xpose.msra.mxu0 0.0
        %2367 = vmatprep.subr.mxu0 0.0
        %2368 = vmatpush1.xpose.msra.mxu0 0.0
        %2369 = vmatprep.subr.mxu0 0.0
        %2370 = vmatpush1.xpose.msra.mxu0 0.0
        %2371 = vmatprep.subr.mxu0 0.0
        %2372 = vmatpush1.xpose.msra.mxu0 0.0
        %2373 = vmatprep.subr.mxu0 0.0
        %2374 = vmatpush1.xpose.msra.mxu0 0.0
        %2375 = vmatprep.subr.mxu0 0.0
        %2376 = vmatpush1.xpose.msra.mxu0 0.0
        %2377 = vmatprep.subr.mxu0 0.0
        %2378 = vmatpush1.xpose.msra.mxu0 0.0
        %2379 = vmatprep.subr.mxu0 0.0
        %2380 = vmatpush1.xpose.msra.mxu0 0.0
        %2381 = vmatprep.subr.mxu0 0.0
        %2382 = vmatpush1.xpose.msra.mxu0 0.0
        %2383 = vmatprep.subr.mxu0 0.0
        %2384 = vmatpush1.xpose.msra.mxu0 0.0
        %2385 = vmatprep.subr.mxu0 0.0
        %2386 = vmatpush1.xpose.msra.mxu0 0.0
        %2387 = vmatprep.subr.mxu0 0.0
        %2388 = vmatpush1.xpose.msra.mxu0 0.0
        %2389 = vmatprep.subr.mxu0 0.0
        %2390 = vmatpush1.xpose.msra.mxu0 0.0
        %2391 = vmatprep.subr.mxu0 0.0
        %2392 = vmatpush1.xpose.msra.mxu0 0.0
        %2393 = vmatprep.subr.mxu0 0.0
        %2394 = vmatpush1.xpose.msra.mxu0 0.0
        %2395 = vmatprep.subr.mxu0 0.0
        %2396 = vmatpush1.xpose.msra.mxu0 0.0
        %2397 = vmatprep.subr.mxu0 0.0
        %2398 = vmatpush1.xpose.msra.mxu0 0.0
        %2399 = vmatprep.subr.mxu0 0.0
        %2400 = vmatpush1.xpose.msra.mxu0 0.0
        %2401 = vmatprep.subr.mxu0 0.0
        %2402 = vmatpush1.xpose.msra.mxu0 0.0
        %2403 = vmatprep.subr.mxu0 0.0
        %2404 = vmatpush1.xpose.msra.mxu0 0.0
        %2405 = vmatprep.subr.mxu0 0.0
        %2406 = vmatpush1.xpose.msra.mxu0 0.0
        %2407 = vmatprep.subr.mxu0 0.0
        %2408 = vmatpush1.xpose.msra.mxu0 0.0
        %2409 = vmatprep.subr.mxu0 0.0
        %2410 = vmatpush1.xpose.msra.mxu0 0.0
        %2411 = vmatprep.subr.mxu0 0.0
        %2412 = vmatpush1.xpose.msra.mxu0 0.0
        %2413 = vmatprep.subr.mxu0 0.0
        %2414 = vmatpush1.xpose.msra.mxu0 0.0
        %2415 = vmatprep.subr.mxu0 0.0
        %2416 = vmatpush1.xpose.msra.mxu0 0.0
        %2417 = vmatprep.subr.mxu0 0.0
        %2418 = vmatpush1.xpose.msra.mxu0 0.0
        %2419 = vmatprep.subr.mxu0 0.0
        %2420 = vmatpush1.xpose.msra.mxu0 0.0
        %2421 = vmatprep.subr.mxu0 0.0
        %2422 = vmatpush1.xpose.msra.mxu0 0.0
        %2423 = vmatprep.subr.mxu0 0.0
        %2424 = vmatpush1.xpose.msra.mxu0 0.0
        %2425 = vmatprep.mubr.f32.mxu0 0.0
        %2426 = vmatmul.mubr.f32.gmra.mrb[0].mxu0 %v2353
        %v2427 = vpop.f32.mrb[0].mxu0
        %v2428 = vadd.f32 0.0, %v2427
        %v2429 = vpop.f32.mrb[0].mxu0
        %2430 = vmatprep.mubr.f32.mxu0 0.0
        %2431 = vmatmul.mubr.f32.gmra.mrb[0].mxu0 %v2355
        %v2432 = vpop.f32.mrb[0].mxu0
        %v2433 = vadd.f32 0.0, %v2432
        %v2434 = vpop.f32.mrb[0].mxu0
        %2435 = vdwg.mxu0
        %2436 = vrot.lane.b32.xlu0 %v1347, 64
        %v2437 = vpop.permute.xlu0 %2436
        %2438 = vrot.lane.b32.xlu0 %v1348, 64
        %v2439 = vpop.permute.xlu0 %2438
        %2440 = vrot.lane.b32.xlu0 %v1252, 64
        %v2441 = vpop.permute.xlu0 %2440
        %2442 = vrot.lane.b32.xlu0 %v1258, 64
        %v2443 = vpop.permute.xlu0 %2442
        %v2444 = vsel %vm1365, %v2437, 0
        %v2446 = vsel %vm1365, %v2439, 0
        %v2448 = vsel %vm1365, %v2441, 0
        %v2450 = vsel %vm1365, %v2443, 0
        %2452 = vmatprep.subr.mxu0 0.0
        %2453 = vmatpush1.xpose.msra.mxu0 %v2448
        %2454 = vmatprep.subr.mxu0 0.0
        %2455 = vmatpush1.xpose.msra.mxu0 %v2450
        %2456 = vmatprep.subr.mxu0 0.0
        %2457 = vmatpush1.xpose.msra.mxu0 0.0
        %2458 = vmatprep.subr.mxu0 0.0
        %2459 = vmatpush1.xpose.msra.mxu0 0.0
        %2460 = vmatprep.subr.mxu0 0.0
        %2461 = vmatpush1.xpose.msra.mxu0 0.0
        %2462 = vmatprep.subr.mxu0 0.0
        %2463 = vmatpush1.xpose.msra.mxu0 0.0
        %2464 = vmatprep.subr.mxu0 0.0
        %2465 = vmatpush1.xpose.msra.mxu0 0.0
        %2466 = vmatprep.subr.mxu0 0.0
        %2467 = vmatpush1.xpose.msra.mxu0 0.0
        %2468 = vmatprep.subr.mxu0 0.0
        %2469 = vmatpush1.xpose.msra.mxu0 0.0
        %2470 = vmatprep.subr.mxu0 0.0
        %2471 = vmatpush1.xpose.msra.mxu0 0.0
        %2472 = vmatprep.subr.mxu0 0.0
        %2473 = vmatpush1.xpose.msra.mxu0 0.0
        %2474 = vmatprep.subr.mxu0 0.0
        %2475 = vmatpush1.xpose.msra.mxu0 0.0
        %2476 = vmatprep.subr.mxu0 0.0
        %2477 = vmatpush1.xpose.msra.mxu0 0.0
        %2478 = vmatprep.subr.mxu0 0.0
        %2479 = vmatpush1.xpose.msra.mxu0 0.0
        %2480 = vmatprep.subr.mxu0 0.0
        %2481 = vmatpush1.xpose.msra.mxu0 0.0
        %2482 = vmatprep.subr.mxu0 0.0
        %2483 = vmatpush1.xpose.msra.mxu0 0.0
        %2484 = vmatprep.subr.mxu0 0.0
        %2485 = vmatpush1.xpose.msra.mxu0 0.0
        %2486 = vmatprep.subr.mxu0 0.0
        %2487 = vmatpush1.xpose.msra.mxu0 0.0
        %2488 = vmatprep.subr.mxu0 0.0
        %2489 = vmatpush1.xpose.msra.mxu0 0.0
        %2490 = vmatprep.subr.mxu0 0.0
        %2491 = vmatpush1.xpose.msra.mxu0 0.0
        %2492 = vmatprep.subr.mxu0 0.0
        %2493 = vmatpush1.xpose.msra.mxu0 0.0
        %2494 = vmatprep.subr.mxu0 0.0
        %2495 = vmatpush1.xpose.msra.mxu0 0.0
        %2496 = vmatprep.subr.mxu0 0.0
        %2497 = vmatpush1.xpose.msra.mxu0 0.0
        %2498 = vmatprep.subr.mxu0 0.0
        %2499 = vmatpush1.xpose.msra.mxu0 0.0
        %2500 = vmatprep.subr.mxu0 0.0
        %2501 = vmatpush1.xpose.msra.mxu0 0.0
        %2502 = vmatprep.subr.mxu0 0.0
        %2503 = vmatpush1.xpose.msra.mxu0 0.0
        %2504 = vmatprep.subr.mxu0 0.0
        %2505 = vmatpush1.xpose.msra.mxu0 0.0
        %2506 = vmatprep.subr.mxu0 0.0
        %2507 = vmatpush1.xpose.msra.mxu0 0.0
        %2508 = vmatprep.subr.mxu0 0.0
        %2509 = vmatpush1.xpose.msra.mxu0 0.0
        %2510 = vmatprep.subr.mxu0 0.0
        %2511 = vmatpush1.xpose.msra.mxu0 0.0
        %2512 = vmatprep.subr.mxu0 0.0
        %2513 = vmatpush1.xpose.msra.mxu0 0.0
        %2514 = vmatprep.subr.mxu0 0.0
        %2515 = vmatpush1.xpose.msra.mxu0 0.0
        %2516 = vmatprep.mubr.f32.mxu0 0.0
        %2517 = vmatmul.mubr.f32.gmra.mrb[0].mxu0 %v2444
        %v2518 = vpop.f32.mrb[0].mxu0
        %v2519 = vadd.f32 0.0, %v2518
        %v2520 = vpop.f32.mrb[0].mxu0
        %2521 = vmatprep.mubr.f32.mxu0 0.0
        %2522 = vmatmul.mubr.f32.gmra.mrb[0].mxu0 %v2446
        %v2523 = vpop.f32.mrb[0].mxu0
        %v2524 = vadd.f32 0.0, %v2523
        %v2525 = vpop.f32.mrb[0].mxu0
        %2526 = vdwg.mxu0
        %v2527 = vsel %vm1540, %v2428, -inf
        %2528 = vmax.xlane.f32.xlu0 %v2527
        %v2529 = vpop.xlane.xlu0 %2528
        %v2530 = vsel %vm1540, %v2433, -inf
        %2531 = vmax.xlane.f32.xlu0 %v2530
        %v2532 = vpop.xlane.xlu0 %2531
        %v2533 = vsel %vm1540, %v2519, -inf
        %2534 = vmax.xlane.f32.xlu0 %v2533
        %v2535 = vpop.xlane.xlu0 %2534
        %v2536 = vsel %vm1540, %v2524, -inf
        %2537 = vmax.xlane.f32.xlu0 %v2536
        %v2538 = vpop.xlane.xlu0 %2537
        %v2539 = vsub.f32 %v2428, %v2529
        %v2540 = vsub.f32 %v2433, %v2532
        %v2541 = vsub.f32 %v2519, %v2535
        %v2542 = vsub.f32 %v2524, %v2538
        %v2543 = vmul.f32 %v2539, 1.442695
        %v2544 = vpow.pop %v2543
        %v2545 = vmul.f32 %v2540, 1.442695
        %v2546 = vpow.pop %v2545
        %v2547 = vmul.f32 %v2541, 1.442695
        %v2548 = vpow.pop %v2547
        %v2549 = vmul.f32 %v2542, 1.442695
        %v2550 = vpow.pop %v2549
        %v2551 = vsel %vm1540, %v2544, 0.0
        %2552 = vadd.xlane.f32.xlu0 %v2551
        %v2553 = vpop.xlane.xlu0 %2552
        %v2554 = vsel %vm1540, %v2546, 0.0
        %2555 = vadd.xlane.f32.xlu0 %v2554
        %v2556 = vpop.xlane.xlu0 %2555
        %v2557 = vsel %vm1540, %v2548, 0.0
        %2558 = vadd.xlane.f32.xlu0 %v2557
        %v2559 = vpop.xlane.xlu0 %2558
        %v2560 = vsel %vm1540, %v2550, 0.0
        %2561 = vadd.xlane.f32.xlu0 %v2560
        %v2562 = vpop.xlane.xlu0 %2561
        %v2563 = vrcp.pop %v2553
        %v2564 = vrcp.pop %v2556
        %v2565 = vrcp.pop %v2559
        %v2566 = vrcp.pop %v2562
        %v2567 = vmul.f32 %v2544, %v2563
        %v2568 = vmul.f32 %v2546, %v2564
        %v2569 = vmul.f32 %v2548, %v2565
        %v2570 = vmul.f32 %v2550, %v2566
        %2571 = vrot.lane.b32.xlu0 %v1327, 64
        %v2572 = vpop.permute.xlu0 %2571
        %2573 = vrot.lane.b32.xlu0 %v1332, 64
        %v2574 = vpop.permute.xlu0 %2573
        %v2578 = vsel %vm1540, %v2567, 0
        %v2581 = vsel %vm1540, %v2568, 0
        %2583 = vmatprep.subr.mxu0 0.0
        %2584 = vmatpush1.msra.mxu0 %v2572
        %2585 = vmatprep.subr.mxu0 0.0
        %2586 = vmatpush1.msra.mxu0 %v2574
        %2587 = vmatprep.subr.mxu0 0.0
        %2588 = vmatpush1.msra.mxu0 0.0
        %2589 = vmatprep.subr.mxu0 0.0
        %2590 = vmatpush1.msra.mxu0 0.0
        %2591 = vmatprep.subr.mxu0 0.0
        %2592 = vmatpush1.msra.mxu0 0.0
        %2593 = vmatprep.subr.mxu0 0.0
        %2594 = vmatpush1.msra.mxu0 0.0
        %2595 = vmatprep.subr.mxu0 0.0
        %2596 = vmatpush1.msra.mxu0 0.0
        %2597 = vmatprep.subr.mxu0 0.0
        %2598 = vmatpush1.msra.mxu0 0.0
        %2599 = vmatprep.subr.mxu0 0.0
        %2600 = vmatpush1.msra.mxu0 0.0
        %2601 = vmatprep.subr.mxu0 0.0
        %2602 = vmatpush1.msra.mxu0 0.0
        %2603 = vmatprep.subr.mxu0 0.0
        %2604 = vmatpush1.msra.mxu0 0.0
        %2605 = vmatprep.subr.mxu0 0.0
        %2606 = vmatpush1.msra.mxu0 0.0
        %2607 = vmatprep.subr.mxu0 0.0
        %2608 = vmatpush1.msra.mxu0 0.0
        %2609 = vmatprep.subr.mxu0 0.0
        %2610 = vmatpush1.msra.mxu0 0.0
        %2611 = vmatprep.subr.mxu0 0.0
        %2612 = vmatpush1.msra.mxu0 0.0
        %2613 = vmatprep.subr.mxu0 0.0
        %2614 = vmatpush1.msra.mxu0 0.0
        %2615 = vmatprep.subr.mxu0 0.0
        %2616 = vmatpush1.msra.mxu0 0.0
        %2617 = vmatprep.subr.mxu0 0.0
        %2618 = vmatpush1.msra.mxu0 0.0
        %2619 = vmatprep.subr.mxu0 0.0
        %2620 = vmatpush1.msra.mxu0 0.0
        %2621 = vmatprep.subr.mxu0 0.0
        %2622 = vmatpush1.msra.mxu0 0.0
        %2623 = vmatprep.subr.mxu0 0.0
        %2624 = vmatpush1.msra.mxu0 0.0
        %2625 = vmatprep.subr.mxu0 0.0
        %2626 = vmatpush1.msra.mxu0 0.0
        %2627 = vmatprep.subr.mxu0 0.0
        %2628 = vmatpush1.msra.mxu0 0.0
        %2629 = vmatprep.subr.mxu0 0.0
        %2630 = vmatpush1.msra.mxu0 0.0
        %2631 = vmatprep.subr.mxu0 0.0
        %2632 = vmatpush1.msra.mxu0 0.0
        %2633 = vmatprep.subr.mxu0 0.0
        %2634 = vmatpush1.msra.mxu0 0.0
        %2635 = vmatprep.subr.mxu0 0.0
        %2636 = vmatpush1.msra.mxu0 0.0
        %2637 = vmatprep.subr.mxu0 0.0
        %2638 = vmatpush1.msra.mxu0 0.0
        %2639 = vmatprep.subr.mxu0 0.0
        %2640 = vmatpush1.msra.mxu0 0.0
        %2641 = vmatprep.subr.mxu0 0.0
        %2642 = vmatpush1.msra.mxu0 0.0
        %2643 = vmatprep.subr.mxu0 0.0
        %2644 = vmatpush1.msra.mxu0 0.0
        %2645 = vmatprep.subr.mxu0 0.0
        %2646 = vmatpush1.msra.mxu0 0.0
        %2647 = vmatprep.mubr.f32.mxu0 0.0
        %2648 = vmatmul.mubr.f32.gmra.mrb[0].mxu0 %v2578
        %v2649 = vpop.f32.mrb[0].mxu0
        %v2650 = vadd.f32 0.0, %v2649
        %v2651 = vpop.f32.mrb[0].mxu0
        %2652 = vmatprep.mubr.f32.mxu0 0.0
        %2653 = vmatmul.mubr.f32.gmra.mrb[0].mxu0 %v2581
        %v2654 = vpop.f32.mrb[0].mxu0
        %v2655 = vadd.f32 0.0, %v2654
        %v2656 = vpop.f32.mrb[0].mxu0
        %2657 = vdwg.mxu0
        %2658 = vrot.lane.b32.xlu0 %v1337, 64
        %v2659 = vpop.permute.xlu0 %2658
        %2660 = vrot.lane.b32.xlu0 %v1342, 64
        %v2661 = vpop.permute.xlu0 %2660
        %v2665 = vsel %vm1540, %v2569, 0
        %v2668 = vsel %vm1540, %v2570, 0
        %2670 = vmatprep.subr.mxu0 0.0
        %2671 = vmatpush1.msra.mxu0 %v2659
        %2672 = vmatprep.subr.mxu0 0.0
        %2673 = vmatpush1.msra.mxu0 %v2661
        %2674 = vmatprep.subr.mxu0 0.0
        %2675 = vmatpush1.msra.mxu0 0.0
        %2676 = vmatprep.subr.mxu0 0.0
        %2677 = vmatpush1.msra.mxu0 0.0
        %2678 = vmatprep.subr.mxu0 0.0
        %2679 = vmatpush1.msra.mxu0 0.0
        %2680 = vmatprep.subr.mxu0 0.0
        %2681 = vmatpush1.msra.mxu0 0.0
        %2682 = vmatprep.subr.mxu0 0.0
        %2683 = vmatpush1.msra.mxu0 0.0
        %2684 = vmatprep.subr.mxu0 0.0
        %2685 = vmatpush1.msra.mxu0 0.0
        %2686 = vmatprep.subr.mxu0 0.0
        %2687 = vmatpush1.msra.mxu0 0.0
        %2688 = vmatprep.subr.mxu0 0.0
        %2689 = vmatpush1.msra.mxu0 0.0
        %2690 = vmatprep.subr.mxu0 0.0
        %2691 = vmatpush1.msra.mxu0 0.0
        %2692 = vmatprep.subr.mxu0 0.0
        %2693 = vmatpush1.msra.mxu0 0.0
        %2694 = vmatprep.subr.mxu0 0.0
        %2695 = vmatpush1.msra.mxu0 0.0
        %2696 = vmatprep.subr.mxu0 0.0
        %2697 = vmatpush1.msra.mxu0 0.0
        %2698 = vmatprep.subr.mxu0 0.0
        %2699 = vmatpush1.msra.mxu0 0.0
        %2700 = vmatprep.subr.mxu0 0.0
        %2701 = vmatpush1.msra.mxu0 0.0
        %2702 = vmatprep.subr.mxu0 0.0
        %2703 = vmatpush1.msra.mxu0 0.0
        %2704 = vmatprep.subr.mxu0 0.0
        %2705 = vmatpush1.msra.mxu0 0.0
        %2706 = vmatprep.subr.mxu0 0.0
        %2707 = vmatpush1.msra.mxu0 0.0
        %2708 = vmatprep.subr.mxu0 0.0
        %2709 = vmatpush1.msra.mxu0 0.0
        %2710 = vmatprep.subr.mxu0 0.0
        %2711 = vmatpush1.msra.mxu0 0.0
        %2712 = vmatprep.subr.mxu0 0.0
        %2713 = vmatpush1.msra.mxu0 0.0
        %2714 = vmatprep.subr.mxu0 0.0
        %2715 = vmatpush1.msra.mxu0 0.0
        %2716 = vmatprep.subr.mxu0 0.0
        %2717 = vmatpush1.msra.mxu0 0.0
        %2718 = vmatprep.subr.mxu0 0.0
        %2719 = vmatpush1.msra.mxu0 0.0
        %2720 = vmatprep.subr.mxu0 0.0
        %2721 = vmatpush1.msra.mxu0 0.0
        %2722 = vmatprep.subr.mxu0 0.0
        %2723 = vmatpush1.msra.mxu0 0.0
        %2724 = vmatprep.subr.mxu0 0.0
        %2725 = vmatpush1.msra.mxu0 0.0
        %2726 = vmatprep.subr.mxu0 0.0
        %2727 = vmatpush1.msra.mxu0 0.0
        %2728 = vmatprep.subr.mxu0 0.0
        %2729 = vmatpush1.msra.mxu0 0.0
        %2730 = vmatprep.subr.mxu0 0.0
        %2731 = vmatpush1.msra.mxu0 0.0
        %2732 = vmatprep.subr.mxu0 0.0
        %2733 = vmatpush1.msra.mxu0 0.0
        %2734 = vmatprep.mubr.f32.mxu0 0.0
        %2735 = vmatmul.mubr.f32.gmra.mrb[0].mxu0 %v2665
        %v2736 = vpop.f32.mrb[0].mxu0
        %v2737 = vadd.f32 0.0, %v2736
        %v2738 = vpop.f32.mrb[0].mxu0
        %2739 = vmatprep.mubr.f32.mxu0 0.0
        %2740 = vmatmul.mubr.f32.gmra.mrb[0].mxu0 %v2668
        %v2741 = vpop.f32.mrb[0].mxu0
        %v2742 = vadd.f32 0.0, %v2741
        %v2743 = vpop.f32.mrb[0].mxu0
        %2744 = vdwg.mxu0
        %v2746 = vsel %vm1365, %v2650, 0
        %v2749 = vsel %vm1365, %v2655, 0
        %v2752 = vsel %vm1365, %v2737, 0
        %v2755 = vsel %vm1365, %v2742, 0
        %2757 = vmatprep.subr.mxu0 0.0
        %2758 = vmatpush1.msra.mxu0 %v1357
        %2759 = vmatprep.subr.mxu0 0.0
        %2760 = vmatpush1.msra.mxu0 %v1358
        %2761 = vmatprep.subr.mxu0 0.0
        %2762 = vmatpush1.msra.mxu0 %v1359
        %2763 = vmatprep.subr.mxu0 0.0
        %2764 = vmatpush1.msra.mxu0 %v1360
        %2765 = vmatprep.subr.mxu0 0.0
        %2766 = vmatpush1.msra.mxu0 0.0
        %2767 = vmatprep.subr.mxu0 0.0
        %2768 = vmatpush1.msra.mxu0 0.0
        %2769 = vmatprep.subr.mxu0 0.0
        %2770 = vmatpush1.msra.mxu0 0.0
        %2771 = vmatprep.subr.mxu0 0.0
        %2772 = vmatpush1.msra.mxu0 0.0
        %2773 = vmatprep.subr.mxu0 0.0
        %2774 = vmatpush1.msra.mxu0 0.0
        %2775 = vmatprep.subr.mxu0 0.0
        %2776 = vmatpush1.msra.mxu0 0.0
        %2777 = vmatprep.subr.mxu0 0.0
        %2778 = vmatpush1.msra.mxu0 0.0
        %2779 = vmatprep.subr.mxu0 0.0
        %2780 = vmatpush1.msra.mxu0 0.0
        %2781 = vmatprep.subr.mxu0 0.0
        %2782 = vmatpush1.msra.mxu0 0.0
        %2783 = vmatprep.subr.mxu0 0.0
        %2784 = vmatpush1.msra.mxu0 0.0
        %2785 = vmatprep.subr.mxu0 0.0
        %2786 = vmatpush1.msra.mxu0 0.0
        %2787 = vmatprep.subr.mxu0 0.0
        %2788 = vmatpush1.msra.mxu0 0.0
        %2789 = vmatprep.subr.mxu0 0.0
        %2790 = vmatpush1.msra.mxu0 0.0
        %2791 = vmatprep.subr.mxu0 0.0
        %2792 = vmatpush1.msra.mxu0 0.0
        %2793 = vmatprep.subr.mxu0 0.0
        %2794 = vmatpush1.msra.mxu0 0.0
        %2795 = vmatprep.subr.mxu0 0.0
        %2796 = vmatpush1.msra.mxu0 0.0
        %2797 = vmatprep.subr.mxu0 0.0
        %2798 = vmatpush1.msra.mxu0 0.0
        %2799 = vmatprep.subr.mxu0 0.0
        %2800 = vmatpush1.msra.mxu0 0.0
        %2801 = vmatprep.subr.mxu0 0.0
        %2802 = vmatpush1.msra.mxu0 0.0
        %2803 = vmatprep.subr.mxu0 0.0
        %2804 = vmatpush1.msra.mxu0 0.0
        %2805 = vmatprep.subr.mxu0 0.0
        %2806 = vmatpush1.msra.mxu0 0.0
        %2807 = vmatprep.subr.mxu0 0.0
        %2808 = vmatpush1.msra.mxu0 0.0
        %2809 = vmatprep.subr.mxu0 0.0
        %2810 = vmatpush1.msra.mxu0 0.0
        %2811 = vmatprep.subr.mxu0 0.0
        %2812 = vmatpush1.msra.mxu0 0.0
        %2813 = vmatprep.subr.mxu0 0.0
        %2814 = vmatpush1.msra.mxu0 0.0
        %2815 = vmatprep.subr.mxu0 0.0
        %2816 = vmatpush1.msra.mxu0 0.0
        %2817 = vmatprep.subr.mxu0 0.0
        %2818 = vmatpush1.msra.mxu0 0.0
        %2819 = vmatprep.subr.mxu0 0.0
        %2820 = vmatpush1.msra.mxu0 0.0
        %2821 = vmatprep.mubr.f32.mxu0 0.0
        %2822 = vmatmul.mubr.f32.gmra.mrb[0].mxu0 %v2746
        %v2823 = vpop.f32.mrb[0].mxu0
        %v2824 = vadd.f32 0.0, %v2823
        %v2825 = vpop.f32.mrb[0].mxu0
        %2826 = vmatprep.mubr.f32.mxu0 0.0
        %2827 = vmatmul.mubr.f32.gmra.mrb[0].mxu0 %v2749
        %v2828 = vpop.f32.mrb[0].mxu0
        %v2829 = vadd.f32 0.0, %v2828
        %v2830 = vpop.f32.mrb[0].mxu0
        %2831 = vmatprep.mubr.f32.mxu0 0.0
        %2832 = vmatmul.mubr.f32.gmra.mrb[0].mxu0 %v2752
        %v2833 = vpop.f32.mrb[0].mxu0
        %v2834 = vadd.f32 0.0, %v2833
        %v2835 = vpop.f32.mrb[0].mxu0
        %2836 = vmatprep.mubr.f32.mxu0 0.0
        %2837 = vmatmul.mubr.f32.gmra.mrb[0].mxu0 %v2755
        %v2838 = vpop.f32.mrb[0].mxu0
        %v2839 = vadd.f32 0.0, %v2838
        %v2840 = vpop.f32.mrb[0].mxu0
        %2841 = vdwg.mxu0
        %v2842 = vadd.f32 %v2327, %v2824
        %v2843 = vadd.f32 %v2332, %v2829
        %v2844 = vadd.f32 %v2337, %v2834
        %v2845 = vadd.f32 %v2342, %v2839
        %2846 = vrot.lane.b32.xlu0 %v1345, 32
        %v2847 = vpop.permute.xlu0 %2846
        %2848 = vrot.lane.b32.xlu0 %v1346, 32
        %v2849 = vpop.permute.xlu0 %2848
        %2850 = vrot.lane.b32.xlu0 %v1240, 32
        %v2851 = vpop.permute.xlu0 %2850
        %2852 = vrot.lane.b32.xlu0 %v1246, 32
        %v2853 = vpop.permute.xlu0 %2852
        %v2854 = vsel %vm1365, %v2847, 0
        %v2856 = vsel %vm1365, %v2849, 0
        %v2858 = vsel %vm1365, %v2851, 0
        %v2860 = vsel %vm1365, %v2853, 0
        %2862 = vmatprep.subr.mxu0 0.0
        %2863 = vmatpush1.xpose.msra.mxu0 %v2858
        %2864 = vmatprep.subr.mxu0 0.0
        %2865 = vmatpush1.xpose.msra.mxu0 %v2860
        %2866 = vmatprep.subr.mxu0 0.0
        %2867 = vmatpush1.xpose.msra.mxu0 0.0
        %2868 = vmatprep.subr.mxu0 0.0
        %2869 = vmatpush1.xpose.msra.mxu0 0.0
        %2870 = vmatprep.subr.mxu0 0.0
        %2871 = vmatpush1.xpose.msra.mxu0 0.0
        %2872 = vmatprep.subr.mxu0 0.0
        %2873 = vmatpush1.xpose.msra.mxu0 0.0
        %2874 = vmatprep.subr.mxu0 0.0
        %2875 = vmatpush1.xpose.msra.mxu0 0.0
        %2876 = vmatprep.subr.mxu0 0.0
        %2877 = vmatpush1.xpose.msra.mxu0 0.0
        %2878 = vmatprep.subr.mxu0 0.0
        %2879 = vmatpush1.xpose.msra.mxu0 0.0
        %2880 = vmatprep.subr.mxu0 0.0
        %2881 = vmatpush1.xpose.msra.mxu0 0.0
        %2882 = vmatprep.subr.mxu0 0.0
        %2883 = vmatpush1.xpose.msra.mxu0 0.0
        %2884 = vmatprep.subr.mxu0 0.0
        %2885 = vmatpush1.xpose.msra.mxu0 0.0
        %2886 = vmatprep.subr.mxu0 0.0
        %2887 = vmatpush1.xpose.msra.mxu0 0.0
        %2888 = vmatprep.subr.mxu0 0.0
        %2889 = vmatpush1.xpose.msra.mxu0 0.0
        %2890 = vmatprep.subr.mxu0 0.0
        %2891 = vmatpush1.xpose.msra.mxu0 0.0
        %2892 = vmatprep.subr.mxu0 0.0
        %2893 = vmatpush1.xpose.msra.mxu0 0.0
        %2894 = vmatprep.subr.mxu0 0.0
        %2895 = vmatpush1.xpose.msra.mxu0 0.0
        %2896 = vmatprep.subr.mxu0 0.0
        %2897 = vmatpush1.xpose.msra.mxu0 0.0
        %2898 = vmatprep.subr.mxu0 0.0
        %2899 = vmatpush1.xpose.msra.mxu0 0.0
        %2900 = vmatprep.subr.mxu0 0.0
        %2901 = vmatpush1.xpose.msra.mxu0 0.0
        %2902 = vmatprep.subr.mxu0 0.0
        %2903 = vmatpush1.xpose.msra.mxu0 0.0
        %2904 = vmatprep.subr.mxu0 0.0
        %2905 = vmatpush1.xpose.msra.mxu0 0.0
        %2906 = vmatprep.subr.mxu0 0.0
        %2907 = vmatpush1.xpose.msra.mxu0 0.0
        %2908 = vmatprep.subr.mxu0 0.0
        %2909 = vmatpush1.xpose.msra.mxu0 0.0
        %2910 = vmatprep.subr.mxu0 0.0
        %2911 = vmatpush1.xpose.msra.mxu0 0.0
        %2912 = vmatprep.subr.mxu0 0.0
        %2913 = vmatpush1.xpose.msra.mxu0 0.0
        %2914 = vmatprep.subr.mxu0 0.0
        %2915 = vmatpush1.xpose.msra.mxu0 0.0
        %2916 = vmatprep.subr.mxu0 0.0
        %2917 = vmatpush1.xpose.msra.mxu0 0.0
        %2918 = vmatprep.subr.mxu0 0.0
        %2919 = vmatpush1.xpose.msra.mxu0 0.0
        %2920 = vmatprep.subr.mxu0 0.0
        %2921 = vmatpush1.xpose.msra.mxu0 0.0
        %2922 = vmatprep.subr.mxu0 0.0
        %2923 = vmatpush1.xpose.msra.mxu0 0.0
        %2924 = vmatprep.subr.mxu0 0.0
        %2925 = vmatpush1.xpose.msra.mxu0 0.0
        %2926 = vmatprep.mubr.f32.mxu0 0.0
        %2927 = vmatmul.mubr.f32.gmra.mrb[0].mxu0 %v2854
        %v2928 = vpop.f32.mrb[0].mxu0
        %v2929 = vadd.f32 0.0, %v2928
        %v2930 = vpop.f32.mrb[0].mxu0
        %2931 = vmatprep.mubr.f32.mxu0 0.0
        %2932 = vmatmul.mubr.f32.gmra.mrb[0].mxu0 %v2856
        %v2933 = vpop.f32.mrb[0].mxu0
        %v2934 = vadd.f32 0.0, %v2933
        %v2935 = vpop.f32.mrb[0].mxu0
        %2936 = vdwg.mxu0
        %2937 = vrot.lane.b32.xlu0 %v1347, 32
        %v2938 = vpop.permute.xlu0 %2937
        %2939 = vrot.lane.b32.xlu0 %v1348, 32
        %v2940 = vpop.permute.xlu0 %2939
        %2941 = vrot.lane.b32.xlu0 %v1252, 32
        %v2942 = vpop.permute.xlu0 %2941
        %2943 = vrot.lane.b32.xlu0 %v1258, 32
        %v2944 = vpop.permute.xlu0 %2943
        %v2945 = vsel %vm1365, %v2938, 0
        %v2947 = vsel %vm1365, %v2940, 0
        %v2949 = vsel %vm1365, %v2942, 0
        %v2951 = vsel %vm1365, %v2944, 0
        %2953 = vmatprep.subr.mxu0 0.0
        %2954 = vmatpush1.xpose.msra.mxu0 %v2949
        %2955 = vmatprep.subr.mxu0 0.0
        %2956 = vmatpush1.xpose.msra.mxu0 %v2951
        %2957 = vmatprep.subr.mxu0 0.0
        %2958 = vmatpush1.xpose.msra.mxu0 0.0
        %2959 = vmatprep.subr.mxu0 0.0
        %2960 = vmatpush1.xpose.msra.mxu0 0.0
        %2961 = vmatprep.subr.mxu0 0.0
        %2962 = vmatpush1.xpose.msra.mxu0 0.0
        %2963 = vmatprep.subr.mxu0 0.0
        %2964 = vmatpush1.xpose.msra.mxu0 0.0
        %2965 = vmatprep.subr.mxu0 0.0
        %2966 = vmatpush1.xpose.msra.mxu0 0.0
        %2967 = vmatprep.subr.mxu0 0.0
        %2968 = vmatpush1.xpose.msra.mxu0 0.0
        %2969 = vmatprep.subr.mxu0 0.0
        %2970 = vmatpush1.xpose.msra.mxu0 0.0
        %2971 = vmatprep.subr.mxu0 0.0
        %2972 = vmatpush1.xpose.msra.mxu0 0.0
        %2973 = vmatprep.subr.mxu0 0.0
        %2974 = vmatpush1.xpose.msra.mxu0 0.0
        %2975 = vmatprep.subr.mxu0 0.0
        %2976 = vmatpush1.xpose.msra.mxu0 0.0
        %2977 = vmatprep.subr.mxu0 0.0
        %2978 = vmatpush1.xpose.msra.mxu0 0.0
        %2979 = vmatprep.subr.mxu0 0.0
        %2980 = vmatpush1.xpose.msra.mxu0 0.0
        %2981 = vmatprep.subr.mxu0 0.0
        %2982 = vmatpush1.xpose.msra.mxu0 0.0
        %2983 = vmatprep.subr.mxu0 0.0
        %2984 = vmatpush1.xpose.msra.mxu0 0.0
        %2985 = vmatprep.subr.mxu0 0.0
        %2986 = vmatpush1.xpose.msra.mxu0 0.0
        %2987 = vmatprep.subr.mxu0 0.0
        %2988 = vmatpush1.xpose.msra.mxu0 0.0
        %2989 = vmatprep.subr.mxu0 0.0
        %2990 = vmatpush1.xpose.msra.mxu0 0.0
        %2991 = vmatprep.subr.mxu0 0.0
        %2992 = vmatpush1.xpose.msra.mxu0 0.0
        %2993 = vmatprep.subr.mxu0 0.0
        %2994 = vmatpush1.xpose.msra.mxu0 0.0
        %2995 = vmatprep.subr.mxu0 0.0
        %2996 = vmatpush1.xpose.msra.mxu0 0.0
        %2997 = vmatprep.subr.mxu0 0.0
        %2998 = vmatpush1.xpose.msra.mxu0 0.0
        %2999 = vmatprep.subr.mxu0 0.0
        %3000 = vmatpush1.xpose.msra.mxu0 0.0
        %3001 = vmatprep.subr.mxu0 0.0
        %3002 = vmatpush1.xpose.msra.mxu0 0.0
        %3003 = vmatprep.subr.mxu0 0.0
        %3004 = vmatpush1.xpose.msra.mxu0 0.0
        %3005 = vmatprep.subr.mxu0 0.0
        %3006 = vmatpush1.xpose.msra.mxu0 0.0
        %3007 = vmatprep.subr.mxu0 0.0
        %3008 = vmatpush1.xpose.msra.mxu0 0.0
        %3009 = vmatprep.subr.mxu0 0.0
        %3010 = vmatpush1.xpose.msra.mxu0 0.0
        %3011 = vmatprep.subr.mxu0 0.0
        %3012 = vmatpush1.xpose.msra.mxu0 0.0
        %3013 = vmatprep.subr.mxu0 0.0
        %3014 = vmatpush1.xpose.msra.mxu0 0.0
        %3015 = vmatprep.subr.mxu0 0.0
        %3016 = vmatpush1.xpose.msra.mxu0 0.0
        %3017 = vmatprep.mubr.f32.mxu0 0.0
        %3018 = vmatmul.mubr.f32.gmra.mrb[0].mxu0 %v2945
        %v3019 = vpop.f32.mrb[0].mxu0
        %v3020 = vadd.f32 0.0, %v3019
        %v3021 = vpop.f32.mrb[0].mxu0
        %3022 = vmatprep.mubr.f32.mxu0 0.0
        %3023 = vmatmul.mubr.f32.gmra.mrb[0].mxu0 %v2947
        %v3024 = vpop.f32.mrb[0].mxu0
        %v3025 = vadd.f32 0.0, %v3024
        %v3026 = vpop.f32.mrb[0].mxu0
        %3027 = vdwg.mxu0
        %v3028 = vsel %vm1540, %v2929, -inf
        %3029 = vmax.xlane.f32.xlu0 %v3028
        %v3030 = vpop.xlane.xlu0 %3029
        %v3031 = vsel %vm1540, %v2934, -inf
        %3032 = vmax.xlane.f32.xlu0 %v3031
        %v3033 = vpop.xlane.xlu0 %3032
        %v3034 = vsel %vm1540, %v3020, -inf
        %3035 = vmax.xlane.f32.xlu0 %v3034
        %v3036 = vpop.xlane.xlu0 %3035
        %v3037 = vsel %vm1540, %v3025, -inf
        %3038 = vmax.xlane.f32.xlu0 %v3037
        %v3039 = vpop.xlane.xlu0 %3038
        %v3040 = vsub.f32 %v2929, %v3030
        %v3041 = vsub.f32 %v2934, %v3033
        %v3042 = vsub.f32 %v3020, %v3036
        %v3043 = vsub.f32 %v3025, %v3039
        %v3044 = vmul.f32 %v3040, 1.442695
        %v3045 = vpow.pop %v3044
        %v3046 = vmul.f32 %v3041, 1.442695
        %v3047 = vpow.pop %v3046
        %v3048 = vmul.f32 %v3042, 1.442695
        %v3049 = vpow.pop %v3048
        %v3050 = vmul.f32 %v3043, 1.442695
        %v3051 = vpow.pop %v3050
        %v3052 = vsel %vm1540, %v3045, 0.0
        %3053 = vadd.xlane.f32.xlu0 %v3052
        %v3054 = vpop.xlane.xlu0 %3053
        %v3055 = vsel %vm1540, %v3047, 0.0
        %3056 = vadd.xlane.f32.xlu0 %v3055
        %v3057 = vpop.xlane.xlu0 %3056
        %v3058 = vsel %vm1540, %v3049, 0.0
        %3059 = vadd.xlane.f32.xlu0 %v3058
        %v3060 = vpop.xlane.xlu0 %3059
        %v3061 = vsel %vm1540, %v3051, 0.0
        %3062 = vadd.xlane.f32.xlu0 %v3061
        %v3063 = vpop.xlane.xlu0 %3062
        %v3064 = vrcp.pop %v3054
        %v3065 = vrcp.pop %v3057
        %v3066 = vrcp.pop %v3060
        %v3067 = vrcp.pop %v3063
        %v3068 = vmul.f32 %v3045, %v3064
        %v3069 = vmul.f32 %v3047, %v3065
        %v3070 = vmul.f32 %v3049, %v3066
        %v3071 = vmul.f32 %v3051, %v3067
        %3072 = vrot.lane.b32.xlu0 %v1327, 32
        %v3073 = vpop.permute.xlu0 %3072
        %3074 = vrot.lane.b32.xlu0 %v1332, 32
        %v3075 = vpop.permute.xlu0 %3074
        %v3079 = vsel %vm1540, %v3068, 0
        %v3082 = vsel %vm1540, %v3069, 0
        %3084 = vmatprep.subr.mxu0 0.0
        %3085 = vmatpush1.msra.mxu0 %v3073
        %3086 = vmatprep.subr.mxu0 0.0
        %3087 = vmatpush1.msra.mxu0 %v3075
        %3088 = vmatprep.subr.mxu0 0.0
        %3089 = vmatpush1.msra.mxu0 0.0
        %3090 = vmatprep.subr.mxu0 0.0
        %3091 = vmatpush1.msra.mxu0 0.0
        %3092 = vmatprep.subr.mxu0 0.0
        %3093 = vmatpush1.msra.mxu0 0.0
        %3094 = vmatprep.subr.mxu0 0.0
        %3095 = vmatpush1.msra.mxu0 0.0
        %3096 = vmatprep.subr.mxu0 0.0
        %3097 = vmatpush1.msra.mxu0 0.0
        %3098 = vmatprep.subr.mxu0 0.0
        %3099 = vmatpush1.msra.mxu0 0.0
        %3100 = vmatprep.subr.mxu0 0.0
        %3101 = vmatpush1.msra.mxu0 0.0
        %3102 = vmatprep.subr.mxu0 0.0
        %3103 = vmatpush1.msra.mxu0 0.0
        %3104 = vmatprep.subr.mxu0 0.0
        %3105 = vmatpush1.msra.mxu0 0.0
        %3106 = vmatprep.subr.mxu0 0.0
        %3107 = vmatpush1.msra.mxu0 0.0
        %3108 = vmatprep.subr.mxu0 0.0
        %3109 = vmatpush1.msra.mxu0 0.0
        %3110 = vmatprep.subr.mxu0 0.0
        %3111 = vmatpush1.msra.mxu0 0.0
        %3112 = vmatprep.subr.mxu0 0.0
        %3113 = vmatpush1.msra.mxu0 0.0
        %3114 = vmatprep.subr.mxu0 0.0
        %3115 = vmatpush1.msra.mxu0 0.0
        %3116 = vmatprep.subr.mxu0 0.0
        %3117 = vmatpush1.msra.mxu0 0.0
        %3118 = vmatprep.subr.mxu0 0.0
        %3119 = vmatpush1.msra.mxu0 0.0
        %3120 = vmatprep.subr.mxu0 0.0
        %3121 = vmatpush1.msra.mxu0 0.0
        %3122 = vmatprep.subr.mxu0 0.0
        %3123 = vmatpush1.msra.mxu0 0.0
        %3124 = vmatprep.subr.mxu0 0.0
        %3125 = vmatpush1.msra.mxu0 0.0
        %3126 = vmatprep.subr.mxu0 0.0
        %3127 = vmatpush1.msra.mxu0 0.0
        %3128 = vmatprep.subr.mxu0 0.0
        %3129 = vmatpush1.msra.mxu0 0.0
        %3130 = vmatprep.subr.mxu0 0.0
        %3131 = vmatpush1.msra.mxu0 0.0
        %3132 = vmatprep.subr.mxu0 0.0
        %3133 = vmatpush1.msra.mxu0 0.0
        %3134 = vmatprep.subr.mxu0 0.0
        %3135 = vmatpush1.msra.mxu0 0.0
        %3136 = vmatprep.subr.mxu0 0.0
        %3137 = vmatpush1.msra.mxu0 0.0
        %3138 = vmatprep.subr.mxu0 0.0
        %3139 = vmatpush1.msra.mxu0 0.0
        %3140 = vmatprep.subr.mxu0 0.0
        %3141 = vmatpush1.msra.mxu0 0.0
        %3142 = vmatprep.subr.mxu0 0.0
        %3143 = vmatpush1.msra.mxu0 0.0
        %3144 = vmatprep.subr.mxu0 0.0
        %3145 = vmatpush1.msra.mxu0 0.0
        %3146 = vmatprep.subr.mxu0 0.0
        %3147 = vmatpush1.msra.mxu0 0.0
        %3148 = vmatprep.mubr.f32.mxu0 0.0
        %3149 = vmatmul.mubr.f32.gmra.mrb[0].mxu0 %v3079
        %v3150 = vpop.f32.mrb[0].mxu0
        %v3151 = vadd.f32 0.0, %v3150
        %v3152 = vpop.f32.mrb[0].mxu0
        %3153 = vmatprep.mubr.f32.mxu0 0.0
        %3154 = vmatmul.mubr.f32.gmra.mrb[0].mxu0 %v3082
        %v3155 = vpop.f32.mrb[0].mxu0
        %v3156 = vadd.f32 0.0, %v3155
        %v3157 = vpop.f32.mrb[0].mxu0
        %3158 = vdwg.mxu0
        %3159 = vrot.lane.b32.xlu0 %v1337, 32
        %v3160 = vpop.permute.xlu0 %3159
        %3161 = vrot.lane.b32.xlu0 %v1342, 32
        %v3162 = vpop.permute.xlu0 %3161
        %v3166 = vsel %vm1540, %v3070, 0
        %v3169 = vsel %vm1540, %v3071, 0
        %3171 = vmatprep.subr.mxu0 0.0
        %3172 = vmatpush1.msra.mxu0 %v3160
        %3173 = vmatprep.subr.mxu0 0.0
        %3174 = vmatpush1.msra.mxu0 %v3162
        %3175 = vmatprep.subr.mxu0 0.0
        %3176 = vmatpush1.msra.mxu0 0.0
        %3177 = vmatprep.subr.mxu0 0.0
        %3178 = vmatpush1.msra.mxu0 0.0
        %3179 = vmatprep.subr.mxu0 0.0
        %3180 = vmatpush1.msra.mxu0 0.0
        %3181 = vmatprep.subr.mxu0 0.0
        %3182 = vmatpush1.msra.mxu0 0.0
        %3183 = vmatprep.subr.mxu0 0.0
        %3184 = vmatpush1.msra.mxu0 0.0
        %3185 = vmatprep.subr.mxu0 0.0
        %3186 = vmatpush1.msra.mxu0 0.0
        %3187 = vmatprep.subr.mxu0 0.0
        %3188 = vmatpush1.msra.mxu0 0.0
        %3189 = vmatprep.subr.mxu0 0.0
        %3190 = vmatpush1.msra.mxu0 0.0
        %3191 = vmatprep.subr.mxu0 0.0
        %3192 = vmatpush1.msra.mxu0 0.0
        %3193 = vmatprep.subr.mxu0 0.0
        %3194 = vmatpush1.msra.mxu0 0.0
        %3195 = vmatprep.subr.mxu0 0.0
        %3196 = vmatpush1.msra.mxu0 0.0
        %3197 = vmatprep.subr.mxu0 0.0
        %3198 = vmatpush1.msra.mxu0 0.0
        %3199 = vmatprep.subr.mxu0 0.0
        %3200 = vmatpush1.msra.mxu0 0.0
        %3201 = vmatprep.subr.mxu0 0.0
        %3202 = vmatpush1.msra.mxu0 0.0
        %3203 = vmatprep.subr.mxu0 0.0
        %3204 = vmatpush1.msra.mxu0 0.0
        %3205 = vmatprep.subr.mxu0 0.0
        %3206 = vmatpush1.msra.mxu0 0.0
        %3207 = vmatprep.subr.mxu0 0.0
        %3208 = vmatpush1.msra.mxu0 0.0
        %3209 = vmatprep.subr.mxu0 0.0
        %3210 = vmatpush1.msra.mxu0 0.0
        %3211 = vmatprep.subr.mxu0 0.0
        %3212 = vmatpush1.msra.mxu0 0.0
        %3213 = vmatprep.subr.mxu0 0.0
        %3214 = vmatpush1.msra.mxu0 0.0
        %3215 = vmatprep.subr.mxu0 0.0
        %3216 = vmatpush1.msra.mxu0 0.0
        %3217 = vmatprep.subr.mxu0 0.0
        %3218 = vmatpush1.msra.mxu0 0.0
        %3219 = vmatprep.subr.mxu0 0.0
        %3220 = vmatpush1.msra.mxu0 0.0
        %3221 = vmatprep.subr.mxu0 0.0
        %3222 = vmatpush1.msra.mxu0 0.0
        %3223 = vmatprep.subr.mxu0 0.0
        %3224 = vmatpush1.msra.mxu0 0.0
        %3225 = vmatprep.subr.mxu0 0.0
        %3226 = vmatpush1.msra.mxu0 0.0
        %3227 = vmatprep.subr.mxu0 0.0
        %3228 = vmatpush1.msra.mxu0 0.0
        %3229 = vmatprep.subr.mxu0 0.0
        %3230 = vmatpush1.msra.mxu0 0.0
        %3231 = vmatprep.subr.mxu0 0.0
        %3232 = vmatpush1.msra.mxu0 0.0
        %3233 = vmatprep.subr.mxu0 0.0
        %3234 = vmatpush1.msra.mxu0 0.0
        %3235 = vmatprep.mubr.f32.mxu0 0.0
        %3236 = vmatmul.mubr.f32.gmra.mrb[0].mxu0 %v3166
        %v3237 = vpop.f32.mrb[0].mxu0
        %v3238 = vadd.f32 0.0, %v3237
        %v3239 = vpop.f32.mrb[0].mxu0
        %3240 = vmatprep.mubr.f32.mxu0 0.0
        %3241 = vmatmul.mubr.f32.gmra.mrb[0].mxu0 %v3169
        %v3242 = vpop.f32.mrb[0].mxu0
        %v3243 = vadd.f32 0.0, %v3242
        %v3244 = vpop.f32.mrb[0].mxu0
        %3245 = vdwg.mxu0
        %v3247 = vsel %vm1365, %v3151, 0
        %v3250 = vsel %vm1365, %v3156, 0
        %v3253 = vsel %vm1365, %v3238, 0
        %v3256 = vsel %vm1365, %v3243, 0
        %3258 = vmatprep.subr.mxu0 0.0
        %3259 = vmatpush1.msra.mxu0 %v1361
        %3260 = vmatprep.subr.mxu0 0.0
        %3261 = vmatpush1.msra.mxu0 %v1362
        %3262 = vmatprep.subr.mxu0 0.0
        %3263 = vmatpush1.msra.mxu0 %v1363
        %3264 = vmatprep.subr.mxu0 0.0
        %3265 = vmatpush1.msra.mxu0 %v1364
        %3266 = vmatprep.subr.mxu0 0.0
        %3267 = vmatpush1.msra.mxu0 0.0
        %3268 = vmatprep.subr.mxu0 0.0
        %3269 = vmatpush1.msra.mxu0 0.0
        %3270 = vmatprep.subr.mxu0 0.0
        %3271 = vmatpush1.msra.mxu0 0.0
        %3272 = vmatprep.subr.mxu0 0.0
        %3273 = vmatpush1.msra.mxu0 0.0
        %3274 = vmatprep.subr.mxu0 0.0
        %3275 = vmatpush1.msra.mxu0 0.0
        %3276 = vmatprep.subr.mxu0 0.0
        %3277 = vmatpush1.msra.mxu0 0.0
        %3278 = vmatprep.subr.mxu0 0.0
        %3279 = vmatpush1.msra.mxu0 0.0
        %3280 = vmatprep.subr.mxu0 0.0
        %3281 = vmatpush1.msra.mxu0 0.0
        %3282 = vmatprep.subr.mxu0 0.0
        %3283 = vmatpush1.msra.mxu0 0.0
        %3284 = vmatprep.subr.mxu0 0.0
        %3285 = vmatpush1.msra.mxu0 0.0
        %3286 = vmatprep.subr.mxu0 0.0
        %3287 = vmatpush1.msra.mxu0 0.0
        %3288 = vmatprep.subr.mxu0 0.0
        %3289 = vmatpush1.msra.mxu0 0.0
        %3290 = vmatprep.subr.mxu0 0.0
        %3291 = vmatpush1.msra.mxu0 0.0
        %3292 = vmatprep.subr.mxu0 0.0
        %3293 = vmatpush1.msra.mxu0 0.0
        %3294 = vmatprep.subr.mxu0 0.0
        %3295 = vmatpush1.msra.mxu0 0.0
        %3296 = vmatprep.subr.mxu0 0.0
        %3297 = vmatpush1.msra.mxu0 0.0
        %3298 = vmatprep.subr.mxu0 0.0
        %3299 = vmatpush1.msra.mxu0 0.0
        %3300 = vmatprep.subr.mxu0 0.0
        %3301 = vmatpush1.msra.mxu0 0.0
        %3302 = vmatprep.subr.mxu0 0.0
        %3303 = vmatpush1.msra.mxu0 0.0
        %3304 = vmatprep.subr.mxu0 0.0
        %3305 = vmatpush1.msra.mxu0 0.0
        %3306 = vmatprep.subr.mxu0 0.0
        %3307 = vmatpush1.msra.mxu0 0.0
        %3308 = vmatprep.subr.mxu0 0.0
        %3309 = vmatpush1.msra.mxu0 0.0
        %3310 = vmatprep.subr.mxu0 0.0
        %3311 = vmatpush1.msra.mxu0 0.0
        %3312 = vmatprep.subr.mxu0 0.0
        %3313 = vmatpush1.msra.mxu0 0.0
        %3314 = vmatprep.subr.mxu0 0.0
        %3315 = vmatpush1.msra.mxu0 0.0
        %3316 = vmatprep.subr.mxu0 0.0
        %3317 = vmatpush1.msra.mxu0 0.0
        %3318 = vmatprep.subr.mxu0 0.0
        %3319 = vmatpush1.msra.mxu0 0.0
        %3320 = vmatprep.subr.mxu0 0.0
        %3321 = vmatpush1.msra.mxu0 0.0
        %3322 = vmatprep.mubr.f32.mxu0 0.0
        %3323 = vmatmul.mubr.f32.gmra.mrb[0].mxu0 %v3247
        %v3324 = vpop.f32.mrb[0].mxu0
        %v3325 = vadd.f32 0.0, %v3324
        %v3326 = vpop.f32.mrb[0].mxu0
        %3327 = vmatprep.mubr.f32.mxu0 0.0
        %3328 = vmatmul.mubr.f32.gmra.mrb[0].mxu0 %v3250
        %v3329 = vpop.f32.mrb[0].mxu0
        %v3330 = vadd.f32 0.0, %v3329
        %v3331 = vpop.f32.mrb[0].mxu0
        %3332 = vmatprep.mubr.f32.mxu0 0.0
        %3333 = vmatmul.mubr.f32.gmra.mrb[0].mxu0 %v3253
        %v3334 = vpop.f32.mrb[0].mxu0
        %v3335 = vadd.f32 0.0, %v3334
        %v3336 = vpop.f32.mrb[0].mxu0
        %3337 = vmatprep.mubr.f32.mxu0 0.0
        %3338 = vmatmul.mubr.f32.gmra.mrb[0].mxu0 %v3256
        %v3339 = vpop.f32.mrb[0].mxu0
        %v3340 = vadd.f32 0.0, %v3339
        %v3341 = vpop.f32.mrb[0].mxu0
        %3342 = vdwg.mxu0
        %v3343 = vadd.f32 %v2842, %v3325
        %v3344 = vadd.f32 %v2843, %v3330
        %v3345 = vadd.f32 %v2844, %v3335
        %v3346 = vadd.f32 %v2845, %v3340
        %v3347 = vadd.f32 %v1035, %v3343
        %v3348 = vadd.f32 %v1036, %v3344
        %v3349 = vadd.f32 %v1037, %v3345
        %v3350 = vadd.f32 %v1038, %v3346
        %v3351 = vld [vmem:[%s868] sm:$0x1]
        %v3353 = vlaneseq
        %v3354 = vshrl.u32 %v3353, 7
        %v3355 = vsub.s32 0, %v3354
        %v3356 = vrot.slane %v3351, %v3355
        %v3358 = vadd.f32 %v3347, %v3356
        %v3359 = vadd.f32 %v3348, %v3356
        %v3360 = vadd.f32 %v3349, %v3356
        %v3361 = vadd.f32 %v3350, %v3356
        %v3362 = vld [vmem:[%s871] sm:$0x1]
        %v3363 = vld [vmem:[%s874] sm:$0x1]
        %3364 = vadd.xlane.f32.xlu0 %v3358
        %v3365 = vpop.xlane.xlu0 %3364
        %3366 = vadd.xlane.f32.xlu0 %v3359
        %v3367 = vpop.xlane.xlu0 %3366
        %3368 = vadd.xlane.f32.xlu0 %v3360
        %v3369 = vpop.xlane.xlu0 %3368
        %3370 = vadd.xlane.f32.xlu0 %v3361
        %v3371 = vpop.xlane.xlu0 %3370
        %v3372 = vmul.f32 %v3365, %v1049
        %v3373 = vmul.f32 %v3367, %v1049
        %v3374 = vmul.f32 %v3369, %v1049
        %v3375 = vmul.f32 %v3371, %v1049
        %v3376 = vsub.f32 %v3358, %v3372
        %v3377 = vsub.f32 %v3359, %v3373
        %v3378 = vsub.f32 %v3360, %v3374
        %v3379 = vsub.f32 %v3361, %v3375
        %v3380 = vmul.f32 %v3376, %v3376
        %v3381 = vmul.f32 %v3377, %v3377
        %v3382 = vmul.f32 %v3378, %v3378
        %v3383 = vmul.f32 %v3379, %v3379
        %3384 = vadd.xlane.f32.xlu0 %v3380
        %v3385 = vpop.xlane.xlu0 %3384
        %3386 = vadd.xlane.f32.xlu0 %v3381
        %v3387 = vpop.xlane.xlu0 %3386
        %3388 = vadd.xlane.f32.xlu0 %v3382
        %v3389 = vpop.xlane.xlu0 %3388
        %3390 = vadd.xlane.f32.xlu0 %v3383
        %v3391 = vpop.xlane.xlu0 %3390
        %v3392 = vmul.f32 %v3385, %v1049
        %v3393 = vmul.f32 %v3387, %v1049
        %v3394 = vmul.f32 %v3389, %v1049
        %v3395 = vmul.f32 %v3391, %v1049
        %v3396 = vadd.f32 %v3392, 1e-05
        %v3397 = vadd.f32 %v3393, 1e-05
        %v3398 = vadd.f32 %v3394, 1e-05
        %v3399 = vadd.f32 %v3395, 1e-05
        %v3400 = vrsqrt.pop %v3396
        %v3401 = vrsqrt.pop %v3397
        %v3402 = vrsqrt.pop %v3398
        %v3403 = vrsqrt.pop %v3399
        %v3404 = vmul.f32 %v3376, %v3400
        %v3405 = vmul.f32 %v3377, %v3401
        %v3406 = vmul.f32 %v3378, %v3402
        %v3407 = vmul.f32 %v3379, %v3403
        %v3409 = vlaneseq
        %v3410 = vshrl.u32 %v3409, 7
        %v3411 = vsub.s32 0, %v3410
        %v3412 = vrot.slane %v3362, %v3411
        %v3414 = vmul.f32 %v3404, %v3412
        %v3415 = vmul.f32 %v3405, %v3412
        %v3416 = vmul.f32 %v3406, %v3412
        %v3417 = vmul.f32 %v3407, %v3412
        %v3419 = vlaneseq
        %v3420 = vshrl.u32 %v3419, 7
        %v3421 = vsub.s32 0, %v3420
        %v3422 = vrot.slane %v3363, %v3421
        %v3424 = vadd.f32 %v3414, %v3422
        %v3425 = vadd.f32 %v3415, %v3422
        %v3426 = vadd.f32 %v3416, %v3422
        %v3427 = vadd.f32 %v3417, %v3422
        %v3428 = vld [vmem:[%s760] sm:$0xff]
        %v3429 = vld [vmem:[%s760 + $0x8] sm:$0xff]
        %v3430 = vld [vmem:[%s760 + $0x10] sm:$0xff]
        %v3431 = vld [vmem:[%s760 + $0x18] sm:$0xff]
        %v3432 = vld [vmem:[%s760 + $0x20] sm:$0xff]
        %v3433 = vld [vmem:[%s760 + $0x28] sm:$0xff]
        %v3434 = vld [vmem:[%s760 + $0x30] sm:$0xff]
        %v3435 = vld [vmem:[%s760 + $0x38] sm:$0xff]
        %v3436 = vld [vmem:[%s760 + $0x40] sm:$0xff]
        %v3437 = vld [vmem:[%s760 + $0x48] sm:$0xff]
        %v3438 = vld [vmem:[%s760 + $0x50] sm:$0xff]
        %v3439 = vld [vmem:[%s760 + $0x58] sm:$0xff]
        %v3440 = vld [vmem:[%s760 + $0x60] sm:$0xff]
        %v3441 = vld [vmem:[%s760 + $0x68] sm:$0xff]
        %v3442 = vld [vmem:[%s760 + $0x70] sm:$0xff]
        %v3443 = vld [vmem:[%s760 + $0x78] sm:$0xff]
        %v3444 = vld [vmem:[%s760 + $0x80] sm:$0xff]
        %v3445 = vld [vmem:[%s760 + $0x88] sm:$0xff]
        %v3446 = vld [vmem:[%s760 + $0x90] sm:$0xff]
        %v3447 = vld [vmem:[%s760 + $0x98] sm:$0xff]
        %v3448 = vld [vmem:[%s760 + $0xa0] sm:$0xff]
        %v3449 = vld [vmem:[%s760 + $0xa8] sm:$0xff]
        %v3450 = vld [vmem:[%s760 + $0xb0] sm:$0xff]
        %v3451 = vld [vmem:[%s760 + $0xb8] sm:$0xff]
        %v3452 = vld [vmem:[%s760 + $0xc0] sm:$0xff]
        %v3453 = vld [vmem:[%s760 + $0xc8] sm:$0xff]
        %v3454 = vld [vmem:[%s760 + $0xd0] sm:$0xff]
        %v3455 = vld [vmem:[%s760 + $0xd8] sm:$0xff]
        %v3456 = vld [vmem:[%s760 + $0xe0] sm:$0xff]
        %v3457 = vld [vmem:[%s760 + $0xe8] sm:$0xff]
        %v3458 = vld [vmem:[%s760 + $0xf0] sm:$0xff]
        %v3459 = vld [vmem:[%s760 + $0xf8] sm:$0xff]
        %v3460 = vld [vmem:[%s760 + $0x100] sm:$0xff]
        %v3461 = vld [vmem:[%s760 + $0x108] sm:$0xff]
        %v3462 = vld [vmem:[%s760 + $0x110] sm:$0xff]
        %v3463 = vld [vmem:[%s760 + $0x118] sm:$0xff]
        %v3464 = vld [vmem:[%s760 + $0x120] sm:$0xff]
        %v3465 = vld [vmem:[%s760 + $0x128] sm:$0xff]
        %v3466 = vld [vmem:[%s760 + $0x130] sm:$0xff]
        %v3467 = vld [vmem:[%s760 + $0x138] sm:$0xff]
        %v3468 = vld [vmem:[%s760 + $0x140] sm:$0xff]
        %v3469 = vld [vmem:[%s760 + $0x148] sm:$0xff]
        %v3470 = vld [vmem:[%s760 + $0x150] sm:$0xff]
        %v3471 = vld [vmem:[%s760 + $0x158] sm:$0xff]
        %v3472 = vld [vmem:[%s760 + $0x160] sm:$0xff]
        %v3473 = vld [vmem:[%s760 + $0x168] sm:$0xff]
        %v3474 = vld [vmem:[%s760 + $0x170] sm:$0xff]
        %v3475 = vld [vmem:[%s760 + $0x178] sm:$0xff]
        %v3476 = vld [vmem:[%s760 + $0x180] sm:$0xff]
        %v3477 = vld [vmem:[%s760 + $0x188] sm:$0xff]
        %v3478 = vld [vmem:[%s760 + $0x190] sm:$0xff]
        %v3479 = vld [vmem:[%s760 + $0x198] sm:$0xff]
        %v3480 = vld [vmem:[%s760 + $0x1a0] sm:$0xff]
        %v3481 = vld [vmem:[%s760 + $0x1a8] sm:$0xff]
        %v3482 = vld [vmem:[%s760 + $0x1b0] sm:$0xff]
        %v3483 = vld [vmem:[%s760 + $0x1b8] sm:$0xff]
        %v3484 = vld [vmem:[%s760 + $0x1c0] sm:$0xff]
        %v3485 = vld [vmem:[%s760 + $0x1c8] sm:$0xff]
        %v3486 = vld [vmem:[%s760 + $0x1d0] sm:$0xff]
        %v3487 = vld [vmem:[%s760 + $0x1d8] sm:$0xff]
        %v3488 = vld [vmem:[%s760 + $0x1e0] sm:$0xff]
        %v3489 = vld [vmem:[%s760 + $0x1e8] sm:$0xff]
        %v3490 = vld [vmem:[%s760 + $0x1f0] sm:$0xff]
        %v3491 = vld [vmem:[%s760 + $0x1f8] sm:$0xff]
        %v3492 = vld [vmem:[%s878] sm:$0xf]
        %v3494 = vlaneseq
        %v3495 = vshrl.u32 %v3494, 7
        %v3496 = vsub.s32 0, %v3495
        %v3497 = vrot.slane %v3492, %v3496
        %v3498 = vlaneseq
        %v3499 = vshrl.u32 %v3498, 7
        %v3500 = vsub.s32 1, %v3499
        %v3501 = vrot.slane %v3492, %v3500
        %v3502 = vlaneseq
        %v3503 = vshrl.u32 %v3502, 7
        %v3504 = vsub.s32 2, %v3503
        %v3505 = vrot.slane %v3492, %v3504
        %v3506 = vlaneseq
        %v3507 = vshrl.u32 %v3506, 7
        %v3508 = vsub.s32 3, %v3507
        %v3509 = vrot.slane %v3492, %v3508
        %3514 = vmatprep.subr.mxu0 %v3429
        %3515 = vmatpush1.msra.mxu0 %v3428
        %3516 = vmatprep.subr.mxu0 %v3433
        %3517 = vmatpush1.msra.mxu0 %v3432
        %3518 = vmatprep.subr.mxu0 %v3437
        %3519 = vmatpush1.msra.mxu0 %v3436
        %3520 = vmatprep.subr.mxu0 %v3441
        %3521 = vmatpush1.msra.mxu0 %v3440
        %3522 = vmatprep.subr.mxu0 %v3445
        %3523 = vmatpush1.msra.mxu0 %v3444
        %3524 = vmatprep.subr.mxu0 %v3449
        %3525 = vmatpush1.msra.mxu0 %v3448
        %3526 = vmatprep.subr.mxu0 %v3453
        %3527 = vmatpush1.msra.mxu0 %v3452
        %3528 = vmatprep.subr.mxu0 %v3457
        %3529 = vmatpush1.msra.mxu0 %v3456
        %3530 = vmatprep.subr.mxu0 %v3461
        %3531 = vmatpush1.msra.mxu0 %v3460
        %3532 = vmatprep.subr.mxu0 %v3465
        %3533 = vmatpush1.msra.mxu0 %v3464
        %3534 = vmatprep.subr.mxu0 %v3469
        %3535 = vmatpush1.msra.mxu0 %v3468
        %3536 = vmatprep.subr.mxu0 %v3473
        %3537 = vmatpush1.msra.mxu0 %v3472
        %3538 = vmatprep.subr.mxu0 %v3477
        %3539 = vmatpush1.msra.mxu0 %v3476
        %3540 = vmatprep.subr.mxu0 %v3481
        %3541 = vmatpush1.msra.mxu0 %v3480
        %3542 = vmatprep.subr.mxu0 %v3485
        %3543 = vmatpush1.msra.mxu0 %v3484
        %3544 = vmatprep.subr.mxu0 %v3489
        %3545 = vmatpush1.msra.mxu0 %v3488
        %3546 = vmatprep.subr.mxu0 0.0
        %3547 = vmatpush1.msra.mxu0 0.0
        %3548 = vmatprep.subr.mxu0 0.0
        %3549 = vmatpush1.msra.mxu0 0.0
        %3550 = vmatprep.subr.mxu0 0.0
        %3551 = vmatpush1.msra.mxu0 0.0
        %3552 = vmatprep.subr.mxu0 0.0
        %3553 = vmatpush1.msra.mxu0 0.0
        %3554 = vmatprep.subr.mxu0 0.0
        %3555 = vmatpush1.msra.mxu0 0.0
        %3556 = vmatprep.subr.mxu0 0.0
        %3557 = vmatpush1.msra.mxu0 0.0
        %3558 = vmatprep.subr.mxu0 0.0
        %3559 = vmatpush1.msra.mxu0 0.0
        %3560 = vmatprep.subr.mxu0 0.0
        %3561 = vmatpush1.msra.mxu0 0.0
        %3562 = vmatprep.subr.mxu0 0.0
        %3563 = vmatpush1.msra.mxu0 0.0
        %3564 = vmatprep.subr.mxu0 0.0
        %3565 = vmatpush1.msra.mxu0 0.0
        %3566 = vmatprep.subr.mxu0 0.0
        %3567 = vmatpush1.msra.mxu0 0.0
        %3568 = vmatprep.subr.mxu0 0.0
        %3569 = vmatpush1.msra.mxu0 0.0
        %3570 = vmatprep.subr.mxu0 0.0
        %3571 = vmatpush1.msra.mxu0 0.0
        %3572 = vmatprep.subr.mxu0 0.0
        %3573 = vmatpush1.msra.mxu0 0.0
        %3574 = vmatprep.subr.mxu0 0.0
        %3575 = vmatpush1.msra.mxu0 0.0
        %3576 = vmatprep.subr.mxu0 0.0
        %3577 = vmatpush1.msra.mxu0 0.0
        %3578 = vmatprep.mubr.f32.mxu0 0.0
        %3579 = vmatmul.mubr.f32.gmra.mrb[0].mxu0 %v3424
        %v3580 = vpop.f32.mrb[0].mxu0
        %v3581 = vadd.f32 %v3497, %v3580
        %v3582 = vpop.f32.mrb[0].mxu0
        %v3583 = vadd.f32 %v3501, %v3582
        %3584 = vmatprep.mubr.f32.mxu0 0.0
        %3585 = vmatmul.mubr.f32.gmra.mrb[0].mxu0 %v3425
        %v3586 = vpop.f32.mrb[0].mxu0
        %v3587 = vadd.f32 %v3497, %v3586
        %v3588 = vpop.f32.mrb[0].mxu0
        %v3589 = vadd.f32 %v3501, %v3588
        %3590 = vmatprep.mubr.f32.mxu0 0.0
        %3591 = vmatmul.mubr.f32.gmra.mrb[0].mxu0 %v3426
        %v3592 = vpop.f32.mrb[0].mxu0
        %v3593 = vadd.f32 %v3497, %v3592
        %v3594 = vpop.f32.mrb[0].mxu0
        %v3595 = vadd.f32 %v3501, %v3594
        %3596 = vmatprep.mubr.f32.mxu0 0.0
        %3597 = vmatmul.mubr.f32.gmra.mrb[0].mxu0 %v3427
        %v3598 = vpop.f32.mrb[0].mxu0
        %v3599 = vadd.f32 %v3497, %v3598
        %v3600 = vpop.f32.mrb[0].mxu0
        %v3601 = vadd.f32 %v3501, %v3600
        %3602 = vdwg.mxu0
        %3603 = vmatprep.subr.mxu0 %v3431
        %3604 = vmatpush1.msra.mxu0 %v3430
        %3605 = vmatprep.subr.mxu0 %v3435
        %3606 = vmatpush1.msra.mxu0 %v3434
        %3607 = vmatprep.subr.mxu0 %v3439
        %3608 = vmatpush1.msra.mxu0 %v3438
        %3609 = vmatprep.subr.mxu0 %v3443
        %3610 = vmatpush1.msra.mxu0 %v3442
        %3611 = vmatprep.subr.mxu0 %v3447
        %3612 = vmatpush1.msra.mxu0 %v3446
        %3613 = vmatprep.subr.mxu0 %v3451
        %3614 = vmatpush1.msra.mxu0 %v3450
        %3615 = vmatprep.subr.mxu0 %v3455
        %3616 = vmatpush1.msra.mxu0 %v3454
        %3617 = vmatprep.subr.mxu0 %v3459
        %3618 = vmatpush1.msra.mxu0 %v3458
        %3619 = vmatprep.subr.mxu0 %v3463
        %3620 = vmatpush1.msra.mxu0 %v3462
        %3621 = vmatprep.subr.mxu0 %v3467
        %3622 = vmatpush1.msra.mxu0 %v3466
        %3623 = vmatprep.subr.mxu0 %v3471
        %3624 = vmatpush1.msra.mxu0 %v3470
        %3625 = vmatprep.subr.mxu0 %v3475
        %3626 = vmatpush1.msra.mxu0 %v3474
        %3627 = vmatprep.subr.mxu0 %v3479
        %3628 = vmatpush1.msra.mxu0 %v3478
        %3629 = vmatprep.subr.mxu0 %v3483
        %3630 = vmatpush1.msra.mxu0 %v3482
        %3631 = vmatprep.subr.mxu0 %v3487
        %3632 = vmatpush1.msra.mxu0 %v3486
        %3633 = vmatprep.subr.mxu0 %v3491
        %3634 = vmatpush1.msra.mxu0 %v3490
        %3635 = vmatprep.subr.mxu0 0.0
        %3636 = vmatpush1.msra.mxu0 0.0
        %3637 = vmatprep.subr.mxu0 0.0
        %3638 = vmatpush1.msra.mxu0 0.0
        %3639 = vmatprep.subr.mxu0 0.0
        %3640 = vmatpush1.msra.mxu0 0.0
        %3641 = vmatprep.subr.mxu0 0.0
        %3642 = vmatpush1.msra.mxu0 0.0
        %3643 = vmatprep.subr.mxu0 0.0
        %3644 = vmatpush1.msra.mxu0 0.0
        %3645 = vmatprep.subr.mxu0 0.0
        %3646 = vmatpush1.msra.mxu0 0.0
        %3647 = vmatprep.subr.mxu0 0.0
        %3648 = vmatpush1.msra.mxu0 0.0
        %3649 = vmatprep.subr.mxu0 0.0
        %3650 = vmatpush1.msra.mxu0 0.0
        %3651 = vmatprep.subr.mxu0 0.0
        %3652 = vmatpush1.msra.mxu0 0.0
        %3653 = vmatprep.subr.mxu0 0.0
        %3654 = vmatpush1.msra.mxu0 0.0
        %3655 = vmatprep.subr.mxu0 0.0
        %3656 = vmatpush1.msra.mxu0 0.0
        %3657 = vmatprep.subr.mxu0 0.0
        %3658 = vmatpush1.msra.mxu0 0.0
        %3659 = vmatprep.subr.mxu0 0.0
        %3660 = vmatpush1.msra.mxu0 0.0
        %3661 = vmatprep.subr.mxu0 0.0
        %3662 = vmatpush1.msra.mxu0 0.0
        %3663 = vmatprep.subr.mxu0 0.0
        %3664 = vmatpush1.msra.mxu0 0.0
        %3665 = vmatprep.subr.mxu0 0.0
        %3666 = vmatpush1.msra.mxu0 0.0
        %3667 = vmatprep.mubr.f32.mxu0 0.0
        %3668 = vmatmul.mubr.f32.gmra.mrb[0].mxu0 %v3424
        %v3669 = vpop.f32.mrb[0].mxu0
        %v3670 = vadd.f32 %v3505, %v3669
        %v3671 = vpop.f32.mrb[0].mxu0
        %v3672 = vadd.f32 %v3509, %v3671
        %3673 = vmatprep.mubr.f32.mxu0 0.0
        %3674 = vmatmul.mubr.f32.gmra.mrb[0].mxu0 %v3425
        %v3675 = vpop.f32.mrb[0].mxu0
        %v3676 = vadd.f32 %v3505, %v3675
        %v3677 = vpop.f32.mrb[0].mxu0
        %v3678 = vadd.f32 %v3509, %v3677
        %3679 = vmatprep.mubr.f32.mxu0 0.0
        %3680 = vmatmul.mubr.f32.gmra.mrb[0].mxu0 %v3426
        %v3681 = vpop.f32.mrb[0].mxu0
        %v3682 = vadd.f32 %v3505, %v3681
        %v3683 = vpop.f32.mrb[0].mxu0
        %v3684 = vadd.f32 %v3509, %v3683
        %3685 = vmatprep.mubr.f32.mxu0 0.0
        %3686 = vmatmul.mubr.f32.gmra.mrb[0].mxu0 %v3427
        %v3687 = vpop.f32.mrb[0].mxu0
        %v3688 = vadd.f32 %v3505, %v3687
        %v3689 = vpop.f32.mrb[0].mxu0
        %v3690 = vadd.f32 %v3509, %v3689
        %3691 = vdwg.mxu0
        %v3692 = vmul.f32 %v3581, 0.5
        %v3693 = vmul.f32 %v3583, 0.5
        %v3694 = vmul.f32 %v3670, 0.5
        %v3695 = vmul.f32 %v3672, 0.5
        %v3696 = vmul.f32 %v3587, 0.5
        %v3697 = vmul.f32 %v3589, 0.5
        %v3698 = vmul.f32 %v3676, 0.5
        %v3699 = vmul.f32 %v3678, 0.5
        %v3700 = vmul.f32 %v3593, 0.5
        %v3701 = vmul.f32 %v3595, 0.5
        %v3702 = vmul.f32 %v3682, 0.5
        %v3703 = vmul.f32 %v3684, 0.5
        %v3704 = vmul.f32 %v3599, 0.5
        %v3705 = vmul.f32 %v3601, 0.5
        %v3706 = vmul.f32 %v3688, 0.5
        %v3707 = vmul.f32 %v3690, 0.5
        %v3708 = vmul.f32 %v3581, 0.70710677
        %v3709 = vmul.f32 %v3583, 0.70710677
        %v3710 = vmul.f32 %v3670, 0.70710677
        %v3711 = vmul.f32 %v3672, 0.70710677
        %v3712 = vmul.f32 %v3587, 0.70710677
        %v3713 = vmul.f32 %v3589, 0.70710677
        %v3714 = vmul.f32 %v3676, 0.70710677
        %v3715 = vmul.f32 %v3678, 0.70710677
        %v3716 = vmul.f32 %v3593, 0.70710677
        %v3717 = vmul.f32 %v3595, 0.70710677
        %v3718 = vmul.f32 %v3682, 0.70710677
        %v3719 = vmul.f32 %v3684, 0.70710677
        %v3720 = vmul.f32 %v3599, 0.70710677
        %v3721 = vmul.f32 %v3601, 0.70710677
        %v3722 = vmul.f32 %v3688, 0.70710677
        %v3723 = vmul.f32 %v3690, 0.70710677
        %v3724 = verf.f32.pop %v3708
        %v3725 = verf.f32.pop %v3709
        %v3726 = verf.f32.pop %v3710
        %v3727 = verf.f32.pop %v3711
        %v3728 = verf.f32.pop %v3712
        %v3729 = verf.f32.pop %v3713
        %v3730 = verf.f32.pop %v3714
        %v3731 = verf.f32.pop %v3715
        %v3732 = verf.f32.pop %v3716
        %v3733 = verf.f32.pop %v3717
        %v3734 = verf.f32.pop %v3718
        %v3735 = verf.f32.pop %v3719
        %v3736 = verf.f32.pop %v3720
        %v3737 = verf.f32.pop %v3721
        %v3738 = verf.f32.pop %v3722
        %v3739 = verf.f32.pop %v3723
        %v3740 = vadd.f32 %v3724, 1.0
        %v3741 = vadd.f32 %v3725, 1.0
        %v3742 = vadd.f32 %v3726, 1.0
        %v3743 = vadd.f32 %v3727, 1.0
        %v3744 = vadd.f32 %v3728, 1.0
        %v3745 = vadd.f32 %v3729, 1.0
        %v3746 = vadd.f32 %v3730, 1.0
        %v3747 = vadd.f32 %v3731, 1.0
        %v3748 = vadd.f32 %v3732, 1.0
        %v3749 = vadd.f32 %v3733, 1.0
        %v3750 = vadd.f32 %v3734, 1.0
        %v3751 = vadd.f32 %v3735, 1.0
        %v3752 = vadd.f32 %v3736, 1.0
        %v3753 = vadd.f32 %v3737, 1.0
        %v3754 = vadd.f32 %v3738, 1.0
        %v3755 = vadd.f32 %v3739, 1.0
        %v3756 = vmul.f32 %v3692, %v3740
        %v3757 = vmul.f32 %v3693, %v3741
        %v3758 = vmul.f32 %v3694, %v3742
        %v3759 = vmul.f32 %v3695, %v3743
        %v3760 = vmul.f32 %v3696, %v3744
        %v3761 = vmul.f32 %v3697, %v3745
        %v3762 = vmul.f32 %v3698, %v3746
        %v3763 = vmul.f32 %v3699, %v3747
        %v3764 = vmul.f32 %v3700, %v3748
        %v3765 = vmul.f32 %v3701, %v3749
        %v3766 = vmul.f32 %v3702, %v3750
        %v3767 = vmul.f32 %v3703, %v3751
        %v3768 = vmul.f32 %v3704, %v3752
        %v3769 = vmul.f32 %v3705, %v3753
        %v3770 = vmul.f32 %v3706, %v3754
        %v3771 = vmul.f32 %v3707, %v3755
        %v3772 = vld [vmem:[%s769] sm:$0xff]
        %v3773 = vld [vmem:[%s769 + $0x8] sm:$0xff]
        %v3774 = vld [vmem:[%s769 + $0x10] sm:$0xff]
        %v3775 = vld [vmem:[%s769 + $0x18] sm:$0xff]
        %v3776 = vld [vmem:[%s769 + $0x20] sm:$0xff]
        %v3777 = vld [vmem:[%s769 + $0x28] sm:$0xff]
        %v3778 = vld [vmem:[%s769 + $0x30] sm:$0xff]
        %v3779 = vld [vmem:[%s769 + $0x38] sm:$0xff]
        %v3780 = vld [vmem:[%s769 + $0x40] sm:$0xff]
        %v3781 = vld [vmem:[%s769 + $0x48] sm:$0xff]
        %v3782 = vld [vmem:[%s769 + $0x50] sm:$0xff]
        %v3783 = vld [vmem:[%s769 + $0x58] sm:$0xff]
        %v3784 = vld [vmem:[%s769 + $0x60] sm:$0xff]
        %v3785 = vld [vmem:[%s769 + $0x68] sm:$0xff]
        %v3786 = vld [vmem:[%s769 + $0x70] sm:$0xff]
        %v3787 = vld [vmem:[%s769 + $0x78] sm:$0xff]
        %v3788 = vld [vmem:[%s769 + $0x80] sm:$0xff]
        %v3789 = vld [vmem:[%s769 + $0x88] sm:$0xff]
        %v3790 = vld [vmem:[%s769 + $0x90] sm:$0xff]
        %v3791 = vld [vmem:[%s769 + $0x98] sm:$0xff]
        %v3792 = vld [vmem:[%s769 + $0xa0] sm:$0xff]
        %v3793 = vld [vmem:[%s769 + $0xa8] sm:$0xff]
        %v3794 = vld [vmem:[%s769 + $0xb0] sm:$0xff]
        %v3795 = vld [vmem:[%s769 + $0xb8] sm:$0xff]
        %v3796 = vld [vmem:[%s769 + $0xc0] sm:$0xff]
        %v3797 = vld [vmem:[%s769 + $0xc8] sm:$0xff]
        %v3798 = vld [vmem:[%s769 + $0xd0] sm:$0xff]
        %v3799 = vld [vmem:[%s769 + $0xd8] sm:$0xff]
        %v3800 = vld [vmem:[%s769 + $0xe0] sm:$0xff]
        %v3801 = vld [vmem:[%s769 + $0xe8] sm:$0xff]
        %v3802 = vld [vmem:[%s769 + $0xf0] sm:$0xff]
        %v3803 = vld [vmem:[%s769 + $0xf8] sm:$0xff]
        %v3804 = vld [vmem:[%s769 + $0x100] sm:$0xff]
        %v3805 = vld [vmem:[%s769 + $0x108] sm:$0xff]
        %v3806 = vld [vmem:[%s769 + $0x110] sm:$0xff]
        %v3807 = vld [vmem:[%s769 + $0x118] sm:$0xff]
        %v3808 = vld [vmem:[%s769 + $0x120] sm:$0xff]
        %v3809 = vld [vmem:[%s769 + $0x128] sm:$0xff]
        %v3810 = vld [vmem:[%s769 + $0x130] sm:$0xff]
        %v3811 = vld [vmem:[%s769 + $0x138] sm:$0xff]
        %v3812 = vld [vmem:[%s769 + $0x140] sm:$0xff]
        %v3813 = vld [vmem:[%s769 + $0x148] sm:$0xff]
        %v3814 = vld [vmem:[%s769 + $0x150] sm:$0xff]
        %v3815 = vld [vmem:[%s769 + $0x158] sm:$0xff]
        %v3816 = vld [vmem:[%s769 + $0x160] sm:$0xff]
        %v3817 = vld [vmem:[%s769 + $0x168] sm:$0xff]
        %v3818 = vld [vmem:[%s769 + $0x170] sm:$0xff]
        %v3819 = vld [vmem:[%s769 + $0x178] sm:$0xff]
        %v3820 = vld [vmem:[%s769 + $0x180] sm:$0xff]
        %v3821 = vld [vmem:[%s769 + $0x188] sm:$0xff]
        %v3822 = vld [vmem:[%s769 + $0x190] sm:$0xff]
        %v3823 = vld [vmem:[%s769 + $0x198] sm:$0xff]
        %v3824 = vld [vmem:[%s769 + $0x1a0] sm:$0xff]
        %v3825 = vld [vmem:[%s769 + $0x1a8] sm:$0xff]
        %v3826 = vld [vmem:[%s769 + $0x1b0] sm:$0xff]
        %v3827 = vld [vmem:[%s769 + $0x1b8] sm:$0xff]
        %v3828 = vld [vmem:[%s769 + $0x1c0] sm:$0xff]
        %v3829 = vld [vmem:[%s769 + $0x1c8] sm:$0xff]
        %v3830 = vld [vmem:[%s769 + $0x1d0] sm:$0xff]
        %v3831 = vld [vmem:[%s769 + $0x1d8] sm:$0xff]
        %v3832 = vld [vmem:[%s769 + $0x1e0] sm:$0xff]
        %v3833 = vld [vmem:[%s769 + $0x1e8] sm:$0xff]
        %v3834 = vld [vmem:[%s769 + $0x1f0] sm:$0xff]
        %v3835 = vld [vmem:[%s769 + $0x1f8] sm:$0xff]
        %v3836 = vld [vmem:[%s881] sm:$0x1]
        %v3838 = vlaneseq
        %v3839 = vshrl.u32 %v3838, 7
        %v3840 = vsub.s32 0, %v3839
        %v3841 = vrot.slane %v3836, %v3840
        %3843 = vmatprep.subr.mxu0 0.0
        %3844 = vmatpush1.msra.mxu0 %v3772
        %3845 = vmatprep.subr.mxu0 0.0
        %3846 = vmatpush1.msra.mxu0 %v3773
        %3847 = vmatprep.subr.mxu0 0.0
        %3848 = vmatpush1.msra.mxu0 %v3774
        %3849 = vmatprep.subr.mxu0 0.0
        %3850 = vmatpush1.msra.mxu0 %v3775
        %3851 = vmatprep.subr.mxu0 0.0
        %3852 = vmatpush1.msra.mxu0 %v3776
        %3853 = vmatprep.subr.mxu0 0.0
        %3854 = vmatpush1.msra.mxu0 %v3777
        %3855 = vmatprep.subr.mxu0 0.0
        %3856 = vmatpush1.msra.mxu0 %v3778
        %3857 = vmatprep.subr.mxu0 0.0
        %3858 = vmatpush1.msra.mxu0 %v3779
        %3859 = vmatprep.subr.mxu0 0.0
        %3860 = vmatpush1.msra.mxu0 %v3780
        %3861 = vmatprep.subr.mxu0 0.0
        %3862 = vmatpush1.msra.mxu0 %v3781
        %3863 = vmatprep.subr.mxu0 0.0
        %3864 = vmatpush1.msra.mxu0 %v3782
        %3865 = vmatprep.subr.mxu0 0.0
        %3866 = vmatpush1.msra.mxu0 %v3783
        %3867 = vmatprep.subr.mxu0 0.0
        %3868 = vmatpush1.msra.mxu0 %v3784
        %3869 = vmatprep.subr.mxu0 0.0
        %3870 = vmatpush1.msra.mxu0 %v3785
        %3871 = vmatprep.subr.mxu0 0.0
        %3872 = vmatpush1.msra.mxu0 %v3786
        %3873 = vmatprep.subr.mxu0 0.0
        %3874 = vmatpush1.msra.mxu0 %v3787
        %3875 = vmatprep.subr.mxu0 0.0
        %3876 = vmatpush1.msra.mxu0 %v3788
        %3877 = vmatprep.subr.mxu0 0.0
        %3878 = vmatpush1.msra.mxu0 %v3789
        %3879 = vmatprep.subr.mxu0 0.0
        %3880 = vmatpush1.msra.mxu0 %v3790
        %3881 = vmatprep.subr.mxu0 0.0
        %3882 = vmatpush1.msra.mxu0 %v3791
        %3883 = vmatprep.subr.mxu0 0.0
        %3884 = vmatpush1.msra.mxu0 %v3792
        %3885 = vmatprep.subr.mxu0 0.0
        %3886 = vmatpush1.msra.mxu0 %v3793
        %3887 = vmatprep.subr.mxu0 0.0
        %3888 = vmatpush1.msra.mxu0 %v3794
        %3889 = vmatprep.subr.mxu0 0.0
        %3890 = vmatpush1.msra.mxu0 %v3795
        %3891 = vmatprep.subr.mxu0 0.0
        %3892 = vmatpush1.msra.mxu0 %v3796
        %3893 = vmatprep.subr.mxu0 0.0
        %3894 = vmatpush1.msra.mxu0 %v3797
        %3895 = vmatprep.subr.mxu0 0.0
        %3896 = vmatpush1.msra.mxu0 %v3798
        %3897 = vmatprep.subr.mxu0 0.0
        %3898 = vmatpush1.msra.mxu0 %v3799
        %3899 = vmatprep.subr.mxu0 0.0
        %3900 = vmatpush1.msra.mxu0 %v3800
        %3901 = vmatprep.subr.mxu0 0.0
        %3902 = vmatpush1.msra.mxu0 %v3801
        %3903 = vmatprep.subr.mxu0 0.0
        %3904 = vmatpush1.msra.mxu0 %v3802
        %3905 = vmatprep.subr.mxu0 0.0
        %3906 = vmatpush1.msra.mxu0 %v3803
        %3907 = vmatprep.mubr.f32.mxu0 %v3757
        %3908 = vmatmul.mubr.f32.gmra.mrb[0].mxu0 %v3756
        %v3909 = vpop.f32.mrb[0].mxu0
        %v3910 = vadd.f32 %v3841, %v3909
        %v3911 = vpop.f32.mrb[0].mxu0
        %3912 = vmatprep.mubr.f32.mxu0 %v3761
        %3913 = vmatmul.mubr.f32.gmra.mrb[0].mxu0 %v3760
        %v3914 = vpop.f32.mrb[0].mxu0
        %v3915 = vadd.f32 %v3841, %v3914
        %v3916 = vpop.f32.mrb[0].mxu0
        %3917 = vmatprep.mubr.f32.mxu0 %v3765
        %3918 = vmatmul.mubr.f32.gmra.mrb[0].mxu0 %v3764
        %v3919 = vpop.f32.mrb[0].mxu0
        %v3920 = vadd.f32 %v3841, %v3919
        %v3921 = vpop.f32.mrb[0].mxu0
        %3922 = vmatprep.mubr.f32.mxu0 %v3769
        %3923 = vmatmul.mubr.f32.gmra.mrb[0].mxu0 %v3768
        %v3924 = vpop.f32.mrb[0].mxu0
        %v3925 = vadd.f32 %v3841, %v3924
        %v3926 = vpop.f32.mrb[0].mxu0
        %3927 = vdwg.mxu0
        %3928 = vmatprep.subr.mxu0 0.0
        %3929 = vmatpush1.msra.mxu0 %v3804
        %3930 = vmatprep.subr.mxu0 0.0
        %3931 = vmatpush1.msra.mxu0 %v3805
        %3932 = vmatprep.subr.mxu0 0.0
        %3933 = vmatpush1.msra.mxu0 %v3806
        %3934 = vmatprep.subr.mxu0 0.0
        %3935 = vmatpush1.msra.mxu0 %v3807
        %3936 = vmatprep.subr.mxu0 0.0
        %3937 = vmatpush1.msra.mxu0 %v3808
        %3938 = vmatprep.subr.mxu0 0.0
        %3939 = vmatpush1.msra.mxu0 %v3809
        %3940 = vmatprep.subr.mxu0 0.0
        %3941 = vmatpush1.msra.mxu0 %v3810
        %3942 = vmatprep.subr.mxu0 0.0
        %3943 = vmatpush1.msra.mxu0 %v3811
        %3944 = vmatprep.subr.mxu0 0.0
        %3945 = vmatpush1.msra.mxu0 %v3812
        %3946 = vmatprep.subr.mxu0 0.0
        %3947 = vmatpush1.msra.mxu0 %v3813
        %3948 = vmatprep.subr.mxu0 0.0
        %3949 = vmatpush1.msra.mxu0 %v3814
        %3950 = vmatprep.subr.mxu0 0.0
        %3951 = vmatpush1.msra.mxu0 %v3815
        %3952 = vmatprep.subr.mxu0 0.0
        %3953 = vmatpush1.msra.mxu0 %v3816
        %3954 = vmatprep.subr.mxu0 0.0
        %3955 = vmatpush1.msra.mxu0 %v3817
        %3956 = vmatprep.subr.mxu0 0.0
        %3957 = vmatpush1.msra.mxu0 %v3818
        %3958 = vmatprep.subr.mxu0 0.0
        %3959 = vmatpush1.msra.mxu0 %v3819
        %3960 = vmatprep.subr.mxu0 0.0
        %3961 = vmatpush1.msra.mxu0 %v3820
        %3962 = vmatprep.subr.mxu0 0.0
        %3963 = vmatpush1.msra.mxu0 %v3821
        %3964 = vmatprep.subr.mxu0 0.0
        %3965 = vmatpush1.msra.mxu0 %v3822
        %3966 = vmatprep.subr.mxu0 0.0
        %3967 = vmatpush1.msra.mxu0 %v3823
        %3968 = vmatprep.subr.mxu0 0.0
        %3969 = vmatpush1.msra.mxu0 %v3824
        %3970 = vmatprep.subr.mxu0 0.0
        %3971 = vmatpush1.msra.mxu0 %v3825
        %3972 = vmatprep.subr.mxu0 0.0
        %3973 = vmatpush1.msra.mxu0 %v3826
        %3974 = vmatprep.subr.mxu0 0.0
        %3975 = vmatpush1.msra.mxu0 %v3827
        %3976 = vmatprep.subr.mxu0 0.0
        %3977 = vmatpush1.msra.mxu0 %v3828
        %3978 = vmatprep.subr.mxu0 0.0
        %3979 = vmatpush1.msra.mxu0 %v3829
        %3980 = vmatprep.subr.mxu0 0.0
        %3981 = vmatpush1.msra.mxu0 %v3830
        %3982 = vmatprep.subr.mxu0 0.0
        %3983 = vmatpush1.msra.mxu0 %v3831
        %3984 = vmatprep.subr.mxu0 0.0
        %3985 = vmatpush1.msra.mxu0 %v3832
        %3986 = vmatprep.subr.mxu0 0.0
        %3987 = vmatpush1.msra.mxu0 %v3833
        %3988 = vmatprep.subr.mxu0 0.0
        %3989 = vmatpush1.msra.mxu0 %v3834
        %3990 = vmatprep.subr.mxu0 0.0
        %3991 = vmatpush1.msra.mxu0 %v3835
        %3992 = vmatprep.mubr.f32.mxu0 %v3759
        %3993 = vmatmul.mubr.f32.gmra.mrb[0].mxu0 %v3758
        %v3994 = vpop.f32.mrb[0].mxu0
        %v3995 = vadd.f32 %v3910, %v3994
        %v3996 = vpop.f32.mrb[0].mxu0
        %3997 = vmatprep.mubr.f32.mxu0 %v3763
        %3998 = vmatmul.mubr.f32.gmra.mrb[0].mxu0 %v3762
        %v3999 = vpop.f32.mrb[0].mxu0
        %v4000 = vadd.f32 %v3915, %v3999
        %v4001 = vpop.f32.mrb[0].mxu0
        %4002 = vmatprep.mubr.f32.mxu0 %v3767
        %4003 = vmatmul.mubr.f32.gmra.mrb[0].mxu0 %v3766
        %v4004 = vpop.f32.mrb[0].mxu0
        %v4005 = vadd.f32 %v3920, %v4004
        %v4006 = vpop.f32.mrb[0].mxu0
        %4007 = vmatprep.mubr.f32.mxu0 %v3771
        %4008 = vmatmul.mubr.f32.gmra.mrb[0].mxu0 %v3770
        %v4009 = vpop.f32.mrb[0].mxu0
        %v4010 = vadd.f32 %v3925, %v4009
        %v4011 = vpop.f32.mrb[0].mxu0
        %4012 = vdwg.mxu0
        %v4013 = vadd.f32 %v3358, %v3995
        %v4014 = vadd.f32 %v3359, %v4000
        %v4015 = vadd.f32 %v3360, %v4005
        %v4016 = vadd.f32 %v3361, %v4010
        %4017 = vst [vmem:[#allocation2] sm:$0xff] %v4013
        %4018 = vst [vmem:[#allocation2 + $0x8] sm:$0xff] %v4014
        %4019 = vst [vmem:[#allocation2 + $0x10] sm:$0xff] %v4015
        %4020 = vst [vmem:[#allocation2 + $0x18] sm:$0xff] %v4016
        %p4021 = scmp.eq.s32.totalorder %s33, 1
        // Predicated region
        $region133: #{tpu_custom_call.1} parent=91 // pred_check
          %p4022 = pneg %p4021
        $region134: #{tpu_custom_call.1} parent=91 // pred_check_branch
          %4024 = sbr.rel (%p4022) target = $region136
        $region135: #{tpu_custom_call.1} parent=91 // pred_region
          %v4025 = vld [vmem:[%s16] sm:$0x1]
          %v4026 = vld [vmem:[%s17] sm:$0x1]
          %4027 = vadd.xlane.f32.xlu0 %v4013
          %v4028 = vpop.xlane.xlu0 %4027
          %4029 = vadd.xlane.f32.xlu0 %v4014
          %v4030 = vpop.xlane.xlu0 %4029
          %4031 = vadd.xlane.f32.xlu0 %v4015
          %v4032 = vpop.xlane.xlu0 %4031
          %4033 = vadd.xlane.f32.xlu0 %v4016
          %v4034 = vpop.xlane.xlu0 %4033
          %v4035 = vmul.f32 %v4028, %v1049
          %v4036 = vmul.f32 %v4030, %v1049
          %v4037 = vmul.f32 %v4032, %v1049
          %v4038 = vmul.f32 %v4034, %v1049
          %v4039 = vsub.f32 %v4013, %v4035
          %v4040 = vsub.f32 %v4014, %v4036
          %v4041 = vsub.f32 %v4015, %v4037
          %v4042 = vsub.f32 %v4016, %v4038
          %v4043 = vmul.f32 %v4039, %v4039
          %v4044 = vmul.f32 %v4040, %v4040
          %v4045 = vmul.f32 %v4041, %v4041
          %v4046 = vmul.f32 %v4042, %v4042
          %4047 = vadd.xlane.f32.xlu0 %v4043
          %v4048 = vpop.xlane.xlu0 %4047
          %4049 = vadd.xlane.f32.xlu0 %v4044
          %v4050 = vpop.xlane.xlu0 %4049
          %4051 = vadd.xlane.f32.xlu0 %v4045
          %v4052 = vpop.xlane.xlu0 %4051
          %4053 = vadd.xlane.f32.xlu0 %v4046
          %v4054 = vpop.xlane.xlu0 %4053
          %v4055 = vmul.f32 %v4048, %v1049
          %v4056 = vmul.f32 %v4050, %v1049
          %v4057 = vmul.f32 %v4052, %v1049
          %v4058 = vmul.f32 %v4054, %v1049
          %v4059 = vadd.f32 %v4055, 1e-05
          %v4060 = vadd.f32 %v4056, 1e-05
          %v4061 = vadd.f32 %v4057, 1e-05
          %v4062 = vadd.f32 %v4058, 1e-05
          %v4063 = vrsqrt.pop %v4059
          %v4064 = vrsqrt.pop %v4060
          %v4065 = vrsqrt.pop %v4061
          %v4066 = vrsqrt.pop %v4062
          %v4067 = vmul.f32 %v4039, %v4063
          %v4068 = vmul.f32 %v4040, %v4064
          %v4069 = vmul.f32 %v4041, %v4065
          %v4070 = vmul.f32 %v4042, %v4066
          %v4072 = vlaneseq
          %v4073 = vshrl.u32 %v4072, 7
          %v4074 = vsub.s32 0, %v4073
          %v4075 = vrot.slane %v4025, %v4074
          %v4077 = vmul.f32 %v4067, %v4075
          %v4078 = vmul.f32 %v4068, %v4075
          %v4079 = vmul.f32 %v4069, %v4075
          %v4080 = vmul.f32 %v4070, %v4075
          %v4082 = vlaneseq
          %v4083 = vshrl.u32 %v4082, 7
          %v4084 = vsub.s32 0, %v4083
          %v4085 = vrot.slane %v4026, %v4084
          %v4087 = vadd.f32 %v4077, %v4085
          %v4088 = vadd.f32 %v4078, %v4085
          %v4089 = vadd.f32 %v4079, %v4085
          %v4090 = vadd.f32 %v4080, %v4085
          %4091 = vst [vmem:[#allocation16] sm:$0xff] %v4087
          %4092 = vst [vmem:[#allocation16 + $0x8] sm:$0xff] %v4088
          %4093 = vst [vmem:[#allocation16 + $0x10] sm:$0xff] %v4089
          %4094 = vst [vmem:[#allocation16 + $0x18] sm:$0xff] %v4090
        $region136: #{tpu_custom_call.1} parent=91 // pred_fallthru
          _
        // Predicated region
        $region137: #{tpu_custom_call.1} parent=91 // pred_check
          %p4095 = pneg %p484
        $region138: #{tpu_custom_call.1} parent=91 // pred_check_branch
          %4097 = sbr.rel (%p4095) target = $region140
        $region139: #{tpu_custom_call.1} parent=91 // pred_region
          %s4099 = ssub.s32 512, 512
          %4100 = vsyncadd [#allocation5], %s4099
          %s4101 = sshll.u32 [#allocation16], 4
          %s4102 = int_to_ptr.vmem [resolvable:$true] %s4101
          %4107 = dma.vmem_to_hbm [thread:$0]  %s4102, 512, %s18, [#allocation5], 128, 128, 8
        $region140: #{tpu_custom_call.1} parent=91 // pred_fallthru
          _
        // Predicated region
        $region141: #{tpu_custom_call.1} parent=91 // pred_check
          %p4108 = pneg %p484
        $region142: #{tpu_custom_call.1} parent=91 // pred_check_branch
          %4110 = sbr.rel (%p4108) target = $region144
        $region143: #{tpu_custom_call.1} parent=91 // pred_region
          %4111 = dma.done [#allocation5], 512
        $region144: #{tpu_custom_call.1} parent=91 // pred_fallthru
          _
      $region92: #{tpu_custom_call.1} parent=5 // pred_fallthru
        _
      %p4112 = scmp.le.s32.totalorder 2, %s28
      // Predicated region
      $region145: #{tpu_custom_call.1} parent=5 // pred_check
        %p4113 = pneg %p4112
      $region146: #{tpu_custom_call.1} parent=5 // pred_check_branch
        %4115 = sbr.rel (%p4113) target = $region148
      $region147: #{tpu_custom_call.1} parent=5 // pred_region
        %s4116 = ssub.s32 %s28, 2
      $region148: #{tpu_custom_call.1} parent=5 // pred_fallthru
        _
    $region6: #{tpu_custom_call.1} parent=1 // loop_footer
      %s32 = sadd.s32 1, %s28
    $region7: #{tpu_custom_call.1} parent=1 // loop_footer_branch
      %27 = sbr.rel target = $region3
    $region8: #{tpu_custom_call.1} parent=1 // loop_exit
      _
    %4117 = vsyncpa [#allocation4], 1
    %s4118 = scalar_lea.sflag [#allocation4], 1
    %4119 = vsyncpa %s4118, 1
    %4120 = vsyncpa [#allocation7], 1
    %4121 = vsyncpa [#allocation10], 1
    %4122 = vsyncpa [#allocation5], 1
    %s4123 = scalar_lea.sflag [#allocation5], 1
    %4124 = vsyncpa %s4123, 1

</llo_original>
